<compile_context>
chip_gen: v5e
topology: v5e:2x2
jax: 0.10.0
libtpu: 0.0.40
codegen_flags: <defaults>
</compile_context>

<pallas_src>
import functools

import numpy as np
import jax
import jax.numpy as jnp
from jax.experimental import pallas as pl
from jax.experimental.pallas import tpu as pltpu

# Fixed architecture constants from the PyTorch module.
_CONV_CHANNELS = (16, 32, 64)
_KSIZE = 5
_STRIDE = 2
_POOL_HW = 9
_FC_DIM = 256


def _round_up(x, m):
    return (x + m - 1) // m * m


def _conv_out(n):
    return (n - _KSIZE) // _STRIDE + 1


# ----------------------------------------------------------------------------
# Pallas kernels
# ----------------------------------------------------------------------------
def _matmul_bias_relu_kernel(x_ref, w_ref, b_ref, o_ref):
    """o = relu(x @ w + b).  bf16 MXU operands, f32 accumulate/epilogue."""
    acc = jnp.dot(x_ref[...], w_ref[...], preferred_element_type=jnp.float32)
    o_ref[...] = jnp.maximum(acc + b_ref[...], 0.0).astype(o_ref.dtype)


def _fc_heads_kernel(x_ref, w1_ref, b1_ref, w2_ref, b2_ref, o_ref):
    """Fused fc(+ReLU) and concatenated [actor|critic] heads: two chained
    MXU matmuls; the 256-wide feature vector never leaves VMEM."""
    h = jnp.dot(x_ref[...], w1_ref[...], preferred_element_type=jnp.float32)
    h = jnp.maximum(h + b1_ref[...], 0.0)
    o_ref[...] = (
        jnp.dot(h.astype(w2_ref.dtype), w2_ref[...],
                preferred_element_type=jnp.float32)
        + b2_ref[...]
    )


def _single_step_linear_relu(xp, wp, bp, out_dtype):
    """y = relu(xp @ wp + bp) on pre-padded operands, one grid step.

    Everything (activations + weights) fits VMEM trivially at these sizes, so
    a single step avoids per-step pipeline overhead entirely."""
    Mp, Kp = xp.shape
    _, Np = wp.shape
    flops = 2 * Mp * Kp * Np
    bytes_accessed = (Mp * Kp * 2 + Kp * Np * 2 + Np * 4 + Mp * Np *
                      jnp.dtype(out_dtype).itemsize)
    return pl.pallas_call(
        _matmul_bias_relu_kernel,
        out_shape=jax.ShapeDtypeStruct((Mp, Np), out_dtype),
        grid=(1,),
        in_specs=[
            pl.BlockSpec((Mp, Kp), lambda i: (0, 0)),
            pl.BlockSpec((Kp, Np), lambda i: (0, 0)),
            pl.BlockSpec((1, Np), lambda i: (0, 0)),
        ],
        out_specs=pl.BlockSpec((Mp, Np), lambda i: (0, 0)),
        compiler_params=pltpu.CompilerParams(
            dimension_semantics=("arbitrary",)),
        cost_estimate=pl.CostEstimate(
            flops=flops, transcendentals=0, bytes_accessed=bytes_accessed),
    )(xp, wp, bp)


# ----------------------------------------------------------------------------
# Glue: im2col conv (channel-last; the matmul runs in the Pallas kernel above)
# ----------------------------------------------------------------------------
def _im2col_hwc(x_hwc, k, s):
    """(H,W,C) -> (OH*OW, k*k*C); columns ordered (kh, kw, c) to match the
    packed conv weight layout."""
    H, W, C = x_hwc.shape
    OH = (H - k) // s + 1
    OW = (W - k) // s + 1
    cols = []
    for di in range(k):
        for dj in range(k):
            cols.append(x_hwc[di:di + s * OH:s, dj:dj + s * OW:s, :])  # (OH,OW,C)
    p = jnp.stack(cols, axis=2)                    # (OH, OW, k*k, C)
    return p.reshape(OH * OW, k * k * C), OH, OW


def _conv2d_relu(x_hwc, wp, bp, out_channels):
    """Conv(k=5, s=2) + ReLU with pre-packed (Kp,Np) bf16 weight and (1,Np)
    f32 bias.  Output is (OH, OW, out_channels) bf16, channel-last."""
    patches, OH, OW = _im2col_hwc(x_hwc, _KSIZE, _STRIDE)
    M, K = patches.shape
    Kp, _ = wp.shape
    Mp = _round_up(M, 8)
    xp = jnp.pad(patches.astype(jnp.bfloat16), ((0, Mp - M), (0, Kp - K)))
    y = _single_step_linear_relu(xp, wp, bp, jnp.bfloat16)
    # Padded rows / channels are garbage-or-zero; slice back to the real extent
    # (the slice fuses into the next layer's im2col fusion on the XLA side).
    return y[:M, :out_channels].reshape(OH, OW, out_channels)


# ----------------------------------------------------------------------------
# One-time parameter packing
# ----------------------------------------------------------------------------
def _pool_matrix(in_size, out_size):
    """PyTorch AdaptiveAvgPool2d window coefficients:
    start = floor(i*in/out), end = ceil((i+1)*in/out)."""
    A = np.zeros((out_size, in_size), np.float32)
    for i in range(out_size):
        s = (i * in_size) // out_size
        e = -((-(i + 1) * in_size) // out_size)
        A[i, s:e] = 1.0 / (e - s)
    return jnp.asarray(A)


def pack_params(params, input_hw, dtype=jnp.bfloat16):
    """Pad/transpose/quantize all weights once, fold the adaptive pool and
    flatten into the fc weight, and fuse the actor+critic heads."""
    H, W = input_hw
    H1, W1 = _conv_out(H), _conv_out(W)
    H2, W2 = _conv_out(H1), _conv_out(W1)
    H3, W3 = _conv_out(H2), _conv_out(W2)

    packed = {}

    def pad2d(a, rows, cols, dt):
        r, c = a.shape
        return jnp.pad(a.astype(dt), ((0, rows - r), (0, cols - c)))

    def pack_conv(name, w, b):
        oc, ic, k, _ = w.shape
        # (OC,IC,kh,kw) -> (kh,kw,IC,OC) -> (k*k*IC, OC); matches im2col columns.
        wmat = jnp.transpose(w, (2, 3, 1, 0)).reshape(k * k * ic, oc)
        kp, np_ = _round_up(k * k * ic, 128), _round_up(oc, 128)
        packed[name + "_w"] = pad2d(wmat, kp, np_, dtype)
        packed[name + "_b"] = pad2d(b.reshape(1, oc), 1, np_, jnp.float32)

    pack_conv("conv1", params["conv1_w"], params["conv1_b"])
    pack_conv("conv2", params["conv2_w"], params["conv2_b"])
    pack_conv("conv3", params["conv3_w"], params["conv3_b"])

    # Fold AdaptiveAvgPool2d((9,9)) + torch's channel-major flatten into fc:
    #   feat[n] = sum_{h,w,c} conv3[h,w,c] * W_eff[(h*W3+w)*C3 + c, n] + fc_b[n]
    A = _pool_matrix(H3, _POOL_HW)                 # (9, H3)
    B = _pool_matrix(W3, _POOL_HW)                 # (9, W3)
    c3 = _CONV_CHANNELS[2]
    fc_w = params["fc_w"].reshape(_FC_DIM, c3, _POOL_HW, _POOL_HW)
    w_eff = jnp.einsum("ncij,ih,jw->hwcn", fc_w, A, B).reshape(H3 * W3 * c3, _FC_DIM)
    kp = _round_up(w_eff.shape[0], 128)
    packed["fc_w"] = pad2d(w_eff, kp, _FC_DIM, dtype)
    packed["fc_b"] = params["fc_b"].reshape(1, _FC_DIM).astype(jnp.float32)

    # Fuse actor + critic heads into one (256, 2*nb+1) matmul, padded to 128 lanes.
    head_w = jnp.concatenate([params["actor_w"].T, params["critic_w"].T], axis=1)
    head_b = jnp.concatenate([params["actor_b"], params["critic_b"]])
    np_ = _round_up(head_w.shape[1], 128)
    packed["head_w"] = pad2d(head_w, _FC_DIM, np_, dtype)
    packed["head_b"] = pad2d(head_b.reshape(1, -1), 1, np_, jnp.float32)
    return packed


# ----------------------------------------------------------------------------
# ActorCritic forward (4 pallas_calls, 4 grid steps total)
# ----------------------------------------------------------------------------
@functools.partial(jax.jit, static_argnames=("num_bots",))
def actor_critic_forward(packed, x_chw, *, num_bots):
    c1, c2, c3 = _CONV_CHANNELS
    x = jnp.transpose(x_chw, (1, 2, 0))            # CHW -> HWC (channels on lanes)
    h = _conv2d_relu(x, packed["conv1_w"], packed["conv1_b"], c1)
    h = _conv2d_relu(h, packed["conv2_w"], packed["conv2_b"], c2)
    h = _conv2d_relu(h, packed["conv3_w"], packed["conv3_b"], c3)

    # (H3, W3, 64) -> (1, H3*W3*64); ordering matches the folded fc weight rows.
    flat = h.reshape(1, -1)
    kp = packed["fc_w"].shape[0]
    # Row- and K-pad in a single XLA pad; M=8 vs M=1 is one sublane tile either
    # way on the MXU, so the 8-row slab costs nothing extra.
    xp = jnp.pad(flat.astype(jnp.bfloat16), ((0, 7), (0, kp - flat.shape[1])))

    np_ = packed["head_w"].shape[1]
    flops = 2 * 8 * kp * _FC_DIM + 2 * 8 * _FC_DIM * np_
    bytes_accessed = (xp.size * 2 + packed["fc_w"].size * 2
                      + packed["fc_b"].size * 4 + packed["head_w"].size * 2
                      + packed["head_b"].size * 4 + 8 * np_ * 4)
    out = pl.pallas_call(
        _fc_heads_kernel,
        out_shape=jax.ShapeDtypeStruct((8, np_), jnp.float32),
        grid=(1,),
        in_specs=[
            pl.BlockSpec((8, kp), lambda i: (0, 0)),
            pl.BlockSpec(packed["fc_w"].shape, lambda i: (0, 0)),
            pl.BlockSpec(packed["fc_b"].shape, lambda i: (0, 0)),
            pl.BlockSpec(packed["head_w"].shape, lambda i: (0, 0)),
            pl.BlockSpec(packed["head_b"].shape, lambda i: (0, 0)),
        ],
        out_specs=pl.BlockSpec((8, np_), lambda i: (0, 0)),
        compiler_params=pltpu.CompilerParams(
            dimension_semantics=("arbitrary",)),
        cost_estimate=pl.CostEstimate(
            flops=flops, transcendentals=0, bytes_accessed=bytes_accessed),
    )(xp, packed["fc_w"], packed["fc_b"], packed["head_w"], packed["head_b"])

    actor = out[:1, : num_bots * 2]
    value = out[:1, num_bots * 2: num_bots * 2 + 1]
    return actor, value


# ----------------------------------------------------------------------------
# Parameter init (matches the PyTorch module's shapes)
# ----------------------------------------------------------------------------
def init_params(key, num_inputs, num_bots):
    ks = jax.random.split(key, 12)
    w = lambda k, s, sc: (sc * jax.random.normal(k, s)).astype(jnp.float32)
    return {
        "conv1_w": w(ks[0], (16, num_inputs, 5, 5), 0.10),
        "conv1_b": w(ks[1], (16,), 0.10),
        "conv2_w": w(ks[2], (32, 16, 5, 5), 0.05),
        "conv2_b": w(ks[3], (32,), 0.05),
        "conv3_w": w(ks[4], (64, 32, 5, 5), 0.05),
        "conv3_b": w(ks[5], (64,), 0.05),
        "fc_w":    w(ks[6], (256, 64 * 9 * 9), 0.02),
        "fc_b":    w(ks[7], (256,), 0.02),
        "actor_w": w(ks[8], (num_bots * 2, 256), 0.05),
        "actor_b": w(ks[9], (num_bots * 2,), 0.05),
        "critic_w": w(ks[10], (1, 256), 0.05),
        "critic_b": w(ks[11], (1,), 0.05),
    }


# ----------------------------------------------------------------------------
# Pure-JAX f32 reference (exactly the PyTorch forward semantics)
# ----------------------------------------------------------------------------
def reference_forward(params, x_chw):
    xb = x_chw[None]

    def conv(x, w, b, s):
        y = jax.lax.conv_general_dilated(
            x, w, (s, s), "VALID", dimension_numbers=("NCHW", "OIHW", "NCHW"))
        return jax.nn.relu(y + b[None, :, None, None])

    h = conv(xb, params["conv1_w"], params["conv1_b"], 2)
    h = conv(h, params["conv2_w"], params["conv2_b"], 2)
    h = conv(h, params["conv3_w"], params["conv3_b"], 2)
    _, C, H, W = h.shape
    rows = []
    for i in range(9):
        hs, he = (i * H) // 9, -((-(i + 1) * H) // 9)
        cols = []
        for j in range(9):
            ws, we = (j * W) // 9, -((-(j + 1) * W) // 9)
            cols.append(jnp.mean(h[:, :, hs:he, ws:we], axis=(2, 3)))
        rows.append(jnp.stack(cols, axis=-1))
    pooled = jnp.stack(rows, axis=-2)              # (1, C, 9, 9)
    flat = pooled.reshape(1, -1)
    feat = jax.nn.relu(flat @ params["fc_w"].T + params["fc_b"])
    actor = feat @ params["actor_w"].T + params["actor_b"]
    value = feat @ params["critic_w"].T + params["critic_b"]
    return actor, value


if __name__ == "__main__":
    num_inputs, num_bots = 4, 3
    H = W = 61   # conv stack: 61 -> 29 -> 13 -> 5, then pool 5x5 -> 9x9 (folded)

    key = jax.random.PRNGKey(0)
    kparam, kx = jax.random.split(key)
    params = init_params(kparam, num_inputs, num_bots)
    packed = pack_params(params, (H, W))           # one-time host-side packing

    x = jax.random.normal(kx, (num_inputs, H, W), jnp.float32)

    actor_out, value_out = actor_critic_forward(packed, x, num_bots=num_bots)
    jax.block_until_ready((actor_out, value_out))

    assert actor_out.shape == (1, num_bots * 2), actor_out.shape
    assert value_out.shape == (1, 1), value_out.shape

    # Numerical check against the pure-f32 reference.  The kernel path uses
    # bf16 MXU operands (f32 accumulation), so tolerance is generous.
    ref_actor, ref_value = reference_forward(params, x)
    ok_a = jnp.allclose(actor_out, ref_actor, rtol=5e-2, atol=5e-2)
    ok_v = jnp.allclose(value_out, ref_value, rtol=5e-2, atol=5e-2)
    if not (bool(ok_a) and bool(ok_v)):
        raise AssertionError("Pallas output mismatch vs reference")

    print("KERNEL_OK")
</pallas_src>

<mosaic_0001>
module attributes {stable_mosaic.version = 11 : i64} {
  func.func @_matmul_bias_relu_kernel(%arg0: i32, %arg1: memref<848x128xbf16, #tpu.memory_space<vmem>>, %arg2: memref<128x128xbf16, #tpu.memory_space<vmem>>, %arg3: memref<1x128xf32, #tpu.memory_space<vmem>>, %arg4: memref<848x128xbf16, #tpu.memory_space<vmem>>) attributes {dimension_semantics = [#tpu.dimension_semantics<arbitrary>], iteration_bounds = array<i64: 1>, scalar_prefetch = 0 : i64, scratch_operands = 0 : i64, tpu.core_type = #tpu.core_type<tc>, window_params = [{pipeline_mode = #tpu.pipeline_mode<synchronous>, transform_indices = @transform_0, window_bounds = array<i64: 848, 128>}, {pipeline_mode = #tpu.pipeline_mode<synchronous>, transform_indices = @transform_1, window_bounds = array<i64: 128, 128>}, {pipeline_mode = #tpu.pipeline_mode<synchronous>, transform_indices = @transform_2, window_bounds = array<i64: 1, 128>}, {pipeline_mode = #tpu.pipeline_mode<synchronous>, transform_indices = @transform_3, window_bounds = array<i64: 848, 128>}]} {
    %c0 = arith.constant 0 : index
    %c0_0 = arith.constant 0 : index
    %0 = vector.load %arg1[%c0, %c0_0] : memref<848x128xbf16, #tpu.memory_space<vmem>>, vector<848x128xbf16>
    %c0_1 = arith.constant 0 : index
    %c0_2 = arith.constant 0 : index
    %1 = vector.load %arg2[%c0_1, %c0_2] : memref<128x128xbf16, #tpu.memory_space<vmem>>, vector<128x128xbf16>
    %cst = arith.constant dense<0.000000e+00> : vector<848x128xf32>
    %2 = tpu.matmul %0, %1, %cst {dimension_numbers = #tpu.dot_dimension_numbers<[1], [0], [0], [1], [0, 0, 1, 1], [], []>} : vector<848x128xbf16>, vector<128x128xbf16>, vector<848x128xf32> -> vector<848x128xf32>
    %c0_3 = arith.constant 0 : index
    %c0_4 = arith.constant 0 : index
    %3 = vector.load %arg3[%c0_3, %c0_4] : memref<1x128xf32, #tpu.memory_space<vmem>>, vector<1x128xf32>
    %4 = vector.broadcast %3 : vector<1x128xf32> to vector<848x128xf32>
    %5 = arith.addf %2, %4 : vector<848x128xf32>
    %cst_5 = arith.constant 0.000000e+00 : f32
    %6 = vector.broadcast %cst_5 : f32 to vector<848x128xf32>
    %7 = arith.maximumf %5, %6 : vector<848x128xf32>
    %8 = arith.truncf %7 : vector<848x128xf32> to vector<848x128xbf16>
    %c0_6 = arith.constant 0 : index
    %c0_7 = arith.constant 0 : index
    %9 = vector.load %arg4[%c0_6, %c0_7] : memref<848x128xbf16, #tpu.memory_space<vmem>>, vector<848x128xbf16>
    tpu.vector_store %arg4[%c0_6, %c0_7], %8 {strides = array<i32>} : memref<848x128xbf16, #tpu.memory_space<vmem>>, vector<848x128xbf16>,
    return
  }
  func.func @transform_0(%arg0: i32) -> (i32, i32) {
    %c0_i32 = arith.constant 0 : i32
    %c0_i32_0 = arith.constant 0 : i32
    %c0_i32_1 = arith.constant 0 : i32
    return %c0_i32, %c0_i32_0 : i32, i32
  }
  func.func @transform_1(%arg0: i32) -> (i32, i32) {
    %c0_i32 = arith.constant 0 : i32
    %c0_i32_0 = arith.constant 0 : i32
    %c0_i32_1 = arith.constant 0 : i32
    return %c0_i32, %c0_i32_0 : i32, i32
  }
  func.func @transform_2(%arg0: i32) -> (i32, i32) {
    %c0_i32 = arith.constant 0 : i32
    %c0_i32_0 = arith.constant 0 : i32
    %c0_i32_1 = arith.constant 0 : i32
    return %c0_i32, %c0_i32_0 : i32, i32
  }
  func.func @transform_3(%arg0: i32) -> (i32, i32) {
    %c0_i32 = arith.constant 0 : i32
    %c0_i32_0 = arith.constant 0 : i32
    %c0_i32_1 = arith.constant 0 : i32
    return %c0_i32, %c0_i32_0 : i32, i32
  }
}

module attributes {stable_mosaic.version = 11 : i64} {
  func.func @_matmul_bias_relu_kernel(%arg0: i32, %arg1: memref<176x512xbf16, #tpu.memory_space<vmem>>, %arg2: memref<512x128xbf16, #tpu.memory_space<vmem>>, %arg3: memref<1x128xf32, #tpu.memory_space<vmem>>, %arg4: memref<176x128xbf16, #tpu.memory_space<vmem>>) attributes {dimension_semantics = [#tpu.dimension_semantics<arbitrary>], iteration_bounds = array<i64: 1>, scalar_prefetch = 0 : i64, scratch_operands = 0 : i64, tpu.core_type = #tpu.core_type<tc>, window_params = [{pipeline_mode = #tpu.pipeline_mode<synchronous>, transform_indices = @transform_0, window_bounds = array<i64: 176, 512>}, {pipeline_mode = #tpu.pipeline_mode<synchronous>, transform_indices = @transform_1, window_bounds = array<i64: 512, 128>}, {pipeline_mode = #tpu.pipeline_mode<synchronous>, transform_indices = @transform_2, window_bounds = array<i64: 1, 128>}, {pipeline_mode = #tpu.pipeline_mode<synchronous>, transform_indices = @transform_3, window_bounds = array<i64: 176, 128>}]} {
    %c0 = arith.constant 0 : index
    %c0_0 = arith.constant 0 : index
    %0 = vector.load %arg1[%c0, %c0_0] : memref<176x512xbf16, #tpu.memory_space<vmem>>, vector<176x512xbf16>
    %c0_1 = arith.constant 0 : index
    %c0_2 = arith.constant 0 : index
    %1 = vector.load %arg2[%c0_1, %c0_2] : memref<512x128xbf16, #tpu.memory_space<vmem>>, vector<512x128xbf16>
    %cst = arith.constant dense<0.000000e+00> : vector<176x128xf32>
    %2 = tpu.matmul %0, %1, %cst {dimension_numbers = #tpu.dot_dimension_numbers<[1], [0], [0], [1], [0, 0, 1, 1], [], []>} : vector<176x512xbf16>, vector<512x128xbf16>, vector<176x128xf32> -> vector<176x128xf32>
    %c0_3 = arith.constant 0 : index
    %c0_4 = arith.constant 0 : index
    %3 = vector.load %arg3[%c0_3, %c0_4] : memref<1x128xf32, #tpu.memory_space<vmem>>, vector<1x128xf32>
    %4 = vector.broadcast %3 : vector<1x128xf32> to vector<176x128xf32>
    %5 = arith.addf %2, %4 : vector<176x128xf32>
    %cst_5 = arith.constant 0.000000e+00 : f32
    %6 = vector.broadcast %cst_5 : f32 to vector<176x128xf32>
    %7 = arith.maximumf %5, %6 : vector<176x128xf32>
    %8 = arith.truncf %7 : vector<176x128xf32> to vector<176x128xbf16>
    %c0_6 = arith.constant 0 : index
    %c0_7 = arith.constant 0 : index
    %9 = vector.load %arg4[%c0_6, %c0_7] : memref<176x128xbf16, #tpu.memory_space<vmem>>, vector<176x128xbf16>
    tpu.vector_store %arg4[%c0_6, %c0_7], %8 {strides = array<i32>} : memref<176x128xbf16, #tpu.memory_space<vmem>>, vector<176x128xbf16>,
    return
  }
  func.func @transform_0(%arg0: i32) -> (i32, i32) {
    %c0_i32 = arith.constant 0 : i32
    %c0_i32_0 = arith.constant 0 : i32
    %c0_i32_1 = arith.constant 0 : i32
    return %c0_i32, %c0_i32_0 : i32, i32
  }
  func.func @transform_1(%arg0: i32) -> (i32, i32) {
    %c0_i32 = arith.constant 0 : i32
    %c0_i32_0 = arith.constant 0 : i32
    %c0_i32_1 = arith.constant 0 : i32
    return %c0_i32, %c0_i32_0 : i32, i32
  }
  func.func @transform_2(%arg0: i32) -> (i32, i32) {
    %c0_i32 = arith.constant 0 : i32
    %c0_i32_0 = arith.constant 0 : i32
    %c0_i32_1 = arith.constant 0 : i32
    return %c0_i32, %c0_i32_0 : i32, i32
  }
  func.func @transform_3(%arg0: i32) -> (i32, i32) {
    %c0_i32 = arith.constant 0 : i32
    %c0_i32_0 = arith.constant 0 : i32
    %c0_i32_1 = arith.constant 0 : i32
    return %c0_i32, %c0_i32_0 : i32, i32
  }
}

module attributes {stable_mosaic.version = 11 : i64} {
  func.func @_matmul_bias_relu_kernel(%arg0: i32, %arg1: memref<32x896xbf16, #tpu.memory_space<vmem>>, %arg2: memref<896x128xbf16, #tpu.memory_space<vmem>>, %arg3: memref<1x128xf32, #tpu.memory_space<vmem>>, %arg4: memref<32x128xbf16, #tpu.memory_space<vmem>>) attributes {dimension_semantics = [#tpu.dimension_semantics<arbitrary>], iteration_bounds = array<i64: 1>, scalar_prefetch = 0 : i64, scratch_operands = 0 : i64, tpu.core_type = #tpu.core_type<tc>, window_params = [{pipeline_mode = #tpu.pipeline_mode<synchronous>, transform_indices = @transform_0, window_bounds = array<i64: 32, 896>}, {pipeline_mode = #tpu.pipeline_mode<synchronous>, transform_indices = @transform_1, window_bounds = array<i64: 896, 128>}, {pipeline_mode = #tpu.pipeline_mode<synchronous>, transform_indices = @transform_2, window_bounds = array<i64: 1, 128>}, {pipeline_mode = #tpu.pipeline_mode<synchronous>, transform_indices = @transform_3, window_bounds = array<i64: 32, 128>}]} {
    %c0 = arith.constant 0 : index
    %c0_0 = arith.constant 0 : index
    %0 = vector.load %arg1[%c0, %c0_0] : memref<32x896xbf16, #tpu.memory_space<vmem>>, vector<32x896xbf16>
    %c0_1 = arith.constant 0 : index
    %c0_2 = arith.constant 0 : index
    %1 = vector.load %arg2[%c0_1, %c0_2] : memref<896x128xbf16, #tpu.memory_space<vmem>>, vector<896x128xbf16>
    %cst = arith.constant dense<0.000000e+00> : vector<32x128xf32>
    %2 = tpu.matmul %0, %1, %cst {dimension_numbers = #tpu.dot_dimension_numbers<[1], [0], [0], [1], [0, 0, 1, 1], [], []>} : vector<32x896xbf16>, vector<896x128xbf16>, vector<32x128xf32> -> vector<32x128xf32>
    %c0_3 = arith.constant 0 : index
    %c0_4 = arith.constant 0 : index
    %3 = vector.load %arg3[%c0_3, %c0_4] : memref<1x128xf32, #tpu.memory_space<vmem>>, vector<1x128xf32>
    %4 = vector.broadcast %3 : vector<1x128xf32> to vector<32x128xf32>
    %5 = arith.addf %2, %4 : vector<32x128xf32>
    %cst_5 = arith.constant 0.000000e+00 : f32
    %6 = vector.broadcast %cst_5 : f32 to vector<32x128xf32>
    %7 = arith.maximumf %5, %6 : vector<32x128xf32>
    %8 = arith.truncf %7 : vector<32x128xf32> to vector<32x128xbf16>
    %c0_6 = arith.constant 0 : index
    %c0_7 = arith.constant 0 : index
    %9 = vector.load %arg4[%c0_6, %c0_7] : memref<32x128xbf16, #tpu.memory_space<vmem>>, vector<32x128xbf16>
    tpu.vector_store %arg4[%c0_6, %c0_7], %8 {strides = array<i32>} : memref<32x128xbf16, #tpu.memory_space<vmem>>, vector<32x128xbf16>,
    return
  }
  func.func @transform_0(%arg0: i32) -> (i32, i32) {
    %c0_i32 = arith.constant 0 : i32
    %c0_i32_0 = arith.constant 0 : i32
    %c0_i32_1 = arith.constant 0 : i32
    return %c0_i32, %c0_i32_0 : i32, i32
  }
  func.func @transform_1(%arg0: i32) -> (i32, i32) {
    %c0_i32 = arith.constant 0 : i32
    %c0_i32_0 = arith.constant 0 : i32
    %c0_i32_1 = arith.constant 0 : i32
    return %c0_i32, %c0_i32_0 : i32, i32
  }
  func.func @transform_2(%arg0: i32) -> (i32, i32) {
    %c0_i32 = arith.constant 0 : i32
    %c0_i32_0 = arith.constant 0 : i32
    %c0_i32_1 = arith.constant 0 : i32
    return %c0_i32, %c0_i32_0 : i32, i32
  }
  func.func @transform_3(%arg0: i32) -> (i32, i32) {
    %c0_i32 = arith.constant 0 : i32
    %c0_i32_0 = arith.constant 0 : i32
    %c0_i32_1 = arith.constant 0 : i32
    return %c0_i32, %c0_i32_0 : i32, i32
  }
}

module attributes {stable_mosaic.version = 11 : i64} {
  func.func @_fc_heads_kernel(%arg0: i32, %arg1: memref<8x1664xbf16, #tpu.memory_space<vmem>>, %arg2: memref<1664x256xbf16, #tpu.memory_space<vmem>>, %arg3: memref<1x256xf32, #tpu.memory_space<vmem>>, %arg4: memref<256x128xbf16, #tpu.memory_space<vmem>>, %arg5: memref<1x128xf32, #tpu.memory_space<vmem>>, %arg6: memref<8x128xf32, #tpu.memory_space<vmem>>) attributes {dimension_semantics = [#tpu.dimension_semantics<arbitrary>], iteration_bounds = array<i64: 1>, scalar_prefetch = 0 : i64, scratch_operands = 0 : i64, tpu.core_type = #tpu.core_type<tc>, window_params = [{pipeline_mode = #tpu.pipeline_mode<synchronous>, transform_indices = @transform_0, window_bounds = array<i64: 8, 1664>}, {pipeline_mode = #tpu.pipeline_mode<synchronous>, transform_indices = @transform_1, window_bounds = array<i64: 1664, 256>}, {pipeline_mode = #tpu.pipeline_mode<synchronous>, transform_indices = @transform_2, window_bounds = array<i64: 1, 256>}, {pipeline_mode = #tpu.pipeline_mode<synchronous>, transform_indices = @transform_3, window_bounds = array<i64: 256, 128>}, {pipeline_mode = #tpu.pipeline_mode<synchronous>, transform_indices = @transform_4, window_bounds = array<i64: 1, 128>}, {pipeline_mode = #tpu.pipeline_mode<synchronous>, transform_indices = @transform_5, window_bounds = array<i64: 8, 128>}]} {
    %c0 = arith.constant 0 : index
    %c0_0 = arith.constant 0 : index
    %0 = vector.load %arg1[%c0, %c0_0] : memref<8x1664xbf16, #tpu.memory_space<vmem>>, vector<8x1664xbf16>
    %c0_1 = arith.constant 0 : index
    %c0_2 = arith.constant 0 : index
    %1 = vector.load %arg2[%c0_1, %c0_2] : memref<1664x256xbf16, #tpu.memory_space<vmem>>, vector<1664x256xbf16>
    %cst = arith.constant dense<0.000000e+00> : vector<8x256xf32>
    %2 = tpu.matmul %0, %1, %cst {dimension_numbers = #tpu.dot_dimension_numbers<[1], [0], [0], [1], [0, 0, 1, 1], [], []>} : vector<8x1664xbf16>, vector<1664x256xbf16>, vector<8x256xf32> -> vector<8x256xf32>
    %c0_3 = arith.constant 0 : index
    %c0_4 = arith.constant 0 : index
    %3 = vector.load %arg3[%c0_3, %c0_4] : memref<1x256xf32, #tpu.memory_space<vmem>>, vector<1x256xf32>
    %4 = vector.broadcast %3 : vector<1x256xf32> to vector<8x256xf32>
    %5 = arith.addf %2, %4 : vector<8x256xf32>
    %cst_5 = arith.constant 0.000000e+00 : f32
    %6 = vector.broadcast %cst_5 : f32 to vector<8x256xf32>
    %7 = arith.maximumf %5, %6 : vector<8x256xf32>
    %8 = arith.truncf %7 : vector<8x256xf32> to vector<8x256xbf16>
    %c0_6 = arith.constant 0 : index
    %c0_7 = arith.constant 0 : index
    %9 = vector.load %arg4[%c0_6, %c0_7] : memref<256x128xbf16, #tpu.memory_space<vmem>>, vector<256x128xbf16>
    %cst_8 = arith.constant dense<0.000000e+00> : vector<8x128xf32>
    %10 = tpu.matmul %8, %9, %cst_8 {dimension_numbers = #tpu.dot_dimension_numbers<[1], [0], [0], [1], [0, 0, 1, 1], [], []>} : vector<8x256xbf16>, vector<256x128xbf16>, vector<8x128xf32> -> vector<8x128xf32>
    %c0_9 = arith.constant 0 : index
    %c0_10 = arith.constant 0 : index
    %11 = vector.load %arg5[%c0_9, %c0_10] : memref<1x128xf32, #tpu.memory_space<vmem>>, vector<1x128xf32>
    %12 = vector.broadcast %11 : vector<1x128xf32> to vector<8x128xf32>
    %13 = arith.addf %10, %12 : vector<8x128xf32>
    %c0_11 = arith.constant 0 : index
    %c0_12 = arith.constant 0 : index
    %14 = vector.load %arg6[%c0_11, %c0_12] : memref<8x128xf32, #tpu.memory_space<vmem>>, vector<8x128xf32>
    tpu.vector_store %arg6[%c0_11, %c0_12], %13 {strides = array<i32>} : memref<8x128xf32, #tpu.memory_space<vmem>>, vector<8x128xf32>,
    return
  }
  func.func @transform_0(%arg0: i32) -> (i32, i32) {
    %c0_i32 = arith.constant 0 : i32
    %c0_i32_0 = arith.constant 0 : i32
    %c0_i32_1 = arith.constant 0 : i32
    return %c0_i32, %c0_i32_0 : i32, i32
  }
  func.func @transform_1(%arg0: i32) -> (i32, i32) {
    %c0_i32 = arith.constant 0 : i32
    %c0_i32_0 = arith.constant 0 : i32
    %c0_i32_1 = arith.constant 0 : i32
    return %c0_i32, %c0_i32_0 : i32, i32
  }
  func.func @transform_2(%arg0: i32) -> (i32, i32) {
    %c0_i32 = arith.constant 0 : i32
    %c0_i32_0 = arith.constant 0 : i32
    %c0_i32_1 = arith.constant 0 : i32
    return %c0_i32, %c0_i32_0 : i32, i32
  }
  func.func @transform_3(%arg0: i32) -> (i32, i32) {
    %c0_i32 = arith.constant 0 : i32
    %c0_i32_0 = arith.constant 0 : i32
    %c0_i32_1 = arith.constant 0 : i32
    return %c0_i32, %c0_i32_0 : i32, i32
  }
  func.func @transform_4(%arg0: i32) -> (i32, i32) {
    %c0_i32 = arith.constant 0 : i32
    %c0_i32_0 = arith.constant 0 : i32
    %c0_i32_1 = arith.constant 0 : i32
    return %c0_i32, %c0_i32_0 : i32, i32
  }
  func.func @transform_5(%arg0: i32) -> (i32, i32) {
    %c0_i32 = arith.constant 0 : i32
    %c0_i32_0 = arith.constant 0 : i32
    %c0_i32_1 = arith.constant 0 : i32
    return %c0_i32, %c0_i32_0 : i32, i32
  }
}

</mosaic_0001>

<llo_original>
// kernel: actor_critic_forward.4
$region0: #{actor_critic_forward.4}
  #allocation0 [shape = 'u32[]', space=smem, size = 0x4, offset = 0x4, fixed_abs, tag = 'smem constant byte address 0x4 - core index']
  #allocation1 [shape = 'u32[72,128]{1,0:T(1,128)}', space=vmem, size = 0x9000, scoped, tag = 'internal scratch']
  %s0 = inlined_call_operand.vmem [shape: bf16[848,128], index: 0, kind: input, shape index: {}]
  %s1 = inlined_call_operand.vmem [shape: bf16[128,128], index: 1, kind: input, shape index: {}]
  %s2 = inlined_call_operand.vmem [shape: f32[1,128], index: 2, kind: input, shape index: {}]
  %s3 = inlined_call_operand.vmem [shape: bf16[848,128], index: 3, kind: output, shape index: {}]
  %s4 = sld [smem:[#allocation0]]
  $region22: #{actor_critic_forward.4} parent=0
    _
  %s6 = ssub.s32 1, %s4
  %s7 = scalar_select 0, %s6, %s4
  // Predicated region
  $region2: #{actor_critic_forward.4} parent=0 // pred_check
    _
  $region3: #{actor_critic_forward.4} parent=0 // pred_check_branch
    %9 = sbr.rel (0) target = $region5
  $region4: #{actor_critic_forward.4} parent=0 // pred_region
    _
  $region5: #{actor_critic_forward.4} parent=0 // pred_fallthru
    _
  // Predicated region
  $region6: #{actor_critic_forward.4} parent=0 // pred_check
    _
  $region7: #{actor_critic_forward.4} parent=0 // pred_check_branch
    %11 = sbr.rel (0) target = $region9
  $region8: #{actor_critic_forward.4} parent=0 // pred_region
    _
  $region9: #{actor_critic_forward.4} parent=0 // pred_fallthru
    _
  // Predicated region
  $region10: #{actor_critic_forward.4} parent=0 // pred_check
    _
  $region11: #{actor_critic_forward.4} parent=0 // pred_check_branch
    %13 = sbr.rel (0) target = $region13
  $region12: #{actor_critic_forward.4} parent=0 // pred_region
    _
  $region13: #{actor_critic_forward.4} parent=0 // pred_fallthru
    _
  %v14 = vld [vmem:[%s0] sm:$0xf]
  %v15 = vld [vmem:[%s0 + $0x4] sm:$0xf]
  %v16 = vld [vmem:[%s0 + $0x8] sm:$0xf]
  %v17 = vld [vmem:[%s0 + $0xc] sm:$0xf]
  %v18 = vld [vmem:[%s0 + $0x10] sm:$0xf]
  %v19 = vld [vmem:[%s0 + $0x14] sm:$0xf]
  %v20 = vld [vmem:[%s0 + $0x18] sm:$0xf]
  %v21 = vld [vmem:[%s0 + $0x1c] sm:$0xf]
  %v22 = vld [vmem:[%s0 + $0x20] sm:$0xf]
  %v23 = vld [vmem:[%s0 + $0x24] sm:$0xf]
  %v24 = vld [vmem:[%s0 + $0x28] sm:$0xf]
  %v25 = vld [vmem:[%s0 + $0x2c] sm:$0xf]
  %v26 = vld [vmem:[%s0 + $0x30] sm:$0xf]
  %v27 = vld [vmem:[%s0 + $0x34] sm:$0xf]
  %v28 = vld [vmem:[%s0 + $0x38] sm:$0xf]
  %v29 = vld [vmem:[%s0 + $0x3c] sm:$0xf]
  %v30 = vld [vmem:[%s0 + $0x40] sm:$0xf]
  %v31 = vld [vmem:[%s0 + $0x44] sm:$0xf]
  %v32 = vld [vmem:[%s0 + $0x48] sm:$0xf]
  %v33 = vld [vmem:[%s0 + $0x4c] sm:$0xf]
  %v34 = vld [vmem:[%s0 + $0x50] sm:$0xf]
  %v35 = vld [vmem:[%s0 + $0x54] sm:$0xf]
  %v36 = vld [vmem:[%s0 + $0x58] sm:$0xf]
  %v37 = vld [vmem:[%s0 + $0x5c] sm:$0xf]
  %v38 = vld [vmem:[%s0 + $0x60] sm:$0xf]
  %v39 = vld [vmem:[%s0 + $0x64] sm:$0xf]
  %v40 = vld [vmem:[%s0 + $0x68] sm:$0xf]
  %v41 = vld [vmem:[%s0 + $0x6c] sm:$0xf]
  %v42 = vld [vmem:[%s0 + $0x70] sm:$0xf]
  %v43 = vld [vmem:[%s0 + $0x74] sm:$0xf]
  %v44 = vld [vmem:[%s0 + $0x78] sm:$0xf]
  %v45 = vld [vmem:[%s0 + $0x7c] sm:$0xf]
  %v46 = vld [vmem:[%s0 + $0x80] sm:$0xf]
  %v47 = vld [vmem:[%s0 + $0x84] sm:$0xf]
  %v48 = vld [vmem:[%s0 + $0x88] sm:$0xf]
  %v49 = vld [vmem:[%s0 + $0x8c] sm:$0xf]
  %v50 = vld [vmem:[%s0 + $0x90] sm:$0xf]
  %v51 = vld [vmem:[%s0 + $0x94] sm:$0xf]
  %v52 = vld [vmem:[%s0 + $0x98] sm:$0xf]
  %v53 = vld [vmem:[%s0 + $0x9c] sm:$0xf]
  %v54 = vld [vmem:[%s0 + $0xa0] sm:$0xf]
  %v55 = vld [vmem:[%s0 + $0xa4] sm:$0xf]
  %v56 = vld [vmem:[%s0 + $0xa8] sm:$0xf]
  %v57 = vld [vmem:[%s0 + $0xac] sm:$0xf]
  %v58 = vld [vmem:[%s0 + $0xb0] sm:$0xf]
  %v59 = vld [vmem:[%s0 + $0xb4] sm:$0xf]
  %v60 = vld [vmem:[%s0 + $0xb8] sm:$0xf]
  %v61 = vld [vmem:[%s0 + $0xbc] sm:$0xf]
  %v62 = vld [vmem:[%s0 + $0xc0] sm:$0xf]
  %v63 = vld [vmem:[%s0 + $0xc4] sm:$0xf]
  %v64 = vld [vmem:[%s0 + $0xc8] sm:$0xf]
  %v65 = vld [vmem:[%s0 + $0xcc] sm:$0xf]
  %v66 = vld [vmem:[%s0 + $0xd0] sm:$0xf]
  %v67 = vld [vmem:[%s0 + $0xd4] sm:$0xf]
  %v68 = vld [vmem:[%s0 + $0xd8] sm:$0xf]
  %v69 = vld [vmem:[%s0 + $0xdc] sm:$0xf]
  %v70 = vld [vmem:[%s0 + $0xe0] sm:$0xf]
  %v71 = vld [vmem:[%s0 + $0xe4] sm:$0xf]
  %v72 = vld [vmem:[%s0 + $0xe8] sm:$0xf]
  %v73 = vld [vmem:[%s0 + $0xec] sm:$0xf]
  %v74 = vld [vmem:[%s0 + $0xf0] sm:$0xf]
  %v75 = vld [vmem:[%s0 + $0xf4] sm:$0xf]
  %v76 = vld [vmem:[%s0 + $0xf8] sm:$0xf]
  %v77 = vld [vmem:[%s0 + $0xfc] sm:$0xf]
  %v78 = vld [vmem:[%s0 + $0x100] sm:$0xf]
  %v79 = vld [vmem:[%s0 + $0x104] sm:$0xf]
  %v80 = vld [vmem:[%s0 + $0x108] sm:$0xf]
  %v81 = vld [vmem:[%s0 + $0x10c] sm:$0xf]
  %v82 = vld [vmem:[%s0 + $0x110] sm:$0xf]
  %v83 = vld [vmem:[%s0 + $0x114] sm:$0xf]
  %v84 = vld [vmem:[%s0 + $0x118] sm:$0xf]
  %v85 = vld [vmem:[%s0 + $0x11c] sm:$0xf]
  %v86 = vld [vmem:[%s0 + $0x120] sm:$0xf]
  %v87 = vld [vmem:[%s0 + $0x124] sm:$0xf]
  %v88 = vld [vmem:[%s0 + $0x128] sm:$0xf]
  %v89 = vld [vmem:[%s0 + $0x12c] sm:$0xf]
  %v90 = vld [vmem:[%s0 + $0x130] sm:$0xf]
  %v91 = vld [vmem:[%s0 + $0x134] sm:$0xf]
  %v92 = vld [vmem:[%s0 + $0x138] sm:$0xf]
  %v93 = vld [vmem:[%s0 + $0x13c] sm:$0xf]
  %v94 = vld [vmem:[%s0 + $0x140] sm:$0xf]
  %v95 = vld [vmem:[%s0 + $0x144] sm:$0xf]
  %v96 = vld [vmem:[%s0 + $0x148] sm:$0xf]
  %v97 = vld [vmem:[%s0 + $0x14c] sm:$0xf]
  %v98 = vld [vmem:[%s0 + $0x150] sm:$0xf]
  %v99 = vld [vmem:[%s0 + $0x154] sm:$0xf]
  %v100 = vld [vmem:[%s0 + $0x158] sm:$0xf]
  %v101 = vld [vmem:[%s0 + $0x15c] sm:$0xf]
  %v102 = vld [vmem:[%s0 + $0x160] sm:$0xf]
  %v103 = vld [vmem:[%s0 + $0x164] sm:$0xf]
  %v104 = vld [vmem:[%s0 + $0x168] sm:$0xf]
  %v105 = vld [vmem:[%s0 + $0x16c] sm:$0xf]
  %v106 = vld [vmem:[%s0 + $0x170] sm:$0xf]
  %v107 = vld [vmem:[%s0 + $0x174] sm:$0xf]
  %v108 = vld [vmem:[%s0 + $0x178] sm:$0xf]
  %v109 = vld [vmem:[%s0 + $0x17c] sm:$0xf]
  %v110 = vld [vmem:[%s0 + $0x180] sm:$0xf]
  %v111 = vld [vmem:[%s0 + $0x184] sm:$0xf]
  %v112 = vld [vmem:[%s0 + $0x188] sm:$0xf]
  %v113 = vld [vmem:[%s0 + $0x18c] sm:$0xf]
  %v114 = vld [vmem:[%s0 + $0x190] sm:$0xf]
  %v115 = vld [vmem:[%s0 + $0x194] sm:$0xf]
  %v116 = vld [vmem:[%s0 + $0x198] sm:$0xf]
  %v117 = vld [vmem:[%s0 + $0x19c] sm:$0xf]
  %v118 = vld [vmem:[%s0 + $0x1a0] sm:$0xf]
  %v119 = vld [vmem:[%s0 + $0x1a4] sm:$0xf]
  %v120 = vld [vmem:[%s1] sm:$0xf]
  %v121 = vld [vmem:[%s1 + $0x4] sm:$0xf]
  %v122 = vld [vmem:[%s1 + $0x8] sm:$0xf]
  %v123 = vld [vmem:[%s1 + $0xc] sm:$0xf]
  %v124 = vld [vmem:[%s1 + $0x10] sm:$0xf]
  %v125 = vld [vmem:[%s1 + $0x14] sm:$0xf]
  %v126 = vld [vmem:[%s1 + $0x18] sm:$0xf]
  %v127 = vld [vmem:[%s1 + $0x1c] sm:$0xf]
  %v128 = vld [vmem:[%s1 + $0x20] sm:$0xf]
  %v129 = vld [vmem:[%s1 + $0x24] sm:$0xf]
  %v130 = vld [vmem:[%s1 + $0x28] sm:$0xf]
  %v131 = vld [vmem:[%s1 + $0x2c] sm:$0xf]
  %v132 = vld [vmem:[%s1 + $0x30] sm:$0xf]
  %v133 = vld [vmem:[%s1 + $0x34] sm:$0xf]
  %v134 = vld [vmem:[%s1 + $0x38] sm:$0xf]
  %v135 = vld [vmem:[%s1 + $0x3c] sm:$0xf]
  %v136 = vld [vmem:[%s2] sm:$0x1]
  %v138 = vperm.slane %v136, 0
  %v246 = vunpack.c.l.b16 %v14
  %v247 = vunpack.c.l.b16 %v15
  %v248 = vunpack.c.l.b16 %v16
  %v249 = vunpack.c.l.b16 %v17
  %v250 = vunpack.c.l.b16 %v18
  %v251 = vunpack.c.l.b16 %v19
  %v252 = vunpack.c.l.b16 %v20
  %v253 = vunpack.c.l.b16 %v21
  %v254 = vunpack.c.l.b16 %v22
  %v255 = vunpack.c.l.b16 %v23
  %v256 = vunpack.c.l.b16 %v24
  %v257 = vunpack.c.l.b16 %v25
  %v258 = vunpack.c.l.b16 %v26
  %v259 = vunpack.c.l.b16 %v27
  %v260 = vunpack.c.l.b16 %v28
  %v261 = vunpack.c.l.b16 %v29
  %v262 = vunpack.c.l.b16 %v30
  %v263 = vunpack.c.l.b16 %v31
  %v264 = vunpack.c.l.b16 %v32
  %v265 = vunpack.c.l.b16 %v33
  %v266 = vunpack.c.l.b16 %v34
  %v267 = vunpack.c.l.b16 %v35
  %v268 = vunpack.c.l.b16 %v36
  %v269 = vunpack.c.l.b16 %v37
  %v270 = vunpack.c.l.b16 %v38
  %v271 = vunpack.c.l.b16 %v39
  %v272 = vunpack.c.l.b16 %v40
  %v273 = vunpack.c.l.b16 %v41
  %v274 = vunpack.c.l.b16 %v42
  %v275 = vunpack.c.l.b16 %v43
  %v276 = vunpack.c.l.b16 %v44
  %v277 = vunpack.c.l.b16 %v45
  %v278 = vunpack.c.l.b16 %v46
  %v279 = vunpack.c.l.b16 %v47
  %v280 = vunpack.c.l.b16 %v48
  %v281 = vunpack.c.l.b16 %v49
  %v282 = vunpack.c.l.b16 %v50
  %v283 = vunpack.c.l.b16 %v51
  %v284 = vunpack.c.l.b16 %v52
  %v285 = vunpack.c.l.b16 %v53
  %v286 = vunpack.c.l.b16 %v54
  %v287 = vunpack.c.l.b16 %v55
  %v288 = vunpack.c.l.b16 %v56
  %v289 = vunpack.c.l.b16 %v57
  %v290 = vunpack.c.l.b16 %v58
  %v291 = vunpack.c.l.b16 %v59
  %v292 = vunpack.c.l.b16 %v60
  %v293 = vunpack.c.l.b16 %v61
  %v294 = vunpack.c.l.b16 %v62
  %v295 = vunpack.c.l.b16 %v63
  %v296 = vunpack.c.l.b16 %v64
  %v297 = vunpack.c.l.b16 %v65
  %v298 = vunpack.c.l.b16 %v66
  %v299 = vunpack.c.l.b16 %v67
  %v300 = vunpack.c.l.b16 %v68
  %v301 = vunpack.c.l.b16 %v69
  %v302 = vunpack.c.l.b16 %v70
  %v303 = vunpack.c.l.b16 %v71
  %v304 = vunpack.c.l.b16 %v72
  %v305 = vunpack.c.l.b16 %v73
  %v306 = vunpack.c.l.b16 %v74
  %v307 = vunpack.c.l.b16 %v75
  %v308 = vunpack.c.l.b16 %v76
  %v309 = vunpack.c.l.b16 %v77
  %v310 = vunpack.c.l.b16 %v78
  %v311 = vunpack.c.l.b16 %v79
  %v312 = vunpack.c.l.b16 %v80
  %v313 = vunpack.c.l.b16 %v81
  %v314 = vunpack.c.l.b16 %v82
  %v315 = vunpack.c.l.b16 %v83
  %v316 = vunpack.c.l.b16 %v84
  %v317 = vunpack.c.l.b16 %v85
  %v318 = vunpack.c.l.b16 %v86
  %v319 = vunpack.c.l.b16 %v87
  %v320 = vunpack.c.l.b16 %v88
  %v321 = vunpack.c.l.b16 %v89
  %v322 = vunpack.c.l.b16 %v90
  %v323 = vunpack.c.l.b16 %v91
  %v324 = vunpack.c.l.b16 %v92
  %v325 = vunpack.c.l.b16 %v93
  %v326 = vunpack.c.l.b16 %v94
  %v327 = vunpack.c.l.b16 %v95
  %v328 = vunpack.c.l.b16 %v96
  %v329 = vunpack.c.l.b16 %v97
  %v330 = vunpack.c.l.b16 %v98
  %v331 = vunpack.c.l.b16 %v99
  %v332 = vunpack.c.l.b16 %v100
  %v333 = vunpack.c.l.b16 %v101
  %v334 = vunpack.c.l.b16 %v102
  %v335 = vunpack.c.l.b16 %v103
  %v336 = vunpack.c.l.b16 %v104
  %v337 = vunpack.c.l.b16 %v105
  %v338 = vunpack.c.l.b16 %v106
  %v339 = vunpack.c.l.b16 %v107
  %v340 = vunpack.c.l.b16 %v108
  %v341 = vunpack.c.l.b16 %v109
  %v342 = vunpack.c.l.b16 %v110
  %v343 = vunpack.c.l.b16 %v111
  %v344 = vunpack.c.l.b16 %v112
  %v345 = vunpack.c.l.b16 %v113
  %v346 = vunpack.c.l.b16 %v114
  %v347 = vunpack.c.l.b16 %v115
  %v348 = vunpack.c.l.b16 %v116
  %v349 = vunpack.c.l.b16 %v117
  %v350 = vunpack.c.l.b16 %v118
  %v351 = vunpack.c.l.b16 %v119
  %v352 = vpack.c.b16 %v247, %v246
  %v353 = vpack.c.b16 %v249, %v248
  %v354 = vpack.c.b16 %v251, %v250
  %v355 = vpack.c.b16 %v253, %v252
  %v356 = vpack.c.b16 %v255, %v254
  %v357 = vpack.c.b16 %v257, %v256
  %v358 = vpack.c.b16 %v259, %v258
  %v359 = vpack.c.b16 %v261, %v260
  %v360 = vpack.c.b16 %v263, %v262
  %v361 = vpack.c.b16 %v265, %v264
  %v362 = vpack.c.b16 %v267, %v266
  %v363 = vpack.c.b16 %v269, %v268
  %v364 = vpack.c.b16 %v271, %v270
  %v365 = vpack.c.b16 %v273, %v272
  %v366 = vpack.c.b16 %v275, %v274
  %v367 = vpack.c.b16 %v277, %v276
  %v368 = vpack.c.b16 %v279, %v278
  %v369 = vpack.c.b16 %v281, %v280
  %v370 = vpack.c.b16 %v283, %v282
  %v371 = vpack.c.b16 %v285, %v284
  %v372 = vpack.c.b16 %v287, %v286
  %v373 = vpack.c.b16 %v289, %v288
  %v374 = vpack.c.b16 %v291, %v290
  %v375 = vpack.c.b16 %v293, %v292
  %v376 = vpack.c.b16 %v295, %v294
  %v377 = vpack.c.b16 %v297, %v296
  %v378 = vpack.c.b16 %v299, %v298
  %v379 = vpack.c.b16 %v301, %v300
  %v380 = vpack.c.b16 %v303, %v302
  %v381 = vpack.c.b16 %v305, %v304
  %v382 = vpack.c.b16 %v307, %v306
  %v383 = vpack.c.b16 %v309, %v308
  %v384 = vpack.c.b16 %v311, %v310
  %v385 = vpack.c.b16 %v313, %v312
  %v386 = vpack.c.b16 %v315, %v314
  %v387 = vpack.c.b16 %v317, %v316
  %v388 = vpack.c.b16 %v319, %v318
  %v389 = vpack.c.b16 %v321, %v320
  %v390 = vpack.c.b16 %v323, %v322
  %v391 = vpack.c.b16 %v325, %v324
  %v392 = vpack.c.b16 %v327, %v326
  %v393 = vpack.c.b16 %v329, %v328
  %v394 = vpack.c.b16 %v331, %v330
  %v395 = vpack.c.b16 %v333, %v332
  %v396 = vpack.c.b16 %v335, %v334
  %v397 = vpack.c.b16 %v337, %v336
  %v398 = vpack.c.b16 %v339, %v338
  %v399 = vpack.c.b16 %v341, %v340
  %v400 = vpack.c.b16 %v343, %v342
  %v401 = vpack.c.b16 %v345, %v344
  %v402 = vpack.c.b16 %v347, %v346
  %v403 = vpack.c.b16 %v349, %v348
  %v404 = vpack.c.b16 %v351, %v350
  %v474 = vunpack.c.l.b16 %v120
  %v475 = vunpack.c.l.b16 %v121
  %v476 = vunpack.c.l.b16 %v122
  %v477 = vunpack.c.l.b16 %v123
  %v478 = vunpack.c.l.b16 %v124
  %v479 = vunpack.c.l.b16 %v125
  %v480 = vunpack.c.l.b16 %v126
  %v481 = vunpack.c.l.b16 %v127
  %v482 = vunpack.c.l.b16 %v128
  %v483 = vunpack.c.l.b16 %v129
  %v484 = vunpack.c.l.b16 %v130
  %v485 = vunpack.c.l.b16 %v131
  %v486 = vunpack.c.l.b16 %v132
  %v487 = vunpack.c.l.b16 %v133
  %v488 = vunpack.c.l.b16 %v134
  %v489 = vunpack.c.l.b16 %v135
  %v490 = vpack.c.b16 %v475, %v474
  %v491 = vpack.c.b16 %v477, %v476
  %v492 = vpack.c.b16 %v479, %v478
  %v493 = vpack.c.b16 %v481, %v480
  %v494 = vpack.c.b16 %v483, %v482
  %v495 = vpack.c.b16 %v485, %v484
  %v496 = vpack.c.b16 %v487, %v486
  %v497 = vpack.c.b16 %v489, %v488
  %506 = vmatpush.bf16.msra.mxu0 %v497
  %507 = vmatpush.bf16.msra.mxu0 %v496
  %508 = vmatpush.bf16.msra.mxu0 %v495
  %509 = vmatpush.bf16.msra.mxu0 %v494
  %510 = vmatpush.bf16.msra.mxu0 %v493
  %511 = vmatpush.bf16.msra.mxu0 %v492
  %512 = vmatpush.bf16.msra.mxu0 %v491
  %513 = vmatpush.bf16.msra.mxu0 %v490
  %514 = vmatmul.bf16.gmra.mxu0 %v352
  %v515 = vpop.f32.mrf.mxu0
  %v516 = vadd.f32 %v138, %v515
  %v517 = vpop.f32.mrf.mxu0
  %v518 = vadd.f32 %v138, %v517
  %519 = vmatmul.bf16.gmra.mxu0 %v353
  %v520 = vpop.f32.mrf.mxu0
  %v521 = vadd.f32 %v138, %v520
  %v522 = vpop.f32.mrf.mxu0
  %v523 = vadd.f32 %v138, %v522
  %524 = vmatmul.bf16.gmra.mxu0 %v354
  %v525 = vpop.f32.mrf.mxu0
  %v526 = vadd.f32 %v138, %v525
  %v527 = vpop.f32.mrf.mxu0
  %v528 = vadd.f32 %v138, %v527
  %529 = vmatmul.bf16.gmra.mxu0 %v355
  %v530 = vpop.f32.mrf.mxu0
  %v531 = vadd.f32 %v138, %v530
  %v532 = vpop.f32.mrf.mxu0
  %v533 = vadd.f32 %v138, %v532
  %534 = vmatmul.bf16.gmra.mxu0 %v356
  %v535 = vpop.f32.mrf.mxu0
  %v536 = vadd.f32 %v138, %v535
  %v537 = vpop.f32.mrf.mxu0
  %v538 = vadd.f32 %v138, %v537
  %539 = vmatmul.bf16.gmra.mxu0 %v357
  %v540 = vpop.f32.mrf.mxu0
  %v541 = vadd.f32 %v138, %v540
  %v542 = vpop.f32.mrf.mxu0
  %v543 = vadd.f32 %v138, %v542
  %544 = vmatmul.bf16.gmra.mxu0 %v358
  %v545 = vpop.f32.mrf.mxu0
  %v546 = vadd.f32 %v138, %v545
  %v547 = vpop.f32.mrf.mxu0
  %v548 = vadd.f32 %v138, %v547
  %549 = vmatmul.bf16.gmra.mxu0 %v359
  %v550 = vpop.f32.mrf.mxu0
  %v551 = vadd.f32 %v138, %v550
  %v552 = vpop.f32.mrf.mxu0
  %v553 = vadd.f32 %v138, %v552
  %554 = vmatmul.bf16.gmra.mxu0 %v360
  %v555 = vpop.f32.mrf.mxu0
  %v556 = vadd.f32 %v138, %v555
  %v557 = vpop.f32.mrf.mxu0
  %v558 = vadd.f32 %v138, %v557
  %559 = vmatmul.bf16.gmra.mxu0 %v361
  %v560 = vpop.f32.mrf.mxu0
  %v561 = vadd.f32 %v138, %v560
  %v562 = vpop.f32.mrf.mxu0
  %v563 = vadd.f32 %v138, %v562
  %564 = vmatmul.bf16.gmra.mxu0 %v362
  %v565 = vpop.f32.mrf.mxu0
  %v566 = vadd.f32 %v138, %v565
  %v567 = vpop.f32.mrf.mxu0
  %v568 = vadd.f32 %v138, %v567
  %569 = vmatmul.bf16.gmra.mxu0 %v363
  %v570 = vpop.f32.mrf.mxu0
  %v571 = vadd.f32 %v138, %v570
  %v572 = vpop.f32.mrf.mxu0
  %v573 = vadd.f32 %v138, %v572
  %574 = vmatmul.bf16.gmra.mxu0 %v364
  %v575 = vpop.f32.mrf.mxu0
  %v576 = vadd.f32 %v138, %v575
  %v577 = vpop.f32.mrf.mxu0
  %v578 = vadd.f32 %v138, %v577
  %579 = vmatmul.bf16.gmra.mxu0 %v365
  %v580 = vpop.f32.mrf.mxu0
  %v581 = vadd.f32 %v138, %v580
  %v582 = vpop.f32.mrf.mxu0
  %v583 = vadd.f32 %v138, %v582
  %584 = vmatmul.bf16.gmra.mxu0 %v366
  %v585 = vpop.f32.mrf.mxu0
  %v586 = vadd.f32 %v138, %v585
  %v587 = vpop.f32.mrf.mxu0
  %v588 = vadd.f32 %v138, %v587
  %589 = vmatmul.bf16.gmra.mxu0 %v367
  %v590 = vpop.f32.mrf.mxu0
  %v591 = vadd.f32 %v138, %v590
  %v592 = vpop.f32.mrf.mxu0
  %v593 = vadd.f32 %v138, %v592
  %594 = vmatmul.bf16.gmra.mxu0 %v368
  %v595 = vpop.f32.mrf.mxu0
  %v596 = vadd.f32 %v138, %v595
  %v597 = vpop.f32.mrf.mxu0
  %v598 = vadd.f32 %v138, %v597
  %599 = vmatmul.bf16.gmra.mxu0 %v369
  %v600 = vpop.f32.mrf.mxu0
  %v601 = vadd.f32 %v138, %v600
  %v602 = vpop.f32.mrf.mxu0
  %v603 = vadd.f32 %v138, %v602
  %604 = vmatmul.bf16.gmra.mxu0 %v370
  %v605 = vpop.f32.mrf.mxu0
  %v606 = vadd.f32 %v138, %v605
  %v607 = vpop.f32.mrf.mxu0
  %v608 = vadd.f32 %v138, %v607
  %609 = vmatmul.bf16.gmra.mxu0 %v371
  %v610 = vpop.f32.mrf.mxu0
  %v611 = vadd.f32 %v138, %v610
  %v612 = vpop.f32.mrf.mxu0
  %v613 = vadd.f32 %v138, %v612
  %614 = vmatmul.bf16.gmra.mxu0 %v372
  %v615 = vpop.f32.mrf.mxu0
  %v616 = vadd.f32 %v138, %v615
  %v617 = vpop.f32.mrf.mxu0
  %v618 = vadd.f32 %v138, %v617
  %619 = vmatmul.bf16.gmra.mxu0 %v373
  %v620 = vpop.f32.mrf.mxu0
  %v621 = vadd.f32 %v138, %v620
  %v622 = vpop.f32.mrf.mxu0
  %v623 = vadd.f32 %v138, %v622
  %624 = vmatmul.bf16.gmra.mxu0 %v374
  %v625 = vpop.f32.mrf.mxu0
  %v626 = vadd.f32 %v138, %v625
  %v627 = vpop.f32.mrf.mxu0
  %v628 = vadd.f32 %v138, %v627
  %629 = vmatmul.bf16.gmra.mxu0 %v375
  %v630 = vpop.f32.mrf.mxu0
  %v631 = vadd.f32 %v138, %v630
  %v632 = vpop.f32.mrf.mxu0
  %v633 = vadd.f32 %v138, %v632
  %634 = vmatmul.bf16.gmra.mxu0 %v376
  %v635 = vpop.f32.mrf.mxu0
  %v636 = vadd.f32 %v138, %v635
  %v637 = vpop.f32.mrf.mxu0
  %v638 = vadd.f32 %v138, %v637
  %639 = vmatmul.bf16.gmra.mxu0 %v377
  %v640 = vpop.f32.mrf.mxu0
  %v641 = vadd.f32 %v138, %v640
  %v642 = vpop.f32.mrf.mxu0
  %v643 = vadd.f32 %v138, %v642
  %644 = vmatmul.bf16.gmra.mxu0 %v378
  %v645 = vpop.f32.mrf.mxu0
  %v646 = vadd.f32 %v138, %v645
  %v647 = vpop.f32.mrf.mxu0
  %v648 = vadd.f32 %v138, %v647
  %649 = vmatmul.bf16.gmra.mxu0 %v379
  %v650 = vpop.f32.mrf.mxu0
  %v651 = vadd.f32 %v138, %v650
  %v652 = vpop.f32.mrf.mxu0
  %v653 = vadd.f32 %v138, %v652
  %654 = vmatmul.bf16.gmra.mxu0 %v380
  %v655 = vpop.f32.mrf.mxu0
  %v656 = vadd.f32 %v138, %v655
  %v657 = vpop.f32.mrf.mxu0
  %v658 = vadd.f32 %v138, %v657
  %659 = vmatmul.bf16.gmra.mxu0 %v381
  %v660 = vpop.f32.mrf.mxu0
  %v661 = vadd.f32 %v138, %v660
  %v662 = vpop.f32.mrf.mxu0
  %v663 = vadd.f32 %v138, %v662
  %664 = vmatmul.bf16.gmra.mxu0 %v382
  %v665 = vpop.f32.mrf.mxu0
  %v666 = vadd.f32 %v138, %v665
  %v667 = vpop.f32.mrf.mxu0
  %v668 = vadd.f32 %v138, %v667
  %669 = vmatmul.bf16.gmra.mxu0 %v383
  %v670 = vpop.f32.mrf.mxu0
  %v671 = vadd.f32 %v138, %v670
  %v672 = vpop.f32.mrf.mxu0
  %v673 = vadd.f32 %v138, %v672
  %674 = vmatmul.bf16.gmra.mxu0 %v384
  %v675 = vpop.f32.mrf.mxu0
  %v676 = vadd.f32 %v138, %v675
  %v677 = vpop.f32.mrf.mxu0
  %v678 = vadd.f32 %v138, %v677
  %679 = vmatmul.bf16.gmra.mxu0 %v385
  %v680 = vpop.f32.mrf.mxu0
  %v681 = vadd.f32 %v138, %v680
  %v682 = vpop.f32.mrf.mxu0
  %v683 = vadd.f32 %v138, %v682
  %684 = vmatmul.bf16.gmra.mxu0 %v386
  %v685 = vpop.f32.mrf.mxu0
  %v686 = vadd.f32 %v138, %v685
  %v687 = vpop.f32.mrf.mxu0
  %v688 = vadd.f32 %v138, %v687
  %689 = vmatmul.bf16.gmra.mxu0 %v387
  %v690 = vpop.f32.mrf.mxu0
  %v691 = vadd.f32 %v138, %v690
  %v692 = vpop.f32.mrf.mxu0
  %v693 = vadd.f32 %v138, %v692
  %694 = vmatmul.bf16.gmra.mxu0 %v388
  %v695 = vpop.f32.mrf.mxu0
  %v696 = vadd.f32 %v138, %v695
  %v697 = vpop.f32.mrf.mxu0
  %v698 = vadd.f32 %v138, %v697
  %699 = vmatmul.bf16.gmra.mxu0 %v389
  %v700 = vpop.f32.mrf.mxu0
  %v701 = vadd.f32 %v138, %v700
  %v702 = vpop.f32.mrf.mxu0
  %v703 = vadd.f32 %v138, %v702
  %704 = vmatmul.bf16.gmra.mxu0 %v390
  %v705 = vpop.f32.mrf.mxu0
  %v706 = vadd.f32 %v138, %v705
  %v707 = vpop.f32.mrf.mxu0
  %v708 = vadd.f32 %v138, %v707
  %709 = vmatmul.bf16.gmra.mxu0 %v391
  %v710 = vpop.f32.mrf.mxu0
  %v711 = vadd.f32 %v138, %v710
  %v712 = vpop.f32.mrf.mxu0
  %v713 = vadd.f32 %v138, %v712
  %714 = vmatmul.bf16.gmra.mxu0 %v392
  %v715 = vpop.f32.mrf.mxu0
  %v716 = vadd.f32 %v138, %v715
  %v717 = vpop.f32.mrf.mxu0
  %v718 = vadd.f32 %v138, %v717
  %719 = vmatmul.bf16.gmra.mxu0 %v393
  %v720 = vpop.f32.mrf.mxu0
  %v721 = vadd.f32 %v138, %v720
  %v722 = vpop.f32.mrf.mxu0
  %v723 = vadd.f32 %v138, %v722
  %724 = vmatmul.bf16.gmra.mxu0 %v394
  %v725 = vpop.f32.mrf.mxu0
  %v726 = vadd.f32 %v138, %v725
  %v727 = vpop.f32.mrf.mxu0
  %v728 = vadd.f32 %v138, %v727
  %729 = vmatmul.bf16.gmra.mxu0 %v395
  %v730 = vpop.f32.mrf.mxu0
  %v731 = vadd.f32 %v138, %v730
  %v732 = vpop.f32.mrf.mxu0
  %v733 = vadd.f32 %v138, %v732
  %734 = vmatmul.bf16.gmra.mxu0 %v396
  %v735 = vpop.f32.mrf.mxu0
  %v736 = vadd.f32 %v138, %v735
  %v737 = vpop.f32.mrf.mxu0
  %v738 = vadd.f32 %v138, %v737
  %739 = vmatmul.bf16.gmra.mxu0 %v397
  %v740 = vpop.f32.mrf.mxu0
  %v741 = vadd.f32 %v138, %v740
  %v742 = vpop.f32.mrf.mxu0
  %v743 = vadd.f32 %v138, %v742
  %744 = vmatmul.bf16.gmra.mxu0 %v398
  %v745 = vpop.f32.mrf.mxu0
  %v746 = vadd.f32 %v138, %v745
  %v747 = vpop.f32.mrf.mxu0
  %v748 = vadd.f32 %v138, %v747
  %749 = vmatmul.bf16.gmra.mxu0 %v399
  %v750 = vpop.f32.mrf.mxu0
  %v751 = vadd.f32 %v138, %v750
  %v752 = vpop.f32.mrf.mxu0
  %v753 = vadd.f32 %v138, %v752
  %754 = vmatmul.bf16.gmra.mxu0 %v400
  %v755 = vpop.f32.mrf.mxu0
  %v756 = vadd.f32 %v138, %v755
  %v757 = vpop.f32.mrf.mxu0
  %v758 = vadd.f32 %v138, %v757
  %759 = vmatmul.bf16.gmra.mxu0 %v401
  %v760 = vpop.f32.mrf.mxu0
  %v761 = vadd.f32 %v138, %v760
  %v762 = vpop.f32.mrf.mxu0
  %v763 = vadd.f32 %v138, %v762
  %764 = vmatmul.bf16.gmra.mxu0 %v402
  %v765 = vpop.f32.mrf.mxu0
  %v766 = vadd.f32 %v138, %v765
  %v767 = vpop.f32.mrf.mxu0
  %v768 = vadd.f32 %v138, %v767
  %769 = vmatmul.bf16.gmra.mxu0 %v403
  %v770 = vpop.f32.mrf.mxu0
  %v771 = vadd.f32 %v138, %v770
  %v772 = vpop.f32.mrf.mxu0
  %v773 = vadd.f32 %v138, %v772
  %774 = vmatmul.bf16.gmra.mxu0 %v404
  %v775 = vpop.f32.mrf.mxu0
  %v776 = vadd.f32 %v138, %v775
  %v777 = vpop.f32.mrf.mxu0
  %v778 = vadd.f32 %v138, %v777
  %779 = vdwg.mxu0
  %v780 = vmax.f32 %v516, 0.0
  %v781 = vmax.f32 %v518, 0.0
  %v782 = vmax.f32 %v521, 0.0
  %v783 = vmax.f32 %v523, 0.0
  %v784 = vmax.f32 %v526, 0.0
  %v785 = vmax.f32 %v528, 0.0
  %v786 = vmax.f32 %v531, 0.0
  %v787 = vmax.f32 %v533, 0.0
  %v788 = vmax.f32 %v536, 0.0
  %v789 = vmax.f32 %v538, 0.0
  %v790 = vmax.f32 %v541, 0.0
  %v791 = vmax.f32 %v543, 0.0
  %v792 = vmax.f32 %v546, 0.0
  %v793 = vmax.f32 %v548, 0.0
  %v794 = vmax.f32 %v551, 0.0
  %v795 = vmax.f32 %v553, 0.0
  %v796 = vmax.f32 %v556, 0.0
  %v797 = vmax.f32 %v558, 0.0
  %v798 = vmax.f32 %v561, 0.0
  %v799 = vmax.f32 %v563, 0.0
  %v800 = vmax.f32 %v566, 0.0
  %v801 = vmax.f32 %v568, 0.0
  %v802 = vmax.f32 %v571, 0.0
  %v803 = vmax.f32 %v573, 0.0
  %v804 = vmax.f32 %v576, 0.0
  %v805 = vmax.f32 %v578, 0.0
  %v806 = vmax.f32 %v581, 0.0
  %v807 = vmax.f32 %v583, 0.0
  %v808 = vmax.f32 %v586, 0.0
  %v809 = vmax.f32 %v588, 0.0
  %v810 = vmax.f32 %v591, 0.0
  %v811 = vmax.f32 %v593, 0.0
  %v812 = vmax.f32 %v596, 0.0
  %v813 = vmax.f32 %v598, 0.0
  %v814 = vmax.f32 %v601, 0.0
  %v815 = vmax.f32 %v603, 0.0
  %v816 = vmax.f32 %v606, 0.0
  %v817 = vmax.f32 %v608, 0.0
  %v818 = vmax.f32 %v611, 0.0
  %v819 = vmax.f32 %v613, 0.0
  %v820 = vmax.f32 %v616, 0.0
  %v821 = vmax.f32 %v618, 0.0
  %v822 = vmax.f32 %v621, 0.0
  %v823 = vmax.f32 %v623, 0.0
  %v824 = vmax.f32 %v626, 0.0
  %v825 = vmax.f32 %v628, 0.0
  %v826 = vmax.f32 %v631, 0.0
  %v827 = vmax.f32 %v633, 0.0
  %v828 = vmax.f32 %v636, 0.0
  %v829 = vmax.f32 %v638, 0.0
  %v830 = vmax.f32 %v641, 0.0
  %v831 = vmax.f32 %v643, 0.0
  %v832 = vmax.f32 %v646, 0.0
  %v833 = vmax.f32 %v648, 0.0
  %v834 = vmax.f32 %v651, 0.0
  %v835 = vmax.f32 %v653, 0.0
  %v836 = vmax.f32 %v656, 0.0
  %v837 = vmax.f32 %v658, 0.0
  %v838 = vmax.f32 %v661, 0.0
  %v839 = vmax.f32 %v663, 0.0
  %v840 = vmax.f32 %v666, 0.0
  %v841 = vmax.f32 %v668, 0.0
  %v842 = vmax.f32 %v671, 0.0
  %v843 = vmax.f32 %v673, 0.0
  %v844 = vmax.f32 %v676, 0.0
  %v845 = vmax.f32 %v678, 0.0
  %v846 = vmax.f32 %v681, 0.0
  %v847 = vmax.f32 %v683, 0.0
  %v848 = vmax.f32 %v686, 0.0
  %v849 = vmax.f32 %v688, 0.0
  %v850 = vmax.f32 %v691, 0.0
  %v851 = vmax.f32 %v693, 0.0
  %v852 = vmax.f32 %v696, 0.0
  %v853 = vmax.f32 %v698, 0.0
  %v854 = vmax.f32 %v701, 0.0
  %v855 = vmax.f32 %v703, 0.0
  %v856 = vmax.f32 %v706, 0.0
  %v857 = vmax.f32 %v708, 0.0
  %v858 = vmax.f32 %v711, 0.0
  %v859 = vmax.f32 %v713, 0.0
  %v860 = vmax.f32 %v716, 0.0
  %v861 = vmax.f32 %v718, 0.0
  %v862 = vmax.f32 %v721, 0.0
  %v863 = vmax.f32 %v723, 0.0
  %v864 = vmax.f32 %v726, 0.0
  %v865 = vmax.f32 %v728, 0.0
  %v866 = vmax.f32 %v731, 0.0
  %v867 = vmax.f32 %v733, 0.0
  %v868 = vmax.f32 %v736, 0.0
  %v869 = vmax.f32 %v738, 0.0
  %v870 = vmax.f32 %v741, 0.0
  %v871 = vmax.f32 %v743, 0.0
  %v872 = vmax.f32 %v746, 0.0
  %v873 = vmax.f32 %v748, 0.0
  %v874 = vmax.f32 %v751, 0.0
  %v875 = vmax.f32 %v753, 0.0
  %v876 = vmax.f32 %v756, 0.0
  %v877 = vmax.f32 %v758, 0.0
  %v878 = vmax.f32 %v761, 0.0
  %v879 = vmax.f32 %v763, 0.0
  %v880 = vmax.f32 %v766, 0.0
  %v881 = vmax.f32 %v768, 0.0
  %v882 = vmax.f32 %v771, 0.0
  %v883 = vmax.f32 %v773, 0.0
  %v884 = vmax.f32 %v776, 0.0
  %v885 = vmax.f32 %v778, 0.0
  %v886 = vpack.c.bf16 %v780, %v780
  %v887 = vpack.c.bf16 %v781, %v781
  %v888 = vpack.c.bf16 %v782, %v782
  %v889 = vpack.c.bf16 %v783, %v783
  %v890 = vpack.c.bf16 %v784, %v784
  %v891 = vpack.c.bf16 %v785, %v785
  %v892 = vpack.c.bf16 %v786, %v786
  %v893 = vpack.c.bf16 %v787, %v787
  %v894 = vpack.c.bf16 %v788, %v788
  %v895 = vpack.c.bf16 %v789, %v789
  %v896 = vpack.c.bf16 %v790, %v790
  %v897 = vpack.c.bf16 %v791, %v791
  %v898 = vpack.c.bf16 %v792, %v792
  %v899 = vpack.c.bf16 %v793, %v793
  %v900 = vpack.c.bf16 %v794, %v794
  %v901 = vpack.c.bf16 %v795, %v795
  %v902 = vpack.c.bf16 %v796, %v796
  %v903 = vpack.c.bf16 %v797, %v797
  %v904 = vpack.c.bf16 %v798, %v798
  %v905 = vpack.c.bf16 %v799, %v799
  %v906 = vpack.c.bf16 %v800, %v800
  %v907 = vpack.c.bf16 %v801, %v801
  %v908 = vpack.c.bf16 %v802, %v802
  %v909 = vpack.c.bf16 %v803, %v803
  %v910 = vpack.c.bf16 %v804, %v804
  %v911 = vpack.c.bf16 %v805, %v805
  %v912 = vpack.c.bf16 %v806, %v806
  %v913 = vpack.c.bf16 %v807, %v807
  %v914 = vpack.c.bf16 %v808, %v808
  %v915 = vpack.c.bf16 %v809, %v809
  %v916 = vpack.c.bf16 %v810, %v810
  %v917 = vpack.c.bf16 %v811, %v811
  %v918 = vpack.c.bf16 %v812, %v812
  %v919 = vpack.c.bf16 %v813, %v813
  %v920 = vpack.c.bf16 %v814, %v814
  %v921 = vpack.c.bf16 %v815, %v815
  %v922 = vpack.c.bf16 %v816, %v816
  %v923 = vpack.c.bf16 %v817, %v817
  %v924 = vpack.c.bf16 %v818, %v818
  %v925 = vpack.c.bf16 %v819, %v819
  %v926 = vpack.c.bf16 %v820, %v820
  %v927 = vpack.c.bf16 %v821, %v821
  %v928 = vpack.c.bf16 %v822, %v822
  %v929 = vpack.c.bf16 %v823, %v823
  %v930 = vpack.c.bf16 %v824, %v824
  %v931 = vpack.c.bf16 %v825, %v825
  %v932 = vpack.c.bf16 %v826, %v826
  %v933 = vpack.c.bf16 %v827, %v827
  %v934 = vpack.c.bf16 %v828, %v828
  %v935 = vpack.c.bf16 %v829, %v829
  %v936 = vpack.c.bf16 %v830, %v830
  %v937 = vpack.c.bf16 %v831, %v831
  %v938 = vpack.c.bf16 %v832, %v832
  %v939 = vpack.c.bf16 %v833, %v833
  %v940 = vpack.c.bf16 %v834, %v834
  %v941 = vpack.c.bf16 %v835, %v835
  %v942 = vpack.c.bf16 %v836, %v836
  %v943 = vpack.c.bf16 %v837, %v837
  %v944 = vpack.c.bf16 %v838, %v838
  %v945 = vpack.c.bf16 %v839, %v839
  %v946 = vpack.c.bf16 %v840, %v840
  %v947 = vpack.c.bf16 %v841, %v841
  %v948 = vpack.c.bf16 %v842, %v842
  %v949 = vpack.c.bf16 %v843, %v843
  %v950 = vpack.c.bf16 %v844, %v844
  %v951 = vpack.c.bf16 %v845, %v845
  %v952 = vpack.c.bf16 %v846, %v846
  %v953 = vpack.c.bf16 %v847, %v847
  %v954 = vpack.c.bf16 %v848, %v848
  %v955 = vpack.c.bf16 %v849, %v849
  %v956 = vpack.c.bf16 %v850, %v850
  %v957 = vpack.c.bf16 %v851, %v851
  %v958 = vpack.c.bf16 %v852, %v852
  %v959 = vpack.c.bf16 %v853, %v853
  %v960 = vpack.c.bf16 %v854, %v854
  %v961 = vpack.c.bf16 %v855, %v855
  %v962 = vpack.c.bf16 %v856, %v856
  %v963 = vpack.c.bf16 %v857, %v857
  %v964 = vpack.c.bf16 %v858, %v858
  %v965 = vpack.c.bf16 %v859, %v859
  %v966 = vpack.c.bf16 %v860, %v860
  %v967 = vpack.c.bf16 %v861, %v861
  %v968 = vpack.c.bf16 %v862, %v862
  %v969 = vpack.c.bf16 %v863, %v863
  %v970 = vpack.c.bf16 %v864, %v864
  %v971 = vpack.c.bf16 %v865, %v865
  %v972 = vpack.c.bf16 %v866, %v866
  %v973 = vpack.c.bf16 %v867, %v867
  %v974 = vpack.c.bf16 %v868, %v868
  %v975 = vpack.c.bf16 %v869, %v869
  %v976 = vpack.c.bf16 %v870, %v870
  %v977 = vpack.c.bf16 %v871, %v871
  %v978 = vpack.c.bf16 %v872, %v872
  %v979 = vpack.c.bf16 %v873, %v873
  %v980 = vpack.c.bf16 %v874, %v874
  %v981 = vpack.c.bf16 %v875, %v875
  %v982 = vpack.c.bf16 %v876, %v876
  %v983 = vpack.c.bf16 %v877, %v877
  %v984 = vpack.c.bf16 %v878, %v878
  %v985 = vpack.c.bf16 %v879, %v879
  %v986 = vpack.c.bf16 %v880, %v880
  %v987 = vpack.c.bf16 %v881, %v881
  %v988 = vpack.c.bf16 %v882, %v882
  %v989 = vpack.c.bf16 %v883, %v883
  %v990 = vpack.c.bf16 %v884, %v884
  %v991 = vpack.c.bf16 %v885, %v885
  %992 = vst [vmem:[%s3] sm:$0xf] %v886
  %993 = vst [vmem:[%s3 + $0x4] sm:$0xf] %v887
  %994 = vst [vmem:[%s3 + $0x8] sm:$0xf] %v888
  %995 = vst [vmem:[%s3 + $0xc] sm:$0xf] %v889
  %996 = vst [vmem:[%s3 + $0x10] sm:$0xf] %v890
  %997 = vst [vmem:[%s3 + $0x14] sm:$0xf] %v891
  %998 = vst [vmem:[%s3 + $0x18] sm:$0xf] %v892
  %999 = vst [vmem:[%s3 + $0x1c] sm:$0xf] %v893
  %1000 = vst [vmem:[%s3 + $0x20] sm:$0xf] %v894
  %1001 = vst [vmem:[%s3 + $0x24] sm:$0xf] %v895
  %1002 = vst [vmem:[%s3 + $0x28] sm:$0xf] %v896
  %1003 = vst [vmem:[%s3 + $0x2c] sm:$0xf] %v897
  %1004 = vst [vmem:[%s3 + $0x30] sm:$0xf] %v898
  %1005 = vst [vmem:[%s3 + $0x34] sm:$0xf] %v899
  %1006 = vst [vmem:[%s3 + $0x38] sm:$0xf] %v900
  %1007 = vst [vmem:[%s3 + $0x3c] sm:$0xf] %v901
  %1008 = vst [vmem:[%s3 + $0x40] sm:$0xf] %v902
  %1009 = vst [vmem:[%s3 + $0x44] sm:$0xf] %v903
  %1010 = vst [vmem:[%s3 + $0x48] sm:$0xf] %v904
  %1011 = vst [vmem:[%s3 + $0x4c] sm:$0xf] %v905
  %1012 = vst [vmem:[%s3 + $0x50] sm:$0xf] %v906
  %1013 = vst [vmem:[%s3 + $0x54] sm:$0xf] %v907
  %1014 = vst [vmem:[%s3 + $0x58] sm:$0xf] %v908
  %1015 = vst [vmem:[%s3 + $0x5c] sm:$0xf] %v909
  %1016 = vst [vmem:[%s3 + $0x60] sm:$0xf] %v910
  %1017 = vst [vmem:[%s3 + $0x64] sm:$0xf] %v911
  %1018 = vst [vmem:[%s3 + $0x68] sm:$0xf] %v912
  %1019 = vst [vmem:[%s3 + $0x6c] sm:$0xf] %v913
  %1020 = vst [vmem:[%s3 + $0x70] sm:$0xf] %v914
  %1021 = vst [vmem:[%s3 + $0x74] sm:$0xf] %v915
  %1022 = vst [vmem:[%s3 + $0x78] sm:$0xf] %v916
  %1023 = vst [vmem:[%s3 + $0x7c] sm:$0xf] %v917
  %1024 = vst [vmem:[%s3 + $0x80] sm:$0xf] %v918
  %1025 = vst [vmem:[%s3 + $0x84] sm:$0xf] %v919
  %1026 = vst [vmem:[%s3 + $0x88] sm:$0xf] %v920
  %1027 = vst [vmem:[%s3 + $0x8c] sm:$0xf] %v921
  %1028 = vst [vmem:[%s3 + $0x90] sm:$0xf] %v922
  %1029 = vst [vmem:[%s3 + $0x94] sm:$0xf] %v923
  %1030 = vst [vmem:[%s3 + $0x98] sm:$0xf] %v924
  %1031 = vst [vmem:[%s3 + $0x9c] sm:$0xf] %v925
  %1032 = vst [vmem:[%s3 + $0xa0] sm:$0xf] %v926
  %1033 = vst [vmem:[%s3 + $0xa4] sm:$0xf] %v927
  %1034 = vst [vmem:[%s3 + $0xa8] sm:$0xf] %v928
  %1035 = vst [vmem:[%s3 + $0xac] sm:$0xf] %v929
  %1036 = vst [vmem:[%s3 + $0xb0] sm:$0xf] %v930
  %1037 = vst [vmem:[%s3 + $0xb4] sm:$0xf] %v931
  %1038 = vst [vmem:[%s3 + $0xb8] sm:$0xf] %v932
  %1039 = vst [vmem:[%s3 + $0xbc] sm:$0xf] %v933
  %1040 = vst [vmem:[%s3 + $0xc0] sm:$0xf] %v934
  %1041 = vst [vmem:[%s3 + $0xc4] sm:$0xf] %v935
  %1042 = vst [vmem:[%s3 + $0xc8] sm:$0xf] %v936
  %1043 = vst [vmem:[%s3 + $0xcc] sm:$0xf] %v937
  %1044 = vst [vmem:[%s3 + $0xd0] sm:$0xf] %v938
  %1045 = vst [vmem:[%s3 + $0xd4] sm:$0xf] %v939
  %1046 = vst [vmem:[%s3 + $0xd8] sm:$0xf] %v940
  %1047 = vst [vmem:[%s3 + $0xdc] sm:$0xf] %v941
  %1048 = vst [vmem:[%s3 + $0xe0] sm:$0xf] %v942
  %1049 = vst [vmem:[%s3 + $0xe4] sm:$0xf] %v943
  %1050 = vst [vmem:[%s3 + $0xe8] sm:$0xf] %v944
  %1051 = vst [vmem:[%s3 + $0xec] sm:$0xf] %v945
  %1052 = vst [vmem:[%s3 + $0xf0] sm:$0xf] %v946
  %1053 = vst [vmem:[%s3 + $0xf4] sm:$0xf] %v947
  %1054 = vst [vmem:[%s3 + $0xf8] sm:$0xf] %v948
  %1055 = vst [vmem:[%s3 + $0xfc] sm:$0xf] %v949
  %1056 = vst [vmem:[%s3 + $0x100] sm:$0xf] %v950
  %1057 = vst [vmem:[%s3 + $0x104] sm:$0xf] %v951
  %1058 = vst [vmem:[%s3 + $0x108] sm:$0xf] %v952
  %1059 = vst [vmem:[%s3 + $0x10c] sm:$0xf] %v953
  %1060 = vst [vmem:[%s3 + $0x110] sm:$0xf] %v954
  %1061 = vst [vmem:[%s3 + $0x114] sm:$0xf] %v955
  %1062 = vst [vmem:[%s3 + $0x118] sm:$0xf] %v956
  %1063 = vst [vmem:[%s3 + $0x11c] sm:$0xf] %v957
  %1064 = vst [vmem:[%s3 + $0x120] sm:$0xf] %v958
  %1065 = vst [vmem:[%s3 + $0x124] sm:$0xf] %v959
  %1066 = vst [vmem:[%s3 + $0x128] sm:$0xf] %v960
  %1067 = vst [vmem:[%s3 + $0x12c] sm:$0xf] %v961
  %1068 = vst [vmem:[%s3 + $0x130] sm:$0xf] %v962
  %1069 = vst [vmem:[%s3 + $0x134] sm:$0xf] %v963
  %1070 = vst [vmem:[%s3 + $0x138] sm:$0xf] %v964
  %1071 = vst [vmem:[%s3 + $0x13c] sm:$0xf] %v965
  %1072 = vst [vmem:[%s3 + $0x140] sm:$0xf] %v966
  %1073 = vst [vmem:[%s3 + $0x144] sm:$0xf] %v967
  %1074 = vst [vmem:[%s3 + $0x148] sm:$0xf] %v968
  %1075 = vst [vmem:[%s3 + $0x14c] sm:$0xf] %v969
  %1076 = vst [vmem:[%s3 + $0x150] sm:$0xf] %v970
  %1077 = vst [vmem:[%s3 + $0x154] sm:$0xf] %v971
  %1078 = vst [vmem:[%s3 + $0x158] sm:$0xf] %v972
  %1079 = vst [vmem:[%s3 + $0x15c] sm:$0xf] %v973
  %1080 = vst [vmem:[%s3 + $0x160] sm:$0xf] %v974
  %1081 = vst [vmem:[%s3 + $0x164] sm:$0xf] %v975
  %1082 = vst [vmem:[%s3 + $0x168] sm:$0xf] %v976
  %1083 = vst [vmem:[%s3 + $0x16c] sm:$0xf] %v977
  %1084 = vst [vmem:[%s3 + $0x170] sm:$0xf] %v978
  %1085 = vst [vmem:[%s3 + $0x174] sm:$0xf] %v979
  %1086 = vst [vmem:[%s3 + $0x178] sm:$0xf] %v980
  %1087 = vst [vmem:[%s3 + $0x17c] sm:$0xf] %v981
  %1088 = vst [vmem:[%s3 + $0x180] sm:$0xf] %v982
  %1089 = vst [vmem:[%s3 + $0x184] sm:$0xf] %v983
  %1090 = vst [vmem:[%s3 + $0x188] sm:$0xf] %v984
  %1091 = vst [vmem:[%s3 + $0x18c] sm:$0xf] %v985
  %1092 = vst [vmem:[%s3 + $0x190] sm:$0xf] %v986
  %1093 = vst [vmem:[%s3 + $0x194] sm:$0xf] %v987
  %1094 = vst [vmem:[%s3 + $0x198] sm:$0xf] %v988
  %1095 = vst [vmem:[%s3 + $0x19c] sm:$0xf] %v989
  %1096 = vst [vmem:[%s3 + $0x1a0] sm:$0xf] %v990
  %1097 = vst [vmem:[%s3 + $0x1a4] sm:$0xf] %v991
  // Predicated region
  $region14: #{actor_critic_forward.4} parent=0 // pred_check
    _
  $region15: #{actor_critic_forward.4} parent=0 // pred_check_branch
    %1099 = sbr.rel (0) target = $region17
  $region16: #{actor_critic_forward.4} parent=0 // pred_region
    _
  $region17: #{actor_critic_forward.4} parent=0 // pred_fallthru
    _
  // Predicated region
  $region18: #{actor_critic_forward.4} parent=0 // pred_check
    _
  $region19: #{actor_critic_forward.4} parent=0 // pred_check_branch
    %1101 = sbr.rel (0) target = $region21
  $region20: #{actor_critic_forward.4} parent=0 // pred_region
    _
  $region21: #{actor_critic_forward.4} parent=0 // pred_fallthru
    _

// kernel: actor_critic_forward.5
$region0: #{actor_critic_forward.5}
  #allocation0 [shape = 'u32[]', space=smem, size = 0x4, offset = 0x4, fixed_abs, tag = 'smem constant byte address 0x4 - core index']
  #allocation1 [shape = 'u32[72,128]{1,0:T(1,128)}', space=vmem, size = 0x9000, scoped, tag = 'internal scratch']
  %s0 = inlined_call_operand.vmem [shape: bf16[176,512], index: 0, kind: input, shape index: {}]
  %s1 = inlined_call_operand.vmem [shape: bf16[512,128], index: 1, kind: input, shape index: {}]
  %s2 = inlined_call_operand.vmem [shape: f32[1,128], index: 2, kind: input, shape index: {}]
  %s3 = inlined_call_operand.vmem [shape: bf16[176,128], index: 3, kind: output, shape index: {}]
  %s4 = sld [smem:[#allocation0]]
  $region22: #{actor_critic_forward.5} parent=0
    _
  %s6 = ssub.s32 1, %s4
  %s7 = scalar_select 0, %s6, %s4
  // Predicated region
  $region2: #{actor_critic_forward.5} parent=0 // pred_check
    _
  $region3: #{actor_critic_forward.5} parent=0 // pred_check_branch
    %9 = sbr.rel (0) target = $region5
  $region4: #{actor_critic_forward.5} parent=0 // pred_region
    _
  $region5: #{actor_critic_forward.5} parent=0 // pred_fallthru
    _
  // Predicated region
  $region6: #{actor_critic_forward.5} parent=0 // pred_check
    _
  $region7: #{actor_critic_forward.5} parent=0 // pred_check_branch
    %11 = sbr.rel (0) target = $region9
  $region8: #{actor_critic_forward.5} parent=0 // pred_region
    _
  $region9: #{actor_critic_forward.5} parent=0 // pred_fallthru
    _
  // Predicated region
  $region10: #{actor_critic_forward.5} parent=0 // pred_check
    _
  $region11: #{actor_critic_forward.5} parent=0 // pred_check_branch
    %13 = sbr.rel (0) target = $region13
  $region12: #{actor_critic_forward.5} parent=0 // pred_region
    _
  $region13: #{actor_critic_forward.5} parent=0 // pred_fallthru
    _
  %v14 = vld [vmem:[%s0] sm:$0xff]
  %v15 = vld [vmem:[%s0 + $0x8] sm:$0xff]
  %v16 = vld [vmem:[%s0 + $0x10] sm:$0xff]
  %v17 = vld [vmem:[%s0 + $0x18] sm:$0xff]
  %v18 = vld [vmem:[%s0 + $0x20] sm:$0xff]
  %v19 = vld [vmem:[%s0 + $0x28] sm:$0xff]
  %v20 = vld [vmem:[%s0 + $0x30] sm:$0xff]
  %v21 = vld [vmem:[%s0 + $0x38] sm:$0xff]
  %v22 = vld [vmem:[%s0 + $0x40] sm:$0xff]
  %v23 = vld [vmem:[%s0 + $0x48] sm:$0xff]
  %v24 = vld [vmem:[%s0 + $0x50] sm:$0xff]
  %v25 = vld [vmem:[%s0 + $0x58] sm:$0xff]
  %v26 = vld [vmem:[%s0 + $0x60] sm:$0xff]
  %v27 = vld [vmem:[%s0 + $0x68] sm:$0xff]
  %v28 = vld [vmem:[%s0 + $0x70] sm:$0xff]
  %v29 = vld [vmem:[%s0 + $0x78] sm:$0xff]
  %v30 = vld [vmem:[%s0 + $0x80] sm:$0xff]
  %v31 = vld [vmem:[%s0 + $0x88] sm:$0xff]
  %v32 = vld [vmem:[%s0 + $0x90] sm:$0xff]
  %v33 = vld [vmem:[%s0 + $0x98] sm:$0xff]
  %v34 = vld [vmem:[%s0 + $0xa0] sm:$0xff]
  %v35 = vld [vmem:[%s0 + $0xa8] sm:$0xff]
  %v36 = vld [vmem:[%s0 + $0xb0] sm:$0xff]
  %v37 = vld [vmem:[%s0 + $0xb8] sm:$0xff]
  %v38 = vld [vmem:[%s0 + $0xc0] sm:$0xff]
  %v39 = vld [vmem:[%s0 + $0xc8] sm:$0xff]
  %v40 = vld [vmem:[%s0 + $0xd0] sm:$0xff]
  %v41 = vld [vmem:[%s0 + $0xd8] sm:$0xff]
  %v42 = vld [vmem:[%s0 + $0xe0] sm:$0xff]
  %v43 = vld [vmem:[%s0 + $0xe8] sm:$0xff]
  %v44 = vld [vmem:[%s0 + $0xf0] sm:$0xff]
  %v45 = vld [vmem:[%s0 + $0xf8] sm:$0xff]
  %v46 = vld [vmem:[%s0 + $0x100] sm:$0xff]
  %v47 = vld [vmem:[%s0 + $0x108] sm:$0xff]
  %v48 = vld [vmem:[%s0 + $0x110] sm:$0xff]
  %v49 = vld [vmem:[%s0 + $0x118] sm:$0xff]
  %v50 = vld [vmem:[%s0 + $0x120] sm:$0xff]
  %v51 = vld [vmem:[%s0 + $0x128] sm:$0xff]
  %v52 = vld [vmem:[%s0 + $0x130] sm:$0xff]
  %v53 = vld [vmem:[%s0 + $0x138] sm:$0xff]
  %v54 = vld [vmem:[%s0 + $0x140] sm:$0xff]
  %v55 = vld [vmem:[%s0 + $0x148] sm:$0xff]
  %v56 = vld [vmem:[%s0 + $0x150] sm:$0xff]
  %v57 = vld [vmem:[%s0 + $0x158] sm:$0xff]
  %v58 = vld [vmem:[%s1] sm:$0xf]
  %v59 = vld [vmem:[%s1 + $0x4] sm:$0xf]
  %v60 = vld [vmem:[%s1 + $0x8] sm:$0xf]
  %v61 = vld [vmem:[%s1 + $0xc] sm:$0xf]
  %v62 = vld [vmem:[%s1 + $0x10] sm:$0xf]
  %v63 = vld [vmem:[%s1 + $0x14] sm:$0xf]
  %v64 = vld [vmem:[%s1 + $0x18] sm:$0xf]
  %v65 = vld [vmem:[%s1 + $0x1c] sm:$0xf]
  %v66 = vld [vmem:[%s1 + $0x20] sm:$0xf]
  %v67 = vld [vmem:[%s1 + $0x24] sm:$0xf]
  %v68 = vld [vmem:[%s1 + $0x28] sm:$0xf]
  %v69 = vld [vmem:[%s1 + $0x2c] sm:$0xf]
  %v70 = vld [vmem:[%s1 + $0x30] sm:$0xf]
  %v71 = vld [vmem:[%s1 + $0x34] sm:$0xf]
  %v72 = vld [vmem:[%s1 + $0x38] sm:$0xf]
  %v73 = vld [vmem:[%s1 + $0x3c] sm:$0xf]
  %v74 = vld [vmem:[%s1 + $0x40] sm:$0xf]
  %v75 = vld [vmem:[%s1 + $0x44] sm:$0xf]
  %v76 = vld [vmem:[%s1 + $0x48] sm:$0xf]
  %v77 = vld [vmem:[%s1 + $0x4c] sm:$0xf]
  %v78 = vld [vmem:[%s1 + $0x50] sm:$0xf]
  %v79 = vld [vmem:[%s1 + $0x54] sm:$0xf]
  %v80 = vld [vmem:[%s1 + $0x58] sm:$0xf]
  %v81 = vld [vmem:[%s1 + $0x5c] sm:$0xf]
  %v82 = vld [vmem:[%s1 + $0x60] sm:$0xf]
  %v83 = vld [vmem:[%s1 + $0x64] sm:$0xf]
  %v84 = vld [vmem:[%s1 + $0x68] sm:$0xf]
  %v85 = vld [vmem:[%s1 + $0x6c] sm:$0xf]
  %v86 = vld [vmem:[%s1 + $0x70] sm:$0xf]
  %v87 = vld [vmem:[%s1 + $0x74] sm:$0xf]
  %v88 = vld [vmem:[%s1 + $0x78] sm:$0xf]
  %v89 = vld [vmem:[%s1 + $0x7c] sm:$0xf]
  %v90 = vld [vmem:[%s1 + $0x80] sm:$0xf]
  %v91 = vld [vmem:[%s1 + $0x84] sm:$0xf]
  %v92 = vld [vmem:[%s1 + $0x88] sm:$0xf]
  %v93 = vld [vmem:[%s1 + $0x8c] sm:$0xf]
  %v94 = vld [vmem:[%s1 + $0x90] sm:$0xf]
  %v95 = vld [vmem:[%s1 + $0x94] sm:$0xf]
  %v96 = vld [vmem:[%s1 + $0x98] sm:$0xf]
  %v97 = vld [vmem:[%s1 + $0x9c] sm:$0xf]
  %v98 = vld [vmem:[%s1 + $0xa0] sm:$0xf]
  %v99 = vld [vmem:[%s1 + $0xa4] sm:$0xf]
  %v100 = vld [vmem:[%s1 + $0xa8] sm:$0xf]
  %v101 = vld [vmem:[%s1 + $0xac] sm:$0xf]
  %v102 = vld [vmem:[%s1 + $0xb0] sm:$0xf]
  %v103 = vld [vmem:[%s1 + $0xb4] sm:$0xf]
  %v104 = vld [vmem:[%s1 + $0xb8] sm:$0xf]
  %v105 = vld [vmem:[%s1 + $0xbc] sm:$0xf]
  %v106 = vld [vmem:[%s1 + $0xc0] sm:$0xf]
  %v107 = vld [vmem:[%s1 + $0xc4] sm:$0xf]
  %v108 = vld [vmem:[%s1 + $0xc8] sm:$0xf]
  %v109 = vld [vmem:[%s1 + $0xcc] sm:$0xf]
  %v110 = vld [vmem:[%s1 + $0xd0] sm:$0xf]
  %v111 = vld [vmem:[%s1 + $0xd4] sm:$0xf]
  %v112 = vld [vmem:[%s1 + $0xd8] sm:$0xf]
  %v113 = vld [vmem:[%s1 + $0xdc] sm:$0xf]
  %v114 = vld [vmem:[%s1 + $0xe0] sm:$0xf]
  %v115 = vld [vmem:[%s1 + $0xe4] sm:$0xf]
  %v116 = vld [vmem:[%s1 + $0xe8] sm:$0xf]
  %v117 = vld [vmem:[%s1 + $0xec] sm:$0xf]
  %v118 = vld [vmem:[%s1 + $0xf0] sm:$0xf]
  %v119 = vld [vmem:[%s1 + $0xf4] sm:$0xf]
  %v120 = vld [vmem:[%s1 + $0xf8] sm:$0xf]
  %v121 = vld [vmem:[%s1 + $0xfc] sm:$0xf]
  %v122 = vld [vmem:[%s2] sm:$0x1]
  %v124 = vperm.slane %v122, 0
  %v170 = vunpack.c.l.b16 %v14
  %v171 = vunpack.c.h.b16 %v14
  %v172 = vunpack.c.l.b16 %v15
  %v173 = vunpack.c.h.b16 %v15
  %v174 = vunpack.c.l.b16 %v16
  %v175 = vunpack.c.h.b16 %v16
  %v176 = vunpack.c.l.b16 %v17
  %v177 = vunpack.c.h.b16 %v17
  %v178 = vunpack.c.l.b16 %v18
  %v179 = vunpack.c.h.b16 %v18
  %v180 = vunpack.c.l.b16 %v19
  %v181 = vunpack.c.h.b16 %v19
  %v182 = vunpack.c.l.b16 %v20
  %v183 = vunpack.c.h.b16 %v20
  %v184 = vunpack.c.l.b16 %v21
  %v185 = vunpack.c.h.b16 %v21
  %v186 = vunpack.c.l.b16 %v22
  %v187 = vunpack.c.h.b16 %v22
  %v188 = vunpack.c.l.b16 %v23
  %v189 = vunpack.c.h.b16 %v23
  %v190 = vunpack.c.l.b16 %v24
  %v191 = vunpack.c.h.b16 %v24
  %v192 = vunpack.c.l.b16 %v25
  %v193 = vunpack.c.h.b16 %v25
  %v194 = vunpack.c.l.b16 %v26
  %v195 = vunpack.c.h.b16 %v26
  %v196 = vunpack.c.l.b16 %v27
  %v197 = vunpack.c.h.b16 %v27
  %v198 = vunpack.c.l.b16 %v28
  %v199 = vunpack.c.h.b16 %v28
  %v200 = vunpack.c.l.b16 %v29
  %v201 = vunpack.c.h.b16 %v29
  %v202 = vunpack.c.l.b16 %v30
  %v203 = vunpack.c.h.b16 %v30
  %v204 = vunpack.c.l.b16 %v31
  %v205 = vunpack.c.h.b16 %v31
  %v206 = vunpack.c.l.b16 %v32
  %v207 = vunpack.c.h.b16 %v32
  %v208 = vunpack.c.l.b16 %v33
  %v209 = vunpack.c.h.b16 %v33
  %v210 = vunpack.c.l.b16 %v34
  %v211 = vunpack.c.h.b16 %v34
  %v212 = vunpack.c.l.b16 %v35
  %v213 = vunpack.c.h.b16 %v35
  %v214 = vunpack.c.l.b16 %v36
  %v215 = vunpack.c.h.b16 %v36
  %v216 = vunpack.c.l.b16 %v37
  %v217 = vunpack.c.h.b16 %v37
  %v218 = vunpack.c.l.b16 %v38
  %v219 = vunpack.c.h.b16 %v38
  %v220 = vunpack.c.l.b16 %v39
  %v221 = vunpack.c.h.b16 %v39
  %v222 = vunpack.c.l.b16 %v40
  %v223 = vunpack.c.h.b16 %v40
  %v224 = vunpack.c.l.b16 %v41
  %v225 = vunpack.c.h.b16 %v41
  %v226 = vunpack.c.l.b16 %v42
  %v227 = vunpack.c.h.b16 %v42
  %v228 = vunpack.c.l.b16 %v43
  %v229 = vunpack.c.h.b16 %v43
  %v230 = vunpack.c.l.b16 %v44
  %v231 = vunpack.c.h.b16 %v44
  %v232 = vunpack.c.l.b16 %v45
  %v233 = vunpack.c.h.b16 %v45
  %v234 = vunpack.c.l.b16 %v46
  %v235 = vunpack.c.h.b16 %v46
  %v236 = vunpack.c.l.b16 %v47
  %v237 = vunpack.c.h.b16 %v47
  %v238 = vunpack.c.l.b16 %v48
  %v239 = vunpack.c.h.b16 %v48
  %v240 = vunpack.c.l.b16 %v49
  %v241 = vunpack.c.h.b16 %v49
  %v242 = vunpack.c.l.b16 %v50
  %v243 = vunpack.c.h.b16 %v50
  %v244 = vunpack.c.l.b16 %v51
  %v245 = vunpack.c.h.b16 %v51
  %v246 = vunpack.c.l.b16 %v52
  %v247 = vunpack.c.h.b16 %v52
  %v248 = vunpack.c.l.b16 %v53
  %v249 = vunpack.c.h.b16 %v53
  %v250 = vunpack.c.l.b16 %v54
  %v251 = vunpack.c.h.b16 %v54
  %v252 = vunpack.c.l.b16 %v55
  %v253 = vunpack.c.h.b16 %v55
  %v254 = vunpack.c.l.b16 %v56
  %v255 = vunpack.c.h.b16 %v56
  %v256 = vunpack.c.l.b16 %v57
  %v257 = vunpack.c.h.b16 %v57
  %v258 = vpack.c.b16 %v174, %v170
  %v259 = vpack.c.b16 %v175, %v171
  %v260 = vpack.c.b16 %v176, %v172
  %v261 = vpack.c.b16 %v177, %v173
  %v262 = vpack.c.b16 %v182, %v178
  %v263 = vpack.c.b16 %v183, %v179
  %v264 = vpack.c.b16 %v184, %v180
  %v265 = vpack.c.b16 %v185, %v181
  %v266 = vpack.c.b16 %v190, %v186
  %v267 = vpack.c.b16 %v191, %v187
  %v268 = vpack.c.b16 %v192, %v188
  %v269 = vpack.c.b16 %v193, %v189
  %v270 = vpack.c.b16 %v198, %v194
  %v271 = vpack.c.b16 %v199, %v195
  %v272 = vpack.c.b16 %v200, %v196
  %v273 = vpack.c.b16 %v201, %v197
  %v274 = vpack.c.b16 %v206, %v202
  %v275 = vpack.c.b16 %v207, %v203
  %v276 = vpack.c.b16 %v208, %v204
  %v277 = vpack.c.b16 %v209, %v205
  %v278 = vpack.c.b16 %v214, %v210
  %v279 = vpack.c.b16 %v215, %v211
  %v280 = vpack.c.b16 %v216, %v212
  %v281 = vpack.c.b16 %v217, %v213
  %v282 = vpack.c.b16 %v222, %v218
  %v283 = vpack.c.b16 %v223, %v219
  %v284 = vpack.c.b16 %v224, %v220
  %v285 = vpack.c.b16 %v225, %v221
  %v286 = vpack.c.b16 %v230, %v226
  %v287 = vpack.c.b16 %v231, %v227
  %v288 = vpack.c.b16 %v232, %v228
  %v289 = vpack.c.b16 %v233, %v229
  %v290 = vpack.c.b16 %v238, %v234
  %v291 = vpack.c.b16 %v239, %v235
  %v292 = vpack.c.b16 %v240, %v236
  %v293 = vpack.c.b16 %v241, %v237
  %v294 = vpack.c.b16 %v246, %v242
  %v295 = vpack.c.b16 %v247, %v243
  %v296 = vpack.c.b16 %v248, %v244
  %v297 = vpack.c.b16 %v249, %v245
  %v298 = vpack.c.b16 %v254, %v250
  %v299 = vpack.c.b16 %v255, %v251
  %v300 = vpack.c.b16 %v256, %v252
  %v301 = vpack.c.b16 %v257, %v253
  %v410 = vunpack.c.l.b16 %v58
  %v411 = vunpack.c.l.b16 %v59
  %v412 = vunpack.c.l.b16 %v60
  %v413 = vunpack.c.l.b16 %v61
  %v414 = vunpack.c.l.b16 %v62
  %v415 = vunpack.c.l.b16 %v63
  %v416 = vunpack.c.l.b16 %v64
  %v417 = vunpack.c.l.b16 %v65
  %v418 = vunpack.c.l.b16 %v66
  %v419 = vunpack.c.l.b16 %v67
  %v420 = vunpack.c.l.b16 %v68
  %v421 = vunpack.c.l.b16 %v69
  %v422 = vunpack.c.l.b16 %v70
  %v423 = vunpack.c.l.b16 %v71
  %v424 = vunpack.c.l.b16 %v72
  %v425 = vunpack.c.l.b16 %v73
  %v426 = vunpack.c.l.b16 %v74
  %v427 = vunpack.c.l.b16 %v75
  %v428 = vunpack.c.l.b16 %v76
  %v429 = vunpack.c.l.b16 %v77
  %v430 = vunpack.c.l.b16 %v78
  %v431 = vunpack.c.l.b16 %v79
  %v432 = vunpack.c.l.b16 %v80
  %v433 = vunpack.c.l.b16 %v81
  %v434 = vunpack.c.l.b16 %v82
  %v435 = vunpack.c.l.b16 %v83
  %v436 = vunpack.c.l.b16 %v84
  %v437 = vunpack.c.l.b16 %v85
  %v438 = vunpack.c.l.b16 %v86
  %v439 = vunpack.c.l.b16 %v87
  %v440 = vunpack.c.l.b16 %v88
  %v441 = vunpack.c.l.b16 %v89
  %v442 = vunpack.c.l.b16 %v90
  %v443 = vunpack.c.l.b16 %v91
  %v444 = vunpack.c.l.b16 %v92
  %v445 = vunpack.c.l.b16 %v93
  %v446 = vunpack.c.l.b16 %v94
  %v447 = vunpack.c.l.b16 %v95
  %v448 = vunpack.c.l.b16 %v96
  %v449 = vunpack.c.l.b16 %v97
  %v450 = vunpack.c.l.b16 %v98
  %v451 = vunpack.c.l.b16 %v99
  %v452 = vunpack.c.l.b16 %v100
  %v453 = vunpack.c.l.b16 %v101
  %v454 = vunpack.c.l.b16 %v102
  %v455 = vunpack.c.l.b16 %v103
  %v456 = vunpack.c.l.b16 %v104
  %v457 = vunpack.c.l.b16 %v105
  %v458 = vunpack.c.l.b16 %v106
  %v459 = vunpack.c.l.b16 %v107
  %v460 = vunpack.c.l.b16 %v108
  %v461 = vunpack.c.l.b16 %v109
  %v462 = vunpack.c.l.b16 %v110
  %v463 = vunpack.c.l.b16 %v111
  %v464 = vunpack.c.l.b16 %v112
  %v465 = vunpack.c.l.b16 %v113
  %v466 = vunpack.c.l.b16 %v114
  %v467 = vunpack.c.l.b16 %v115
  %v468 = vunpack.c.l.b16 %v116
  %v469 = vunpack.c.l.b16 %v117
  %v470 = vunpack.c.l.b16 %v118
  %v471 = vunpack.c.l.b16 %v119
  %v472 = vunpack.c.l.b16 %v120
  %v473 = vunpack.c.l.b16 %v121
  %v474 = vpack.c.b16 %v411, %v410
  %v475 = vpack.c.b16 %v413, %v412
  %v476 = vpack.c.b16 %v415, %v414
  %v477 = vpack.c.b16 %v417, %v416
  %v478 = vpack.c.b16 %v419, %v418
  %v479 = vpack.c.b16 %v421, %v420
  %v480 = vpack.c.b16 %v423, %v422
  %v481 = vpack.c.b16 %v425, %v424
  %v482 = vpack.c.b16 %v427, %v426
  %v483 = vpack.c.b16 %v429, %v428
  %v484 = vpack.c.b16 %v431, %v430
  %v485 = vpack.c.b16 %v433, %v432
  %v486 = vpack.c.b16 %v435, %v434
  %v487 = vpack.c.b16 %v437, %v436
  %v488 = vpack.c.b16 %v439, %v438
  %v489 = vpack.c.b16 %v441, %v440
  %v490 = vpack.c.b16 %v443, %v442
  %v491 = vpack.c.b16 %v445, %v444
  %v492 = vpack.c.b16 %v447, %v446
  %v493 = vpack.c.b16 %v449, %v448
  %v494 = vpack.c.b16 %v451, %v450
  %v495 = vpack.c.b16 %v453, %v452
  %v496 = vpack.c.b16 %v455, %v454
  %v497 = vpack.c.b16 %v457, %v456
  %v498 = vpack.c.b16 %v459, %v458
  %v499 = vpack.c.b16 %v461, %v460
  %v500 = vpack.c.b16 %v463, %v462
  %v501 = vpack.c.b16 %v465, %v464
  %v502 = vpack.c.b16 %v467, %v466
  %v503 = vpack.c.b16 %v469, %v468
  %v504 = vpack.c.b16 %v471, %v470
  %v505 = vpack.c.b16 %v473, %v472
  %538 = vmatpush.bf16.msra.mxu0 %v481
  %539 = vmatpush.bf16.msra.mxu0 %v480
  %540 = vmatpush.bf16.msra.mxu0 %v479
  %541 = vmatpush.bf16.msra.mxu0 %v478
  %542 = vmatpush.bf16.msra.mxu0 %v477
  %543 = vmatpush.bf16.msra.mxu0 %v476
  %544 = vmatpush.bf16.msra.mxu0 %v475
  %545 = vmatpush.bf16.msra.mxu0 %v474
  %546 = vmatmul.bf16.gmra.mxu0 %v258
  %v547 = vpop.f32.mrf.mxu0
  %v548 = vadd.f32 %v124, %v547
  %v549 = vpop.f32.mrf.mxu0
  %v550 = vadd.f32 %v124, %v549
  %551 = vmatmul.bf16.gmra.mxu0 %v262
  %v552 = vpop.f32.mrf.mxu0
  %v553 = vadd.f32 %v124, %v552
  %v554 = vpop.f32.mrf.mxu0
  %v555 = vadd.f32 %v124, %v554
  %556 = vmatmul.bf16.gmra.mxu0 %v266
  %v557 = vpop.f32.mrf.mxu0
  %v558 = vadd.f32 %v124, %v557
  %v559 = vpop.f32.mrf.mxu0
  %v560 = vadd.f32 %v124, %v559
  %561 = vmatmul.bf16.gmra.mxu0 %v270
  %v562 = vpop.f32.mrf.mxu0
  %v563 = vadd.f32 %v124, %v562
  %v564 = vpop.f32.mrf.mxu0
  %v565 = vadd.f32 %v124, %v564
  %566 = vmatmul.bf16.gmra.mxu0 %v274
  %v567 = vpop.f32.mrf.mxu0
  %v568 = vadd.f32 %v124, %v567
  %v569 = vpop.f32.mrf.mxu0
  %v570 = vadd.f32 %v124, %v569
  %571 = vmatmul.bf16.gmra.mxu0 %v278
  %v572 = vpop.f32.mrf.mxu0
  %v573 = vadd.f32 %v124, %v572
  %v574 = vpop.f32.mrf.mxu0
  %v575 = vadd.f32 %v124, %v574
  %576 = vmatmul.bf16.gmra.mxu0 %v282
  %v577 = vpop.f32.mrf.mxu0
  %v578 = vadd.f32 %v124, %v577
  %v579 = vpop.f32.mrf.mxu0
  %v580 = vadd.f32 %v124, %v579
  %581 = vmatmul.bf16.gmra.mxu0 %v286
  %v582 = vpop.f32.mrf.mxu0
  %v583 = vadd.f32 %v124, %v582
  %v584 = vpop.f32.mrf.mxu0
  %v585 = vadd.f32 %v124, %v584
  %586 = vmatmul.bf16.gmra.mxu0 %v290
  %v587 = vpop.f32.mrf.mxu0
  %v588 = vadd.f32 %v124, %v587
  %v589 = vpop.f32.mrf.mxu0
  %v590 = vadd.f32 %v124, %v589
  %591 = vmatmul.bf16.gmra.mxu0 %v294
  %v592 = vpop.f32.mrf.mxu0
  %v593 = vadd.f32 %v124, %v592
  %v594 = vpop.f32.mrf.mxu0
  %v595 = vadd.f32 %v124, %v594
  %596 = vmatmul.bf16.gmra.mxu0 %v298
  %v597 = vpop.f32.mrf.mxu0
  %v598 = vadd.f32 %v124, %v597
  %v599 = vpop.f32.mrf.mxu0
  %v600 = vadd.f32 %v124, %v599
  %601 = vdwg.mxu0
  %602 = vmatpush.bf16.msra.mxu0 %v489
  %603 = vmatpush.bf16.msra.mxu0 %v488
  %604 = vmatpush.bf16.msra.mxu0 %v487
  %605 = vmatpush.bf16.msra.mxu0 %v486
  %606 = vmatpush.bf16.msra.mxu0 %v485
  %607 = vmatpush.bf16.msra.mxu0 %v484
  %608 = vmatpush.bf16.msra.mxu0 %v483
  %609 = vmatpush.bf16.msra.mxu0 %v482
  %610 = vmatmul.bf16.gmra.mxu0 %v259
  %v611 = vpop.f32.mrf.mxu0
  %v612 = vadd.f32 %v548, %v611
  %v613 = vpop.f32.mrf.mxu0
  %v614 = vadd.f32 %v550, %v613
  %615 = vmatmul.bf16.gmra.mxu0 %v263
  %v616 = vpop.f32.mrf.mxu0
  %v617 = vadd.f32 %v553, %v616
  %v618 = vpop.f32.mrf.mxu0
  %v619 = vadd.f32 %v555, %v618
  %620 = vmatmul.bf16.gmra.mxu0 %v267
  %v621 = vpop.f32.mrf.mxu0
  %v622 = vadd.f32 %v558, %v621
  %v623 = vpop.f32.mrf.mxu0
  %v624 = vadd.f32 %v560, %v623
  %625 = vmatmul.bf16.gmra.mxu0 %v271
  %v626 = vpop.f32.mrf.mxu0
  %v627 = vadd.f32 %v563, %v626
  %v628 = vpop.f32.mrf.mxu0
  %v629 = vadd.f32 %v565, %v628
  %630 = vmatmul.bf16.gmra.mxu0 %v275
  %v631 = vpop.f32.mrf.mxu0
  %v632 = vadd.f32 %v568, %v631
  %v633 = vpop.f32.mrf.mxu0
  %v634 = vadd.f32 %v570, %v633
  %635 = vmatmul.bf16.gmra.mxu0 %v279
  %v636 = vpop.f32.mrf.mxu0
  %v637 = vadd.f32 %v573, %v636
  %v638 = vpop.f32.mrf.mxu0
  %v639 = vadd.f32 %v575, %v638
  %640 = vmatmul.bf16.gmra.mxu0 %v283
  %v641 = vpop.f32.mrf.mxu0
  %v642 = vadd.f32 %v578, %v641
  %v643 = vpop.f32.mrf.mxu0
  %v644 = vadd.f32 %v580, %v643
  %645 = vmatmul.bf16.gmra.mxu0 %v287
  %v646 = vpop.f32.mrf.mxu0
  %v647 = vadd.f32 %v583, %v646
  %v648 = vpop.f32.mrf.mxu0
  %v649 = vadd.f32 %v585, %v648
  %650 = vmatmul.bf16.gmra.mxu0 %v291
  %v651 = vpop.f32.mrf.mxu0
  %v652 = vadd.f32 %v588, %v651
  %v653 = vpop.f32.mrf.mxu0
  %v654 = vadd.f32 %v590, %v653
  %655 = vmatmul.bf16.gmra.mxu0 %v295
  %v656 = vpop.f32.mrf.mxu0
  %v657 = vadd.f32 %v593, %v656
  %v658 = vpop.f32.mrf.mxu0
  %v659 = vadd.f32 %v595, %v658
  %660 = vmatmul.bf16.gmra.mxu0 %v299
  %v661 = vpop.f32.mrf.mxu0
  %v662 = vadd.f32 %v598, %v661
  %v663 = vpop.f32.mrf.mxu0
  %v664 = vadd.f32 %v600, %v663
  %665 = vdwg.mxu0
  %666 = vmatpush.bf16.msra.mxu0 %v497
  %667 = vmatpush.bf16.msra.mxu0 %v496
  %668 = vmatpush.bf16.msra.mxu0 %v495
  %669 = vmatpush.bf16.msra.mxu0 %v494
  %670 = vmatpush.bf16.msra.mxu0 %v493
  %671 = vmatpush.bf16.msra.mxu0 %v492
  %672 = vmatpush.bf16.msra.mxu0 %v491
  %673 = vmatpush.bf16.msra.mxu0 %v490
  %674 = vmatmul.bf16.gmra.mxu0 %v260
  %v675 = vpop.f32.mrf.mxu0
  %v676 = vadd.f32 %v612, %v675
  %v677 = vpop.f32.mrf.mxu0
  %v678 = vadd.f32 %v614, %v677
  %679 = vmatmul.bf16.gmra.mxu0 %v264
  %v680 = vpop.f32.mrf.mxu0
  %v681 = vadd.f32 %v617, %v680
  %v682 = vpop.f32.mrf.mxu0
  %v683 = vadd.f32 %v619, %v682
  %684 = vmatmul.bf16.gmra.mxu0 %v268
  %v685 = vpop.f32.mrf.mxu0
  %v686 = vadd.f32 %v622, %v685
  %v687 = vpop.f32.mrf.mxu0
  %v688 = vadd.f32 %v624, %v687
  %689 = vmatmul.bf16.gmra.mxu0 %v272
  %v690 = vpop.f32.mrf.mxu0
  %v691 = vadd.f32 %v627, %v690
  %v692 = vpop.f32.mrf.mxu0
  %v693 = vadd.f32 %v629, %v692
  %694 = vmatmul.bf16.gmra.mxu0 %v276
  %v695 = vpop.f32.mrf.mxu0
  %v696 = vadd.f32 %v632, %v695
  %v697 = vpop.f32.mrf.mxu0
  %v698 = vadd.f32 %v634, %v697
  %699 = vmatmul.bf16.gmra.mxu0 %v280
  %v700 = vpop.f32.mrf.mxu0
  %v701 = vadd.f32 %v637, %v700
  %v702 = vpop.f32.mrf.mxu0
  %v703 = vadd.f32 %v639, %v702
  %704 = vmatmul.bf16.gmra.mxu0 %v284
  %v705 = vpop.f32.mrf.mxu0
  %v706 = vadd.f32 %v642, %v705
  %v707 = vpop.f32.mrf.mxu0
  %v708 = vadd.f32 %v644, %v707
  %709 = vmatmul.bf16.gmra.mxu0 %v288
  %v710 = vpop.f32.mrf.mxu0
  %v711 = vadd.f32 %v647, %v710
  %v712 = vpop.f32.mrf.mxu0
  %v713 = vadd.f32 %v649, %v712
  %714 = vmatmul.bf16.gmra.mxu0 %v292
  %v715 = vpop.f32.mrf.mxu0
  %v716 = vadd.f32 %v652, %v715
  %v717 = vpop.f32.mrf.mxu0
  %v718 = vadd.f32 %v654, %v717
  %719 = vmatmul.bf16.gmra.mxu0 %v296
  %v720 = vpop.f32.mrf.mxu0
  %v721 = vadd.f32 %v657, %v720
  %v722 = vpop.f32.mrf.mxu0
  %v723 = vadd.f32 %v659, %v722
  %724 = vmatmul.bf16.gmra.mxu0 %v300
  %v725 = vpop.f32.mrf.mxu0
  %v726 = vadd.f32 %v662, %v725
  %v727 = vpop.f32.mrf.mxu0
  %v728 = vadd.f32 %v664, %v727
  %729 = vdwg.mxu0
  %730 = vmatpush.bf16.msra.mxu0 %v505
  %731 = vmatpush.bf16.msra.mxu0 %v504
  %732 = vmatpush.bf16.msra.mxu0 %v503
  %733 = vmatpush.bf16.msra.mxu0 %v502
  %734 = vmatpush.bf16.msra.mxu0 %v501
  %735 = vmatpush.bf16.msra.mxu0 %v500
  %736 = vmatpush.bf16.msra.mxu0 %v499
  %737 = vmatpush.bf16.msra.mxu0 %v498
  %738 = vmatmul.bf16.gmra.mxu0 %v261
  %v739 = vpop.f32.mrf.mxu0
  %v740 = vadd.f32 %v676, %v739
  %v741 = vpop.f32.mrf.mxu0
  %v742 = vadd.f32 %v678, %v741
  %743 = vmatmul.bf16.gmra.mxu0 %v265
  %v744 = vpop.f32.mrf.mxu0
  %v745 = vadd.f32 %v681, %v744
  %v746 = vpop.f32.mrf.mxu0
  %v747 = vadd.f32 %v683, %v746
  %748 = vmatmul.bf16.gmra.mxu0 %v269
  %v749 = vpop.f32.mrf.mxu0
  %v750 = vadd.f32 %v686, %v749
  %v751 = vpop.f32.mrf.mxu0
  %v752 = vadd.f32 %v688, %v751
  %753 = vmatmul.bf16.gmra.mxu0 %v273
  %v754 = vpop.f32.mrf.mxu0
  %v755 = vadd.f32 %v691, %v754
  %v756 = vpop.f32.mrf.mxu0
  %v757 = vadd.f32 %v693, %v756
  %758 = vmatmul.bf16.gmra.mxu0 %v277
  %v759 = vpop.f32.mrf.mxu0
  %v760 = vadd.f32 %v696, %v759
  %v761 = vpop.f32.mrf.mxu0
  %v762 = vadd.f32 %v698, %v761
  %763 = vmatmul.bf16.gmra.mxu0 %v281
  %v764 = vpop.f32.mrf.mxu0
  %v765 = vadd.f32 %v701, %v764
  %v766 = vpop.f32.mrf.mxu0
  %v767 = vadd.f32 %v703, %v766
  %768 = vmatmul.bf16.gmra.mxu0 %v285
  %v769 = vpop.f32.mrf.mxu0
  %v770 = vadd.f32 %v706, %v769
  %v771 = vpop.f32.mrf.mxu0
  %v772 = vadd.f32 %v708, %v771
  %773 = vmatmul.bf16.gmra.mxu0 %v289
  %v774 = vpop.f32.mrf.mxu0
  %v775 = vadd.f32 %v711, %v774
  %v776 = vpop.f32.mrf.mxu0
  %v777 = vadd.f32 %v713, %v776
  %778 = vmatmul.bf16.gmra.mxu0 %v293
  %v779 = vpop.f32.mrf.mxu0
  %v780 = vadd.f32 %v716, %v779
  %v781 = vpop.f32.mrf.mxu0
  %v782 = vadd.f32 %v718, %v781
  %783 = vmatmul.bf16.gmra.mxu0 %v297
  %v784 = vpop.f32.mrf.mxu0
  %v785 = vadd.f32 %v721, %v784
  %v786 = vpop.f32.mrf.mxu0
  %v787 = vadd.f32 %v723, %v786
  %788 = vmatmul.bf16.gmra.mxu0 %v301
  %v789 = vpop.f32.mrf.mxu0
  %v790 = vadd.f32 %v726, %v789
  %v791 = vpop.f32.mrf.mxu0
  %v792 = vadd.f32 %v728, %v791
  %793 = vdwg.mxu0
  %v794 = vmax.f32 %v740, 0.0
  %v795 = vmax.f32 %v742, 0.0
  %v796 = vmax.f32 %v745, 0.0
  %v797 = vmax.f32 %v747, 0.0
  %v798 = vmax.f32 %v750, 0.0
  %v799 = vmax.f32 %v752, 0.0
  %v800 = vmax.f32 %v755, 0.0
  %v801 = vmax.f32 %v757, 0.0
  %v802 = vmax.f32 %v760, 0.0
  %v803 = vmax.f32 %v762, 0.0
  %v804 = vmax.f32 %v765, 0.0
  %v805 = vmax.f32 %v767, 0.0
  %v806 = vmax.f32 %v770, 0.0
  %v807 = vmax.f32 %v772, 0.0
  %v808 = vmax.f32 %v775, 0.0
  %v809 = vmax.f32 %v777, 0.0
  %v810 = vmax.f32 %v780, 0.0
  %v811 = vmax.f32 %v782, 0.0
  %v812 = vmax.f32 %v785, 0.0
  %v813 = vmax.f32 %v787, 0.0
  %v814 = vmax.f32 %v790, 0.0
  %v815 = vmax.f32 %v792, 0.0
  %v816 = vpack.c.bf16 %v794, %v794
  %v817 = vpack.c.bf16 %v795, %v795
  %v818 = vpack.c.bf16 %v796, %v796
  %v819 = vpack.c.bf16 %v797, %v797
  %v820 = vpack.c.bf16 %v798, %v798
  %v821 = vpack.c.bf16 %v799, %v799
  %v822 = vpack.c.bf16 %v800, %v800
  %v823 = vpack.c.bf16 %v801, %v801
  %v824 = vpack.c.bf16 %v802, %v802
  %v825 = vpack.c.bf16 %v803, %v803
  %v826 = vpack.c.bf16 %v804, %v804
  %v827 = vpack.c.bf16 %v805, %v805
  %v828 = vpack.c.bf16 %v806, %v806
  %v829 = vpack.c.bf16 %v807, %v807
  %v830 = vpack.c.bf16 %v808, %v808
  %v831 = vpack.c.bf16 %v809, %v809
  %v832 = vpack.c.bf16 %v810, %v810
  %v833 = vpack.c.bf16 %v811, %v811
  %v834 = vpack.c.bf16 %v812, %v812
  %v835 = vpack.c.bf16 %v813, %v813
  %v836 = vpack.c.bf16 %v814, %v814
  %v837 = vpack.c.bf16 %v815, %v815
  %838 = vst [vmem:[%s3] sm:$0xf] %v816
  %839 = vst [vmem:[%s3 + $0x4] sm:$0xf] %v817
  %840 = vst [vmem:[%s3 + $0x8] sm:$0xf] %v818
  %841 = vst [vmem:[%s3 + $0xc] sm:$0xf] %v819
  %842 = vst [vmem:[%s3 + $0x10] sm:$0xf] %v820
  %843 = vst [vmem:[%s3 + $0x14] sm:$0xf] %v821
  %844 = vst [vmem:[%s3 + $0x18] sm:$0xf] %v822
  %845 = vst [vmem:[%s3 + $0x1c] sm:$0xf] %v823
  %846 = vst [vmem:[%s3 + $0x20] sm:$0xf] %v824
  %847 = vst [vmem:[%s3 + $0x24] sm:$0xf] %v825
  %848 = vst [vmem:[%s3 + $0x28] sm:$0xf] %v826
  %849 = vst [vmem:[%s3 + $0x2c] sm:$0xf] %v827
  %850 = vst [vmem:[%s3 + $0x30] sm:$0xf] %v828
  %851 = vst [vmem:[%s3 + $0x34] sm:$0xf] %v829
  %852 = vst [vmem:[%s3 + $0x38] sm:$0xf] %v830
  %853 = vst [vmem:[%s3 + $0x3c] sm:$0xf] %v831
  %854 = vst [vmem:[%s3 + $0x40] sm:$0xf] %v832
  %855 = vst [vmem:[%s3 + $0x44] sm:$0xf] %v833
  %856 = vst [vmem:[%s3 + $0x48] sm:$0xf] %v834
  %857 = vst [vmem:[%s3 + $0x4c] sm:$0xf] %v835
  %858 = vst [vmem:[%s3 + $0x50] sm:$0xf] %v836
  %859 = vst [vmem:[%s3 + $0x54] sm:$0xf] %v837
  // Predicated region
  $region14: #{actor_critic_forward.5} parent=0 // pred_check
    _
  $region15: #{actor_critic_forward.5} parent=0 // pred_check_branch
    %861 = sbr.rel (0) target = $region17
  $region16: #{actor_critic_forward.5} parent=0 // pred_region
    _
  $region17: #{actor_critic_forward.5} parent=0 // pred_fallthru
    _
  // Predicated region
  $region18: #{actor_critic_forward.5} parent=0 // pred_check
    _
  $region19: #{actor_critic_forward.5} parent=0 // pred_check_branch
    %863 = sbr.rel (0) target = $region21
  $region20: #{actor_critic_forward.5} parent=0 // pred_region
    _
  $region21: #{actor_critic_forward.5} parent=0 // pred_fallthru
    _

// kernel: actor_critic_forward.6
$region0: #{actor_critic_forward.6}
  #allocation0 [shape = 'u32[]', space=smem, size = 0x4, offset = 0x4, fixed_abs, tag = 'smem constant byte address 0x4 - core index']
  #allocation1 [shape = 'u32[72,128]{1,0:T(1,128)}', space=vmem, size = 0x9000, scoped, tag = 'internal scratch']
  %s0 = inlined_call_operand.vmem [shape: bf16[32,896], index: 0, kind: input, shape index: {}]
  %s1 = inlined_call_operand.vmem [shape: bf16[896,128], index: 1, kind: input, shape index: {}]
  %s2 = inlined_call_operand.vmem [shape: f32[1,128], index: 2, kind: input, shape index: {}]
  %s3 = inlined_call_operand.vmem [shape: bf16[32,128], index: 3, kind: output, shape index: {}]
  %s4 = sld [smem:[#allocation0]]
  $region22: #{actor_critic_forward.6} parent=0
    _
  %s6 = ssub.s32 1, %s4
  %s7 = scalar_select 0, %s6, %s4
  // Predicated region
  $region2: #{actor_critic_forward.6} parent=0 // pred_check
    _
  $region3: #{actor_critic_forward.6} parent=0 // pred_check_branch
    %9 = sbr.rel (0) target = $region5
  $region4: #{actor_critic_forward.6} parent=0 // pred_region
    _
  $region5: #{actor_critic_forward.6} parent=0 // pred_fallthru
    _
  // Predicated region
  $region6: #{actor_critic_forward.6} parent=0 // pred_check
    _
  $region7: #{actor_critic_forward.6} parent=0 // pred_check_branch
    %11 = sbr.rel (0) target = $region9
  $region8: #{actor_critic_forward.6} parent=0 // pred_region
    _
  $region9: #{actor_critic_forward.6} parent=0 // pred_fallthru
    _
  // Predicated region
  $region10: #{actor_critic_forward.6} parent=0 // pred_check
    _
  $region11: #{actor_critic_forward.6} parent=0 // pred_check_branch
    %13 = sbr.rel (0) target = $region13
  $region12: #{actor_critic_forward.6} parent=0 // pred_region
    _
  $region13: #{actor_critic_forward.6} parent=0 // pred_fallthru
    _
  %v14 = vld [vmem:[%s0] sm:$0xff]
  %v15 = vld [vmem:[%s0 + $0x8] sm:$0xff]
  %v16 = vld [vmem:[%s0 + $0x10] sm:$0xff]
  %v17 = vld [vmem:[%s0 + $0x18] sm:$0xf]
  %v18 = vld [vmem:[%s0 + $0x1c] sm:$0xff]
  %v19 = vld [vmem:[%s0 + $0x24] sm:$0xff]
  %v20 = vld [vmem:[%s0 + $0x2c] sm:$0xff]
  %v21 = vld [vmem:[%s0 + $0x34] sm:$0xf]
  %v22 = vld [vmem:[%s0 + $0x38] sm:$0xff]
  %v23 = vld [vmem:[%s0 + $0x40] sm:$0xff]
  %v24 = vld [vmem:[%s0 + $0x48] sm:$0xff]
  %v25 = vld [vmem:[%s0 + $0x50] sm:$0xf]
  %v26 = vld [vmem:[%s0 + $0x54] sm:$0xff]
  %v27 = vld [vmem:[%s0 + $0x5c] sm:$0xff]
  %v28 = vld [vmem:[%s0 + $0x64] sm:$0xff]
  %v29 = vld [vmem:[%s0 + $0x6c] sm:$0xf]
  %v30 = vld [vmem:[%s1] sm:$0xf]
  %v31 = vld [vmem:[%s1 + $0x4] sm:$0xf]
  %v32 = vld [vmem:[%s1 + $0x8] sm:$0xf]
  %v33 = vld [vmem:[%s1 + $0xc] sm:$0xf]
  %v34 = vld [vmem:[%s1 + $0x10] sm:$0xf]
  %v35 = vld [vmem:[%s1 + $0x14] sm:$0xf]
  %v36 = vld [vmem:[%s1 + $0x18] sm:$0xf]
  %v37 = vld [vmem:[%s1 + $0x1c] sm:$0xf]
  %v38 = vld [vmem:[%s1 + $0x20] sm:$0xf]
  %v39 = vld [vmem:[%s1 + $0x24] sm:$0xf]
  %v40 = vld [vmem:[%s1 + $0x28] sm:$0xf]
  %v41 = vld [vmem:[%s1 + $0x2c] sm:$0xf]
  %v42 = vld [vmem:[%s1 + $0x30] sm:$0xf]
  %v43 = vld [vmem:[%s1 + $0x34] sm:$0xf]
  %v44 = vld [vmem:[%s1 + $0x38] sm:$0xf]
  %v45 = vld [vmem:[%s1 + $0x3c] sm:$0xf]
  %v46 = vld [vmem:[%s1 + $0x40] sm:$0xf]
  %v47 = vld [vmem:[%s1 + $0x44] sm:$0xf]
  %v48 = vld [vmem:[%s1 + $0x48] sm:$0xf]
  %v49 = vld [vmem:[%s1 + $0x4c] sm:$0xf]
  %v50 = vld [vmem:[%s1 + $0x50] sm:$0xf]
  %v51 = vld [vmem:[%s1 + $0x54] sm:$0xf]
  %v52 = vld [vmem:[%s1 + $0x58] sm:$0xf]
  %v53 = vld [vmem:[%s1 + $0x5c] sm:$0xf]
  %v54 = vld [vmem:[%s1 + $0x60] sm:$0xf]
  %v55 = vld [vmem:[%s1 + $0x64] sm:$0xf]
  %v56 = vld [vmem:[%s1 + $0x68] sm:$0xf]
  %v57 = vld [vmem:[%s1 + $0x6c] sm:$0xf]
  %v58 = vld [vmem:[%s1 + $0x70] sm:$0xf]
  %v59 = vld [vmem:[%s1 + $0x74] sm:$0xf]
  %v60 = vld [vmem:[%s1 + $0x78] sm:$0xf]
  %v61 = vld [vmem:[%s1 + $0x7c] sm:$0xf]
  %v62 = vld [vmem:[%s1 + $0x80] sm:$0xf]
  %v63 = vld [vmem:[%s1 + $0x84] sm:$0xf]
  %v64 = vld [vmem:[%s1 + $0x88] sm:$0xf]
  %v65 = vld [vmem:[%s1 + $0x8c] sm:$0xf]
  %v66 = vld [vmem:[%s1 + $0x90] sm:$0xf]
  %v67 = vld [vmem:[%s1 + $0x94] sm:$0xf]
  %v68 = vld [vmem:[%s1 + $0x98] sm:$0xf]
  %v69 = vld [vmem:[%s1 + $0x9c] sm:$0xf]
  %v70 = vld [vmem:[%s1 + $0xa0] sm:$0xf]
  %v71 = vld [vmem:[%s1 + $0xa4] sm:$0xf]
  %v72 = vld [vmem:[%s1 + $0xa8] sm:$0xf]
  %v73 = vld [vmem:[%s1 + $0xac] sm:$0xf]
  %v74 = vld [vmem:[%s1 + $0xb0] sm:$0xf]
  %v75 = vld [vmem:[%s1 + $0xb4] sm:$0xf]
  %v76 = vld [vmem:[%s1 + $0xb8] sm:$0xf]
  %v77 = vld [vmem:[%s1 + $0xbc] sm:$0xf]
  %v78 = vld [vmem:[%s1 + $0xc0] sm:$0xf]
  %v79 = vld [vmem:[%s1 + $0xc4] sm:$0xf]
  %v80 = vld [vmem:[%s1 + $0xc8] sm:$0xf]
  %v81 = vld [vmem:[%s1 + $0xcc] sm:$0xf]
  %v82 = vld [vmem:[%s1 + $0xd0] sm:$0xf]
  %v83 = vld [vmem:[%s1 + $0xd4] sm:$0xf]
  %v84 = vld [vmem:[%s1 + $0xd8] sm:$0xf]
  %v85 = vld [vmem:[%s1 + $0xdc] sm:$0xf]
  %v86 = vld [vmem:[%s1 + $0xe0] sm:$0xf]
  %v87 = vld [vmem:[%s1 + $0xe4] sm:$0xf]
  %v88 = vld [vmem:[%s1 + $0xe8] sm:$0xf]
  %v89 = vld [vmem:[%s1 + $0xec] sm:$0xf]
  %v90 = vld [vmem:[%s1 + $0xf0] sm:$0xf]
  %v91 = vld [vmem:[%s1 + $0xf4] sm:$0xf]
  %v92 = vld [vmem:[%s1 + $0xf8] sm:$0xf]
  %v93 = vld [vmem:[%s1 + $0xfc] sm:$0xf]
  %v94 = vld [vmem:[%s1 + $0x100] sm:$0xf]
  %v95 = vld [vmem:[%s1 + $0x104] sm:$0xf]
  %v96 = vld [vmem:[%s1 + $0x108] sm:$0xf]
  %v97 = vld [vmem:[%s1 + $0x10c] sm:$0xf]
  %v98 = vld [vmem:[%s1 + $0x110] sm:$0xf]
  %v99 = vld [vmem:[%s1 + $0x114] sm:$0xf]
  %v100 = vld [vmem:[%s1 + $0x118] sm:$0xf]
  %v101 = vld [vmem:[%s1 + $0x11c] sm:$0xf]
  %v102 = vld [vmem:[%s1 + $0x120] sm:$0xf]
  %v103 = vld [vmem:[%s1 + $0x124] sm:$0xf]
  %v104 = vld [vmem:[%s1 + $0x128] sm:$0xf]
  %v105 = vld [vmem:[%s1 + $0x12c] sm:$0xf]
  %v106 = vld [vmem:[%s1 + $0x130] sm:$0xf]
  %v107 = vld [vmem:[%s1 + $0x134] sm:$0xf]
  %v108 = vld [vmem:[%s1 + $0x138] sm:$0xf]
  %v109 = vld [vmem:[%s1 + $0x13c] sm:$0xf]
  %v110 = vld [vmem:[%s1 + $0x140] sm:$0xf]
  %v111 = vld [vmem:[%s1 + $0x144] sm:$0xf]
  %v112 = vld [vmem:[%s1 + $0x148] sm:$0xf]
  %v113 = vld [vmem:[%s1 + $0x14c] sm:$0xf]
  %v114 = vld [vmem:[%s1 + $0x150] sm:$0xf]
  %v115 = vld [vmem:[%s1 + $0x154] sm:$0xf]
  %v116 = vld [vmem:[%s1 + $0x158] sm:$0xf]
  %v117 = vld [vmem:[%s1 + $0x15c] sm:$0xf]
  %v118 = vld [vmem:[%s1 + $0x160] sm:$0xf]
  %v119 = vld [vmem:[%s1 + $0x164] sm:$0xf]
  %v120 = vld [vmem:[%s1 + $0x168] sm:$0xf]
  %v121 = vld [vmem:[%s1 + $0x16c] sm:$0xf]
  %v122 = vld [vmem:[%s1 + $0x170] sm:$0xf]
  %v123 = vld [vmem:[%s1 + $0x174] sm:$0xf]
  %v124 = vld [vmem:[%s1 + $0x178] sm:$0xf]
  %v125 = vld [vmem:[%s1 + $0x17c] sm:$0xf]
  %v126 = vld [vmem:[%s1 + $0x180] sm:$0xf]
  %v127 = vld [vmem:[%s1 + $0x184] sm:$0xf]
  %v128 = vld [vmem:[%s1 + $0x188] sm:$0xf]
  %v129 = vld [vmem:[%s1 + $0x18c] sm:$0xf]
  %v130 = vld [vmem:[%s1 + $0x190] sm:$0xf]
  %v131 = vld [vmem:[%s1 + $0x194] sm:$0xf]
  %v132 = vld [vmem:[%s1 + $0x198] sm:$0xf]
  %v133 = vld [vmem:[%s1 + $0x19c] sm:$0xf]
  %v134 = vld [vmem:[%s1 + $0x1a0] sm:$0xf]
  %v135 = vld [vmem:[%s1 + $0x1a4] sm:$0xf]
  %v136 = vld [vmem:[%s1 + $0x1a8] sm:$0xf]
  %v137 = vld [vmem:[%s1 + $0x1ac] sm:$0xf]
  %v138 = vld [vmem:[%s1 + $0x1b0] sm:$0xf]
  %v139 = vld [vmem:[%s1 + $0x1b4] sm:$0xf]
  %v140 = vld [vmem:[%s1 + $0x1b8] sm:$0xf]
  %v141 = vld [vmem:[%s1 + $0x1bc] sm:$0xf]
  %v142 = vld [vmem:[%s2] sm:$0x1]
  %v144 = vperm.slane %v142, 0
  %v162 = vunpack.c.l.b16 %v14
  %v163 = vunpack.c.h.b16 %v14
  %v164 = vunpack.c.l.b16 %v15
  %v165 = vunpack.c.h.b16 %v15
  %v166 = vunpack.c.l.b16 %v16
  %v167 = vunpack.c.h.b16 %v16
  %v168 = vunpack.c.l.b16 %v17
  %v169 = vunpack.c.l.b16 %v18
  %v170 = vunpack.c.h.b16 %v18
  %v171 = vunpack.c.l.b16 %v19
  %v172 = vunpack.c.h.b16 %v19
  %v173 = vunpack.c.l.b16 %v20
  %v174 = vunpack.c.h.b16 %v20
  %v175 = vunpack.c.l.b16 %v21
  %v176 = vunpack.c.l.b16 %v22
  %v177 = vunpack.c.h.b16 %v22
  %v178 = vunpack.c.l.b16 %v23
  %v179 = vunpack.c.h.b16 %v23
  %v180 = vunpack.c.l.b16 %v24
  %v181 = vunpack.c.h.b16 %v24
  %v182 = vunpack.c.l.b16 %v25
  %v183 = vunpack.c.l.b16 %v26
  %v184 = vunpack.c.h.b16 %v26
  %v185 = vunpack.c.l.b16 %v27
  %v186 = vunpack.c.h.b16 %v27
  %v187 = vunpack.c.l.b16 %v28
  %v188 = vunpack.c.h.b16 %v28
  %v189 = vunpack.c.l.b16 %v29
  %v190 = vpack.c.b16 %v169, %v162
  %v191 = vpack.c.b16 %v170, %v163
  %v192 = vpack.c.b16 %v171, %v164
  %v193 = vpack.c.b16 %v172, %v165
  %v194 = vpack.c.b16 %v173, %v166
  %v195 = vpack.c.b16 %v174, %v167
  %v196 = vpack.c.b16 %v175, %v168
  %v197 = vpack.c.b16 %v183, %v176
  %v198 = vpack.c.b16 %v184, %v177
  %v199 = vpack.c.b16 %v185, %v178
  %v200 = vpack.c.b16 %v186, %v179
  %v201 = vpack.c.b16 %v187, %v180
  %v202 = vpack.c.b16 %v188, %v181
  %v203 = vpack.c.b16 %v189, %v182
  %v330 = vunpack.c.l.b16 %v30
  %v331 = vunpack.c.l.b16 %v31
  %v332 = vunpack.c.l.b16 %v32
  %v333 = vunpack.c.l.b16 %v33
  %v334 = vunpack.c.l.b16 %v34
  %v335 = vunpack.c.l.b16 %v35
  %v336 = vunpack.c.l.b16 %v36
  %v337 = vunpack.c.l.b16 %v37
  %v338 = vunpack.c.l.b16 %v38
  %v339 = vunpack.c.l.b16 %v39
  %v340 = vunpack.c.l.b16 %v40
  %v341 = vunpack.c.l.b16 %v41
  %v342 = vunpack.c.l.b16 %v42
  %v343 = vunpack.c.l.b16 %v43
  %v344 = vunpack.c.l.b16 %v44
  %v345 = vunpack.c.l.b16 %v45
  %v346 = vunpack.c.l.b16 %v46
  %v347 = vunpack.c.l.b16 %v47
  %v348 = vunpack.c.l.b16 %v48
  %v349 = vunpack.c.l.b16 %v49
  %v350 = vunpack.c.l.b16 %v50
  %v351 = vunpack.c.l.b16 %v51
  %v352 = vunpack.c.l.b16 %v52
  %v353 = vunpack.c.l.b16 %v53
  %v354 = vunpack.c.l.b16 %v54
  %v355 = vunpack.c.l.b16 %v55
  %v356 = vunpack.c.l.b16 %v56
  %v357 = vunpack.c.l.b16 %v57
  %v358 = vunpack.c.l.b16 %v58
  %v359 = vunpack.c.l.b16 %v59
  %v360 = vunpack.c.l.b16 %v60
  %v361 = vunpack.c.l.b16 %v61
  %v362 = vunpack.c.l.b16 %v62
  %v363 = vunpack.c.l.b16 %v63
  %v364 = vunpack.c.l.b16 %v64
  %v365 = vunpack.c.l.b16 %v65
  %v366 = vunpack.c.l.b16 %v66
  %v367 = vunpack.c.l.b16 %v67
  %v368 = vunpack.c.l.b16 %v68
  %v369 = vunpack.c.l.b16 %v69
  %v370 = vunpack.c.l.b16 %v70
  %v371 = vunpack.c.l.b16 %v71
  %v372 = vunpack.c.l.b16 %v72
  %v373 = vunpack.c.l.b16 %v73
  %v374 = vunpack.c.l.b16 %v74
  %v375 = vunpack.c.l.b16 %v75
  %v376 = vunpack.c.l.b16 %v76
  %v377 = vunpack.c.l.b16 %v77
  %v378 = vunpack.c.l.b16 %v78
  %v379 = vunpack.c.l.b16 %v79
  %v380 = vunpack.c.l.b16 %v80
  %v381 = vunpack.c.l.b16 %v81
  %v382 = vunpack.c.l.b16 %v82
  %v383 = vunpack.c.l.b16 %v83
  %v384 = vunpack.c.l.b16 %v84
  %v385 = vunpack.c.l.b16 %v85
  %v386 = vunpack.c.l.b16 %v86
  %v387 = vunpack.c.l.b16 %v87
  %v388 = vunpack.c.l.b16 %v88
  %v389 = vunpack.c.l.b16 %v89
  %v390 = vunpack.c.l.b16 %v90
  %v391 = vunpack.c.l.b16 %v91
  %v392 = vunpack.c.l.b16 %v92
  %v393 = vunpack.c.l.b16 %v93
  %v394 = vunpack.c.l.b16 %v94
  %v395 = vunpack.c.l.b16 %v95
  %v396 = vunpack.c.l.b16 %v96
  %v397 = vunpack.c.l.b16 %v97
  %v398 = vunpack.c.l.b16 %v98
  %v399 = vunpack.c.l.b16 %v99
  %v400 = vunpack.c.l.b16 %v100
  %v401 = vunpack.c.l.b16 %v101
  %v402 = vunpack.c.l.b16 %v102
  %v403 = vunpack.c.l.b16 %v103
  %v404 = vunpack.c.l.b16 %v104
  %v405 = vunpack.c.l.b16 %v105
  %v406 = vunpack.c.l.b16 %v106
  %v407 = vunpack.c.l.b16 %v107
  %v408 = vunpack.c.l.b16 %v108
  %v409 = vunpack.c.l.b16 %v109
  %v410 = vunpack.c.l.b16 %v110
  %v411 = vunpack.c.l.b16 %v111
  %v412 = vunpack.c.l.b16 %v112
  %v413 = vunpack.c.l.b16 %v113
  %v414 = vunpack.c.l.b16 %v114
  %v415 = vunpack.c.l.b16 %v115
  %v416 = vunpack.c.l.b16 %v116
  %v417 = vunpack.c.l.b16 %v117
  %v418 = vunpack.c.l.b16 %v118
  %v419 = vunpack.c.l.b16 %v119
  %v420 = vunpack.c.l.b16 %v120
  %v421 = vunpack.c.l.b16 %v121
  %v422 = vunpack.c.l.b16 %v122
  %v423 = vunpack.c.l.b16 %v123
  %v424 = vunpack.c.l.b16 %v124
  %v425 = vunpack.c.l.b16 %v125
  %v426 = vunpack.c.l.b16 %v126
  %v427 = vunpack.c.l.b16 %v127
  %v428 = vunpack.c.l.b16 %v128
  %v429 = vunpack.c.l.b16 %v129
  %v430 = vunpack.c.l.b16 %v130
  %v431 = vunpack.c.l.b16 %v131
  %v432 = vunpack.c.l.b16 %v132
  %v433 = vunpack.c.l.b16 %v133
  %v434 = vunpack.c.l.b16 %v134
  %v435 = vunpack.c.l.b16 %v135
  %v436 = vunpack.c.l.b16 %v136
  %v437 = vunpack.c.l.b16 %v137
  %v438 = vunpack.c.l.b16 %v138
  %v439 = vunpack.c.l.b16 %v139
  %v440 = vunpack.c.l.b16 %v140
  %v441 = vunpack.c.l.b16 %v141
  %v442 = vpack.c.b16 %v331, %v330
  %v443 = vpack.c.b16 %v333, %v332
  %v444 = vpack.c.b16 %v335, %v334
  %v445 = vpack.c.b16 %v337, %v336
  %v446 = vpack.c.b16 %v339, %v338
  %v447 = vpack.c.b16 %v341, %v340
  %v448 = vpack.c.b16 %v343, %v342
  %v449 = vpack.c.b16 %v345, %v344
  %v450 = vpack.c.b16 %v347, %v346
  %v451 = vpack.c.b16 %v349, %v348
  %v452 = vpack.c.b16 %v351, %v350
  %v453 = vpack.c.b16 %v353, %v352
  %v454 = vpack.c.b16 %v355, %v354
  %v455 = vpack.c.b16 %v357, %v356
  %v456 = vpack.c.b16 %v359, %v358
  %v457 = vpack.c.b16 %v361, %v360
  %v458 = vpack.c.b16 %v363, %v362
  %v459 = vpack.c.b16 %v365, %v364
  %v460 = vpack.c.b16 %v367, %v366
  %v461 = vpack.c.b16 %v369, %v368
  %v462 = vpack.c.b16 %v371, %v370
  %v463 = vpack.c.b16 %v373, %v372
  %v464 = vpack.c.b16 %v375, %v374
  %v465 = vpack.c.b16 %v377, %v376
  %v466 = vpack.c.b16 %v379, %v378
  %v467 = vpack.c.b16 %v381, %v380
  %v468 = vpack.c.b16 %v383, %v382
  %v469 = vpack.c.b16 %v385, %v384
  %v470 = vpack.c.b16 %v387, %v386
  %v471 = vpack.c.b16 %v389, %v388
  %v472 = vpack.c.b16 %v391, %v390
  %v473 = vpack.c.b16 %v393, %v392
  %v474 = vpack.c.b16 %v395, %v394
  %v475 = vpack.c.b16 %v397, %v396
  %v476 = vpack.c.b16 %v399, %v398
  %v477 = vpack.c.b16 %v401, %v400
  %v478 = vpack.c.b16 %v403, %v402
  %v479 = vpack.c.b16 %v405, %v404
  %v480 = vpack.c.b16 %v407, %v406
  %v481 = vpack.c.b16 %v409, %v408
  %v482 = vpack.c.b16 %v411, %v410
  %v483 = vpack.c.b16 %v413, %v412
  %v484 = vpack.c.b16 %v415, %v414
  %v485 = vpack.c.b16 %v417, %v416
  %v486 = vpack.c.b16 %v419, %v418
  %v487 = vpack.c.b16 %v421, %v420
  %v488 = vpack.c.b16 %v423, %v422
  %v489 = vpack.c.b16 %v425, %v424
  %v490 = vpack.c.b16 %v427, %v426
  %v491 = vpack.c.b16 %v429, %v428
  %v492 = vpack.c.b16 %v431, %v430
  %v493 = vpack.c.b16 %v433, %v432
  %v494 = vpack.c.b16 %v435, %v434
  %v495 = vpack.c.b16 %v437, %v436
  %v496 = vpack.c.b16 %v439, %v438
  %v497 = vpack.c.b16 %v441, %v440
  %554 = vmatpush.bf16.msra.mxu0 %v449
  %555 = vmatpush.bf16.msra.mxu0 %v448
  %556 = vmatpush.bf16.msra.mxu0 %v447
  %557 = vmatpush.bf16.msra.mxu0 %v446
  %558 = vmatpush.bf16.msra.mxu0 %v445
  %559 = vmatpush.bf16.msra.mxu0 %v444
  %560 = vmatpush.bf16.msra.mxu0 %v443
  %561 = vmatpush.bf16.msra.mxu0 %v442
  %562 = vmatmul.bf16.gmra.mxu0 %v190
  %v563 = vpop.f32.mrf.mxu0
  %v564 = vadd.f32 %v144, %v563
  %v565 = vpop.f32.mrf.mxu0
  %v566 = vadd.f32 %v144, %v565
  %567 = vmatmul.bf16.gmra.mxu0 %v197
  %v568 = vpop.f32.mrf.mxu0
  %v569 = vadd.f32 %v144, %v568
  %v570 = vpop.f32.mrf.mxu0
  %v571 = vadd.f32 %v144, %v570
  %572 = vdwg.mxu0
  %573 = vmatpush.bf16.msra.mxu0 %v457
  %574 = vmatpush.bf16.msra.mxu0 %v456
  %575 = vmatpush.bf16.msra.mxu0 %v455
  %576 = vmatpush.bf16.msra.mxu0 %v454
  %577 = vmatpush.bf16.msra.mxu0 %v453
  %578 = vmatpush.bf16.msra.mxu0 %v452
  %579 = vmatpush.bf16.msra.mxu0 %v451
  %580 = vmatpush.bf16.msra.mxu0 %v450
  %581 = vmatmul.bf16.gmra.mxu0 %v191
  %v582 = vpop.f32.mrf.mxu0
  %v583 = vadd.f32 %v564, %v582
  %v584 = vpop.f32.mrf.mxu0
  %v585 = vadd.f32 %v566, %v584
  %586 = vmatmul.bf16.gmra.mxu0 %v198
  %v587 = vpop.f32.mrf.mxu0
  %v588 = vadd.f32 %v569, %v587
  %v589 = vpop.f32.mrf.mxu0
  %v590 = vadd.f32 %v571, %v589
  %591 = vdwg.mxu0
  %592 = vmatpush.bf16.msra.mxu0 %v465
  %593 = vmatpush.bf16.msra.mxu0 %v464
  %594 = vmatpush.bf16.msra.mxu0 %v463
  %595 = vmatpush.bf16.msra.mxu0 %v462
  %596 = vmatpush.bf16.msra.mxu0 %v461
  %597 = vmatpush.bf16.msra.mxu0 %v460
  %598 = vmatpush.bf16.msra.mxu0 %v459
  %599 = vmatpush.bf16.msra.mxu0 %v458
  %600 = vmatmul.bf16.gmra.mxu0 %v192
  %v601 = vpop.f32.mrf.mxu0
  %v602 = vadd.f32 %v583, %v601
  %v603 = vpop.f32.mrf.mxu0
  %v604 = vadd.f32 %v585, %v603
  %605 = vmatmul.bf16.gmra.mxu0 %v199
  %v606 = vpop.f32.mrf.mxu0
  %v607 = vadd.f32 %v588, %v606
  %v608 = vpop.f32.mrf.mxu0
  %v609 = vadd.f32 %v590, %v608
  %610 = vdwg.mxu0
  %611 = vmatpush.bf16.msra.mxu0 %v473
  %612 = vmatpush.bf16.msra.mxu0 %v472
  %613 = vmatpush.bf16.msra.mxu0 %v471
  %614 = vmatpush.bf16.msra.mxu0 %v470
  %615 = vmatpush.bf16.msra.mxu0 %v469
  %616 = vmatpush.bf16.msra.mxu0 %v468
  %617 = vmatpush.bf16.msra.mxu0 %v467
  %618 = vmatpush.bf16.msra.mxu0 %v466
  %619 = vmatmul.bf16.gmra.mxu0 %v193
  %v620 = vpop.f32.mrf.mxu0
  %v621 = vadd.f32 %v602, %v620
  %v622 = vpop.f32.mrf.mxu0
  %v623 = vadd.f32 %v604, %v622
  %624 = vmatmul.bf16.gmra.mxu0 %v200
  %v625 = vpop.f32.mrf.mxu0
  %v626 = vadd.f32 %v607, %v625
  %v627 = vpop.f32.mrf.mxu0
  %v628 = vadd.f32 %v609, %v627
  %629 = vdwg.mxu0
  %630 = vmatpush.bf16.msra.mxu0 %v481
  %631 = vmatpush.bf16.msra.mxu0 %v480
  %632 = vmatpush.bf16.msra.mxu0 %v479
  %633 = vmatpush.bf16.msra.mxu0 %v478
  %634 = vmatpush.bf16.msra.mxu0 %v477
  %635 = vmatpush.bf16.msra.mxu0 %v476
  %636 = vmatpush.bf16.msra.mxu0 %v475
  %637 = vmatpush.bf16.msra.mxu0 %v474
  %638 = vmatmul.bf16.gmra.mxu0 %v194
  %v639 = vpop.f32.mrf.mxu0
  %v640 = vadd.f32 %v621, %v639
  %v641 = vpop.f32.mrf.mxu0
  %v642 = vadd.f32 %v623, %v641
  %643 = vmatmul.bf16.gmra.mxu0 %v201
  %v644 = vpop.f32.mrf.mxu0
  %v645 = vadd.f32 %v626, %v644
  %v646 = vpop.f32.mrf.mxu0
  %v647 = vadd.f32 %v628, %v646
  %648 = vdwg.mxu0
  %649 = vmatpush.bf16.msra.mxu0 %v489
  %650 = vmatpush.bf16.msra.mxu0 %v488
  %651 = vmatpush.bf16.msra.mxu0 %v487
  %652 = vmatpush.bf16.msra.mxu0 %v486
  %653 = vmatpush.bf16.msra.mxu0 %v485
  %654 = vmatpush.bf16.msra.mxu0 %v484
  %655 = vmatpush.bf16.msra.mxu0 %v483
  %656 = vmatpush.bf16.msra.mxu0 %v482
  %657 = vmatmul.bf16.gmra.mxu0 %v195
  %v658 = vpop.f32.mrf.mxu0
  %v659 = vadd.f32 %v640, %v658
  %v660 = vpop.f32.mrf.mxu0
  %v661 = vadd.f32 %v642, %v660
  %662 = vmatmul.bf16.gmra.mxu0 %v202
  %v663 = vpop.f32.mrf.mxu0
  %v664 = vadd.f32 %v645, %v663
  %v665 = vpop.f32.mrf.mxu0
  %v666 = vadd.f32 %v647, %v665
  %667 = vdwg.mxu0
  %668 = vmatpush.bf16.msra.mxu0 %v497
  %669 = vmatpush.bf16.msra.mxu0 %v496
  %670 = vmatpush.bf16.msra.mxu0 %v495
  %671 = vmatpush.bf16.msra.mxu0 %v494
  %672 = vmatpush.bf16.msra.mxu0 %v493
  %673 = vmatpush.bf16.msra.mxu0 %v492
  %674 = vmatpush.bf16.msra.mxu0 %v491
  %675 = vmatpush.bf16.msra.mxu0 %v490
  %676 = vmatmul.bf16.gmra.mxu0 %v196
  %v677 = vpop.f32.mrf.mxu0
  %v678 = vadd.f32 %v659, %v677
  %v679 = vpop.f32.mrf.mxu0
  %v680 = vadd.f32 %v661, %v679
  %681 = vmatmul.bf16.gmra.mxu0 %v203
  %v682 = vpop.f32.mrf.mxu0
  %v683 = vadd.f32 %v664, %v682
  %v684 = vpop.f32.mrf.mxu0
  %v685 = vadd.f32 %v666, %v684
  %686 = vdwg.mxu0
  %v687 = vmax.f32 %v678, 0.0
  %v688 = vmax.f32 %v680, 0.0
  %v689 = vmax.f32 %v683, 0.0
  %v690 = vmax.f32 %v685, 0.0
  %v691 = vpack.c.bf16 %v687, %v687
  %v692 = vpack.c.bf16 %v688, %v688
  %v693 = vpack.c.bf16 %v689, %v689
  %v694 = vpack.c.bf16 %v690, %v690
  %695 = vst [vmem:[%s3] sm:$0xf] %v691
  %696 = vst [vmem:[%s3 + $0x4] sm:$0xf] %v692
  %697 = vst [vmem:[%s3 + $0x8] sm:$0xf] %v693
  %698 = vst [vmem:[%s3 + $0xc] sm:$0xf] %v694
  // Predicated region
  $region14: #{actor_critic_forward.6} parent=0 // pred_check
    _
  $region15: #{actor_critic_forward.6} parent=0 // pred_check_branch
    %700 = sbr.rel (0) target = $region17
  $region16: #{actor_critic_forward.6} parent=0 // pred_region
    _
  $region17: #{actor_critic_forward.6} parent=0 // pred_fallthru
    _
  // Predicated region
  $region18: #{actor_critic_forward.6} parent=0 // pred_check
    _
  $region19: #{actor_critic_forward.6} parent=0 // pred_check_branch
    %702 = sbr.rel (0) target = $region21
  $region20: #{actor_critic_forward.6} parent=0 // pred_region
    _
  $region21: #{actor_critic_forward.6} parent=0 // pred_fallthru
    _

// kernel: actor_critic_forward.7
$region0: #{actor_critic_forward.7}
  #allocation0 [shape = 'u32[]', space=smem, size = 0x4, offset = 0x4, fixed_abs, tag = 'smem constant byte address 0x4 - core index']
  #allocation1 [shape = 'u32[72,128]{1,0:T(1,128)}', space=vmem, size = 0x9000, scoped, tag = 'internal scratch']
  %s0 = inlined_call_operand.vmem [shape: bf16[8,1664], index: 0, kind: input, shape index: {}]
  %s1 = inlined_call_operand.vmem [shape: bf16[1664,256], index: 1, kind: input, shape index: {}]
  %s2 = inlined_call_operand.vmem [shape: f32[1,256], index: 2, kind: input, shape index: {}]
  %s3 = inlined_call_operand.vmem [shape: bf16[256,128], index: 3, kind: input, shape index: {}]
  %s4 = inlined_call_operand.vmem [shape: f32[1,128], index: 4, kind: input, shape index: {}]
  %s5 = inlined_call_operand.vmem [shape: f32[8,128], index: 5, kind: output, shape index: {}]
  %s6 = sld [smem:[#allocation0]]
  $region30: #{actor_critic_forward.7} parent=0
    _
  %s8 = ssub.s32 1, %s6
  %s9 = scalar_select 0, %s8, %s6
  // Predicated region
  $region2: #{actor_critic_forward.7} parent=0 // pred_check
    _
  $region3: #{actor_critic_forward.7} parent=0 // pred_check_branch
    %11 = sbr.rel (0) target = $region5
  $region4: #{actor_critic_forward.7} parent=0 // pred_region
    _
  $region5: #{actor_critic_forward.7} parent=0 // pred_fallthru
    _
  // Predicated region
  $region6: #{actor_critic_forward.7} parent=0 // pred_check
    _
  $region7: #{actor_critic_forward.7} parent=0 // pred_check_branch
    %13 = sbr.rel (0) target = $region9
  $region8: #{actor_critic_forward.7} parent=0 // pred_region
    _
  $region9: #{actor_critic_forward.7} parent=0 // pred_fallthru
    _
  // Predicated region
  $region10: #{actor_critic_forward.7} parent=0 // pred_check
    _
  $region11: #{actor_critic_forward.7} parent=0 // pred_check_branch
    %15 = sbr.rel (0) target = $region13
  $region12: #{actor_critic_forward.7} parent=0 // pred_region
    _
  $region13: #{actor_critic_forward.7} parent=0 // pred_fallthru
    _
  // Predicated region
  $region14: #{actor_critic_forward.7} parent=0 // pred_check
    _
  $region15: #{actor_critic_forward.7} parent=0 // pred_check_branch
    %17 = sbr.rel (0) target = $region17
  $region16: #{actor_critic_forward.7} parent=0 // pred_region
    _
  $region17: #{actor_critic_forward.7} parent=0 // pred_fallthru
    _
  // Predicated region
  $region18: #{actor_critic_forward.7} parent=0 // pred_check
    _
  $region19: #{actor_critic_forward.7} parent=0 // pred_check_branch
    %19 = sbr.rel (0) target = $region21
  $region20: #{actor_critic_forward.7} parent=0 // pred_region
    _
  $region21: #{actor_critic_forward.7} parent=0 // pred_fallthru
    _
  %v20 = vld [vmem:[%s0] sm:$0xff]
  %v21 = vld [vmem:[%s0 + $0x8] sm:$0xff]
  %v22 = vld [vmem:[%s0 + $0x10] sm:$0xff]
  %v23 = vld [vmem:[%s0 + $0x18] sm:$0xff]
  %v24 = vld [vmem:[%s0 + $0x20] sm:$0xff]
  %v25 = vld [vmem:[%s0 + $0x28] sm:$0xff]
  %v26 = vld [vmem:[%s0 + $0x30] sm:$0xf]
  %v27 = vld [vmem:[%s1] sm:$0xff]
  %v28 = vld [vmem:[%s1 + $0x8] sm:$0xff]
  %v29 = vld [vmem:[%s1 + $0x10] sm:$0xff]
  %v30 = vld [vmem:[%s1 + $0x18] sm:$0xff]
  %v31 = vld [vmem:[%s1 + $0x20] sm:$0xff]
  %v32 = vld [vmem:[%s1 + $0x28] sm:$0xff]
  %v33 = vld [vmem:[%s1 + $0x30] sm:$0xff]
  %v34 = vld [vmem:[%s1 + $0x38] sm:$0xff]
  %v35 = vld [vmem:[%s1 + $0x40] sm:$0xff]
  %v36 = vld [vmem:[%s1 + $0x48] sm:$0xff]
  %v37 = vld [vmem:[%s1 + $0x50] sm:$0xff]
  %v38 = vld [vmem:[%s1 + $0x58] sm:$0xff]
  %v39 = vld [vmem:[%s1 + $0x60] sm:$0xff]
  %v40 = vld [vmem:[%s1 + $0x68] sm:$0xff]
  %v41 = vld [vmem:[%s1 + $0x70] sm:$0xff]
  %v42 = vld [vmem:[%s1 + $0x78] sm:$0xff]
  %v43 = vld [vmem:[%s1 + $0x80] sm:$0xff]
  %v44 = vld [vmem:[%s1 + $0x88] sm:$0xff]
  %v45 = vld [vmem:[%s1 + $0x90] sm:$0xff]
  %v46 = vld [vmem:[%s1 + $0x98] sm:$0xff]
  %v47 = vld [vmem:[%s1 + $0xa0] sm:$0xff]
  %v48 = vld [vmem:[%s1 + $0xa8] sm:$0xff]
  %v49 = vld [vmem:[%s1 + $0xb0] sm:$0xff]
  %v50 = vld [vmem:[%s1 + $0xb8] sm:$0xff]
  %v51 = vld [vmem:[%s1 + $0xc0] sm:$0xff]
  %v52 = vld [vmem:[%s1 + $0xc8] sm:$0xff]
  %v53 = vld [vmem:[%s1 + $0xd0] sm:$0xff]
  %v54 = vld [vmem:[%s1 + $0xd8] sm:$0xff]
  %v55 = vld [vmem:[%s1 + $0xe0] sm:$0xff]
  %v56 = vld [vmem:[%s1 + $0xe8] sm:$0xff]
  %v57 = vld [vmem:[%s1 + $0xf0] sm:$0xff]
  %v58 = vld [vmem:[%s1 + $0xf8] sm:$0xff]
  %v59 = vld [vmem:[%s1 + $0x100] sm:$0xff]
  %v60 = vld [vmem:[%s1 + $0x108] sm:$0xff]
  %v61 = vld [vmem:[%s1 + $0x110] sm:$0xff]
  %v62 = vld [vmem:[%s1 + $0x118] sm:$0xff]
  %v63 = vld [vmem:[%s1 + $0x120] sm:$0xff]
  %v64 = vld [vmem:[%s1 + $0x128] sm:$0xff]
  %v65 = vld [vmem:[%s1 + $0x130] sm:$0xff]
  %v66 = vld [vmem:[%s1 + $0x138] sm:$0xff]
  %v67 = vld [vmem:[%s1 + $0x140] sm:$0xff]
  %v68 = vld [vmem:[%s1 + $0x148] sm:$0xff]
  %v69 = vld [vmem:[%s1 + $0x150] sm:$0xff]
  %v70 = vld [vmem:[%s1 + $0x158] sm:$0xff]
  %v71 = vld [vmem:[%s1 + $0x160] sm:$0xff]
  %v72 = vld [vmem:[%s1 + $0x168] sm:$0xff]
  %v73 = vld [vmem:[%s1 + $0x170] sm:$0xff]
  %v74 = vld [vmem:[%s1 + $0x178] sm:$0xff]
  %v75 = vld [vmem:[%s1 + $0x180] sm:$0xff]
  %v76 = vld [vmem:[%s1 + $0x188] sm:$0xff]
  %v77 = vld [vmem:[%s1 + $0x190] sm:$0xff]
  %v78 = vld [vmem:[%s1 + $0x198] sm:$0xff]
  %v79 = vld [vmem:[%s1 + $0x1a0] sm:$0xff]
  %v80 = vld [vmem:[%s1 + $0x1a8] sm:$0xff]
  %v81 = vld [vmem:[%s1 + $0x1b0] sm:$0xff]
  %v82 = vld [vmem:[%s1 + $0x1b8] sm:$0xff]
  %v83 = vld [vmem:[%s1 + $0x1c0] sm:$0xff]
  %v84 = vld [vmem:[%s1 + $0x1c8] sm:$0xff]
  %v85 = vld [vmem:[%s1 + $0x1d0] sm:$0xff]
  %v86 = vld [vmem:[%s1 + $0x1d8] sm:$0xff]
  %v87 = vld [vmem:[%s1 + $0x1e0] sm:$0xff]
  %v88 = vld [vmem:[%s1 + $0x1e8] sm:$0xff]
  %v89 = vld [vmem:[%s1 + $0x1f0] sm:$0xff]
  %v90 = vld [vmem:[%s1 + $0x1f8] sm:$0xff]
  %v91 = vld [vmem:[%s1 + $0x200] sm:$0xff]
  %v92 = vld [vmem:[%s1 + $0x208] sm:$0xff]
  %v93 = vld [vmem:[%s1 + $0x210] sm:$0xff]
  %v94 = vld [vmem:[%s1 + $0x218] sm:$0xff]
  %v95 = vld [vmem:[%s1 + $0x220] sm:$0xff]
  %v96 = vld [vmem:[%s1 + $0x228] sm:$0xff]
  %v97 = vld [vmem:[%s1 + $0x230] sm:$0xff]
  %v98 = vld [vmem:[%s1 + $0x238] sm:$0xff]
  %v99 = vld [vmem:[%s1 + $0x240] sm:$0xff]
  %v100 = vld [vmem:[%s1 + $0x248] sm:$0xff]
  %v101 = vld [vmem:[%s1 + $0x250] sm:$0xff]
  %v102 = vld [vmem:[%s1 + $0x258] sm:$0xff]
  %v103 = vld [vmem:[%s1 + $0x260] sm:$0xff]
  %v104 = vld [vmem:[%s1 + $0x268] sm:$0xff]
  %v105 = vld [vmem:[%s1 + $0x270] sm:$0xff]
  %v106 = vld [vmem:[%s1 + $0x278] sm:$0xff]
  %v107 = vld [vmem:[%s1 + $0x280] sm:$0xff]
  %v108 = vld [vmem:[%s1 + $0x288] sm:$0xff]
  %v109 = vld [vmem:[%s1 + $0x290] sm:$0xff]
  %v110 = vld [vmem:[%s1 + $0x298] sm:$0xff]
  %v111 = vld [vmem:[%s1 + $0x2a0] sm:$0xff]
  %v112 = vld [vmem:[%s1 + $0x2a8] sm:$0xff]
  %v113 = vld [vmem:[%s1 + $0x2b0] sm:$0xff]
  %v114 = vld [vmem:[%s1 + $0x2b8] sm:$0xff]
  %v115 = vld [vmem:[%s1 + $0x2c0] sm:$0xff]
  %v116 = vld [vmem:[%s1 + $0x2c8] sm:$0xff]
  %v117 = vld [vmem:[%s1 + $0x2d0] sm:$0xff]
  %v118 = vld [vmem:[%s1 + $0x2d8] sm:$0xff]
  %v119 = vld [vmem:[%s1 + $0x2e0] sm:$0xff]
  %v120 = vld [vmem:[%s1 + $0x2e8] sm:$0xff]
  %v121 = vld [vmem:[%s1 + $0x2f0] sm:$0xff]
  %v122 = vld [vmem:[%s1 + $0x2f8] sm:$0xff]
  %v123 = vld [vmem:[%s1 + $0x300] sm:$0xff]
  %v124 = vld [vmem:[%s1 + $0x308] sm:$0xff]
  %v125 = vld [vmem:[%s1 + $0x310] sm:$0xff]
  %v126 = vld [vmem:[%s1 + $0x318] sm:$0xff]
  %v127 = vld [vmem:[%s1 + $0x320] sm:$0xff]
  %v128 = vld [vmem:[%s1 + $0x328] sm:$0xff]
  %v129 = vld [vmem:[%s1 + $0x330] sm:$0xff]
  %v130 = vld [vmem:[%s1 + $0x338] sm:$0xff]
  %v131 = vld [vmem:[%s1 + $0x340] sm:$0xff]
  %v132 = vld [vmem:[%s1 + $0x348] sm:$0xff]
  %v133 = vld [vmem:[%s1 + $0x350] sm:$0xff]
  %v134 = vld [vmem:[%s1 + $0x358] sm:$0xff]
  %v135 = vld [vmem:[%s1 + $0x360] sm:$0xff]
  %v136 = vld [vmem:[%s1 + $0x368] sm:$0xff]
  %v137 = vld [vmem:[%s1 + $0x370] sm:$0xff]
  %v138 = vld [vmem:[%s1 + $0x378] sm:$0xff]
  %v139 = vld [vmem:[%s1 + $0x380] sm:$0xff]
  %v140 = vld [vmem:[%s1 + $0x388] sm:$0xff]
  %v141 = vld [vmem:[%s1 + $0x390] sm:$0xff]
  %v142 = vld [vmem:[%s1 + $0x398] sm:$0xff]
  %v143 = vld [vmem:[%s1 + $0x3a0] sm:$0xff]
  %v144 = vld [vmem:[%s1 + $0x3a8] sm:$0xff]
  %v145 = vld [vmem:[%s1 + $0x3b0] sm:$0xff]
  %v146 = vld [vmem:[%s1 + $0x3b8] sm:$0xff]
  %v147 = vld [vmem:[%s1 + $0x3c0] sm:$0xff]
  %v148 = vld [vmem:[%s1 + $0x3c8] sm:$0xff]
  %v149 = vld [vmem:[%s1 + $0x3d0] sm:$0xff]
  %v150 = vld [vmem:[%s1 + $0x3d8] sm:$0xff]
  %v151 = vld [vmem:[%s1 + $0x3e0] sm:$0xff]
  %v152 = vld [vmem:[%s1 + $0x3e8] sm:$0xff]
  %v153 = vld [vmem:[%s1 + $0x3f0] sm:$0xff]
  %v154 = vld [vmem:[%s1 + $0x3f8] sm:$0xff]
  %v155 = vld [vmem:[%s1 + $0x400] sm:$0xff]
  %v156 = vld [vmem:[%s1 + $0x408] sm:$0xff]
  %v157 = vld [vmem:[%s1 + $0x410] sm:$0xff]
  %v158 = vld [vmem:[%s1 + $0x418] sm:$0xff]
  %v159 = vld [vmem:[%s1 + $0x420] sm:$0xff]
  %v160 = vld [vmem:[%s1 + $0x428] sm:$0xff]
  %v161 = vld [vmem:[%s1 + $0x430] sm:$0xff]
  %v162 = vld [vmem:[%s1 + $0x438] sm:$0xff]
  %v163 = vld [vmem:[%s1 + $0x440] sm:$0xff]
  %v164 = vld [vmem:[%s1 + $0x448] sm:$0xff]
  %v165 = vld [vmem:[%s1 + $0x450] sm:$0xff]
  %v166 = vld [vmem:[%s1 + $0x458] sm:$0xff]
  %v167 = vld [vmem:[%s1 + $0x460] sm:$0xff]
  %v168 = vld [vmem:[%s1 + $0x468] sm:$0xff]
  %v169 = vld [vmem:[%s1 + $0x470] sm:$0xff]
  %v170 = vld [vmem:[%s1 + $0x478] sm:$0xff]
  %v171 = vld [vmem:[%s1 + $0x480] sm:$0xff]
  %v172 = vld [vmem:[%s1 + $0x488] sm:$0xff]
  %v173 = vld [vmem:[%s1 + $0x490] sm:$0xff]
  %v174 = vld [vmem:[%s1 + $0x498] sm:$0xff]
  %v175 = vld [vmem:[%s1 + $0x4a0] sm:$0xff]
  %v176 = vld [vmem:[%s1 + $0x4a8] sm:$0xff]
  %v177 = vld [vmem:[%s1 + $0x4b0] sm:$0xff]
  %v178 = vld [vmem:[%s1 + $0x4b8] sm:$0xff]
  %v179 = vld [vmem:[%s1 + $0x4c0] sm:$0xff]
  %v180 = vld [vmem:[%s1 + $0x4c8] sm:$0xff]
  %v181 = vld [vmem:[%s1 + $0x4d0] sm:$0xff]
  %v182 = vld [vmem:[%s1 + $0x4d8] sm:$0xff]
  %v183 = vld [vmem:[%s1 + $0x4e0] sm:$0xff]
  %v184 = vld [vmem:[%s1 + $0x4e8] sm:$0xff]
  %v185 = vld [vmem:[%s1 + $0x4f0] sm:$0xff]
  %v186 = vld [vmem:[%s1 + $0x4f8] sm:$0xff]
  %v187 = vld [vmem:[%s1 + $0x500] sm:$0xff]
  %v188 = vld [vmem:[%s1 + $0x508] sm:$0xff]
  %v189 = vld [vmem:[%s1 + $0x510] sm:$0xff]
  %v190 = vld [vmem:[%s1 + $0x518] sm:$0xff]
  %v191 = vld [vmem:[%s1 + $0x520] sm:$0xff]
  %v192 = vld [vmem:[%s1 + $0x528] sm:$0xff]
  %v193 = vld [vmem:[%s1 + $0x530] sm:$0xff]
  %v194 = vld [vmem:[%s1 + $0x538] sm:$0xff]
  %v195 = vld [vmem:[%s1 + $0x540] sm:$0xff]
  %v196 = vld [vmem:[%s1 + $0x548] sm:$0xff]
  %v197 = vld [vmem:[%s1 + $0x550] sm:$0xff]
  %v198 = vld [vmem:[%s1 + $0x558] sm:$0xff]
  %v199 = vld [vmem:[%s1 + $0x560] sm:$0xff]
  %v200 = vld [vmem:[%s1 + $0x568] sm:$0xff]
  %v201 = vld [vmem:[%s1 + $0x570] sm:$0xff]
  %v202 = vld [vmem:[%s1 + $0x578] sm:$0xff]
  %v203 = vld [vmem:[%s1 + $0x580] sm:$0xff]
  %v204 = vld [vmem:[%s1 + $0x588] sm:$0xff]
  %v205 = vld [vmem:[%s1 + $0x590] sm:$0xff]
  %v206 = vld [vmem:[%s1 + $0x598] sm:$0xff]
  %v207 = vld [vmem:[%s1 + $0x5a0] sm:$0xff]
  %v208 = vld [vmem:[%s1 + $0x5a8] sm:$0xff]
  %v209 = vld [vmem:[%s1 + $0x5b0] sm:$0xff]
  %v210 = vld [vmem:[%s1 + $0x5b8] sm:$0xff]
  %v211 = vld [vmem:[%s1 + $0x5c0] sm:$0xff]
  %v212 = vld [vmem:[%s1 + $0x5c8] sm:$0xff]
  %v213 = vld [vmem:[%s1 + $0x5d0] sm:$0xff]
  %v214 = vld [vmem:[%s1 + $0x5d8] sm:$0xff]
  %v215 = vld [vmem:[%s1 + $0x5e0] sm:$0xff]
  %v216 = vld [vmem:[%s1 + $0x5e8] sm:$0xff]
  %v217 = vld [vmem:[%s1 + $0x5f0] sm:$0xff]
  %v218 = vld [vmem:[%s1 + $0x5f8] sm:$0xff]
  %v219 = vld [vmem:[%s1 + $0x600] sm:$0xff]
  %v220 = vld [vmem:[%s1 + $0x608] sm:$0xff]
  %v221 = vld [vmem:[%s1 + $0x610] sm:$0xff]
  %v222 = vld [vmem:[%s1 + $0x618] sm:$0xff]
  %v223 = vld [vmem:[%s1 + $0x620] sm:$0xff]
  %v224 = vld [vmem:[%s1 + $0x628] sm:$0xff]
  %v225 = vld [vmem:[%s1 + $0x630] sm:$0xff]
  %v226 = vld [vmem:[%s1 + $0x638] sm:$0xff]
  %v227 = vld [vmem:[%s1 + $0x640] sm:$0xff]
  %v228 = vld [vmem:[%s1 + $0x648] sm:$0xff]
  %v229 = vld [vmem:[%s1 + $0x650] sm:$0xff]
  %v230 = vld [vmem:[%s1 + $0x658] sm:$0xff]
  %v231 = vld [vmem:[%s1 + $0x660] sm:$0xff]
  %v232 = vld [vmem:[%s1 + $0x668] sm:$0xff]
  %v233 = vld [vmem:[%s1 + $0x670] sm:$0xff]
  %v234 = vld [vmem:[%s1 + $0x678] sm:$0xff]
  %v235 = vld [vmem:[%s2] sm:$0x3]
  %v237 = vperm.slane %v235, 0
  %v238 = vperm.slane %v235, 1
  %v248 = vunpack.c.l.b16 %v20
  %v249 = vunpack.c.h.b16 %v20
  %v250 = vunpack.c.l.b16 %v21
  %v251 = vunpack.c.h.b16 %v21
  %v252 = vunpack.c.l.b16 %v22
  %v253 = vunpack.c.h.b16 %v22
  %v254 = vunpack.c.l.b16 %v23
  %v255 = vunpack.c.h.b16 %v23
  %v256 = vunpack.c.l.b16 %v24
  %v257 = vunpack.c.h.b16 %v24
  %v258 = vunpack.c.l.b16 %v25
  %v259 = vunpack.c.h.b16 %v25
  %v260 = vunpack.c.l.b16 %v26
  %v261 = vpack.c.b16 %v248, %v248
  %v262 = vpack.c.b16 %v249, %v249
  %v263 = vpack.c.b16 %v250, %v250
  %v264 = vpack.c.b16 %v251, %v251
  %v265 = vpack.c.b16 %v252, %v252
  %v266 = vpack.c.b16 %v253, %v253
  %v267 = vpack.c.b16 %v254, %v254
  %v268 = vpack.c.b16 %v255, %v255
  %v269 = vpack.c.b16 %v256, %v256
  %v270 = vpack.c.b16 %v257, %v257
  %v271 = vpack.c.b16 %v258, %v258
  %v272 = vpack.c.b16 %v259, %v259
  %v273 = vpack.c.b16 %v260, %v260
  %v495 = vunpack.c.l.b16 %v27
  %v496 = vunpack.c.h.b16 %v27
  %v497 = vunpack.c.l.b16 %v28
  %v498 = vunpack.c.h.b16 %v28
  %v499 = vunpack.c.l.b16 %v29
  %v500 = vunpack.c.h.b16 %v29
  %v501 = vunpack.c.l.b16 %v30
  %v502 = vunpack.c.h.b16 %v30
  %v503 = vunpack.c.l.b16 %v31
  %v504 = vunpack.c.h.b16 %v31
  %v505 = vunpack.c.l.b16 %v32
  %v506 = vunpack.c.h.b16 %v32
  %v507 = vunpack.c.l.b16 %v33
  %v508 = vunpack.c.h.b16 %v33
  %v509 = vunpack.c.l.b16 %v34
  %v510 = vunpack.c.h.b16 %v34
  %v511 = vunpack.c.l.b16 %v35
  %v512 = vunpack.c.h.b16 %v35
  %v513 = vunpack.c.l.b16 %v36
  %v514 = vunpack.c.h.b16 %v36
  %v515 = vunpack.c.l.b16 %v37
  %v516 = vunpack.c.h.b16 %v37
  %v517 = vunpack.c.l.b16 %v38
  %v518 = vunpack.c.h.b16 %v38
  %v519 = vunpack.c.l.b16 %v39
  %v520 = vunpack.c.h.b16 %v39
  %v521 = vunpack.c.l.b16 %v40
  %v522 = vunpack.c.h.b16 %v40
  %v523 = vunpack.c.l.b16 %v41
  %v524 = vunpack.c.h.b16 %v41
  %v525 = vunpack.c.l.b16 %v42
  %v526 = vunpack.c.h.b16 %v42
  %v527 = vunpack.c.l.b16 %v43
  %v528 = vunpack.c.h.b16 %v43
  %v529 = vunpack.c.l.b16 %v44
  %v530 = vunpack.c.h.b16 %v44
  %v531 = vunpack.c.l.b16 %v45
  %v532 = vunpack.c.h.b16 %v45
  %v533 = vunpack.c.l.b16 %v46
  %v534 = vunpack.c.h.b16 %v46
  %v535 = vunpack.c.l.b16 %v47
  %v536 = vunpack.c.h.b16 %v47
  %v537 = vunpack.c.l.b16 %v48
  %v538 = vunpack.c.h.b16 %v48
  %v539 = vunpack.c.l.b16 %v49
  %v540 = vunpack.c.h.b16 %v49
  %v541 = vunpack.c.l.b16 %v50
  %v542 = vunpack.c.h.b16 %v50
  %v543 = vunpack.c.l.b16 %v51
  %v544 = vunpack.c.h.b16 %v51
  %v545 = vunpack.c.l.b16 %v52
  %v546 = vunpack.c.h.b16 %v52
  %v547 = vunpack.c.l.b16 %v53
  %v548 = vunpack.c.h.b16 %v53
  %v549 = vunpack.c.l.b16 %v54
  %v550 = vunpack.c.h.b16 %v54
  %v551 = vunpack.c.l.b16 %v55
  %v552 = vunpack.c.h.b16 %v55
  %v553 = vunpack.c.l.b16 %v56
  %v554 = vunpack.c.h.b16 %v56
  %v555 = vunpack.c.l.b16 %v57
  %v556 = vunpack.c.h.b16 %v57
  %v557 = vunpack.c.l.b16 %v58
  %v558 = vunpack.c.h.b16 %v58
  %v559 = vunpack.c.l.b16 %v59
  %v560 = vunpack.c.h.b16 %v59
  %v561 = vunpack.c.l.b16 %v60
  %v562 = vunpack.c.h.b16 %v60
  %v563 = vunpack.c.l.b16 %v61
  %v564 = vunpack.c.h.b16 %v61
  %v565 = vunpack.c.l.b16 %v62
  %v566 = vunpack.c.h.b16 %v62
  %v567 = vunpack.c.l.b16 %v63
  %v568 = vunpack.c.h.b16 %v63
  %v569 = vunpack.c.l.b16 %v64
  %v570 = vunpack.c.h.b16 %v64
  %v571 = vunpack.c.l.b16 %v65
  %v572 = vunpack.c.h.b16 %v65
  %v573 = vunpack.c.l.b16 %v66
  %v574 = vunpack.c.h.b16 %v66
  %v575 = vunpack.c.l.b16 %v67
  %v576 = vunpack.c.h.b16 %v67
  %v577 = vunpack.c.l.b16 %v68
  %v578 = vunpack.c.h.b16 %v68
  %v579 = vunpack.c.l.b16 %v69
  %v580 = vunpack.c.h.b16 %v69
  %v581 = vunpack.c.l.b16 %v70
  %v582 = vunpack.c.h.b16 %v70
  %v583 = vunpack.c.l.b16 %v71
  %v584 = vunpack.c.h.b16 %v71
  %v585 = vunpack.c.l.b16 %v72
  %v586 = vunpack.c.h.b16 %v72
  %v587 = vunpack.c.l.b16 %v73
  %v588 = vunpack.c.h.b16 %v73
  %v589 = vunpack.c.l.b16 %v74
  %v590 = vunpack.c.h.b16 %v74
  %v591 = vunpack.c.l.b16 %v75
  %v592 = vunpack.c.h.b16 %v75
  %v593 = vunpack.c.l.b16 %v76
  %v594 = vunpack.c.h.b16 %v76
  %v595 = vunpack.c.l.b16 %v77
  %v596 = vunpack.c.h.b16 %v77
  %v597 = vunpack.c.l.b16 %v78
  %v598 = vunpack.c.h.b16 %v78
  %v599 = vunpack.c.l.b16 %v79
  %v600 = vunpack.c.h.b16 %v79
  %v601 = vunpack.c.l.b16 %v80
  %v602 = vunpack.c.h.b16 %v80
  %v603 = vunpack.c.l.b16 %v81
  %v604 = vunpack.c.h.b16 %v81
  %v605 = vunpack.c.l.b16 %v82
  %v606 = vunpack.c.h.b16 %v82
  %v607 = vunpack.c.l.b16 %v83
  %v608 = vunpack.c.h.b16 %v83
  %v609 = vunpack.c.l.b16 %v84
  %v610 = vunpack.c.h.b16 %v84
  %v611 = vunpack.c.l.b16 %v85
  %v612 = vunpack.c.h.b16 %v85
  %v613 = vunpack.c.l.b16 %v86
  %v614 = vunpack.c.h.b16 %v86
  %v615 = vunpack.c.l.b16 %v87
  %v616 = vunpack.c.h.b16 %v87
  %v617 = vunpack.c.l.b16 %v88
  %v618 = vunpack.c.h.b16 %v88
  %v619 = vunpack.c.l.b16 %v89
  %v620 = vunpack.c.h.b16 %v89
  %v621 = vunpack.c.l.b16 %v90
  %v622 = vunpack.c.h.b16 %v90
  %v623 = vunpack.c.l.b16 %v91
  %v624 = vunpack.c.h.b16 %v91
  %v625 = vunpack.c.l.b16 %v92
  %v626 = vunpack.c.h.b16 %v92
  %v627 = vunpack.c.l.b16 %v93
  %v628 = vunpack.c.h.b16 %v93
  %v629 = vunpack.c.l.b16 %v94
  %v630 = vunpack.c.h.b16 %v94
  %v631 = vunpack.c.l.b16 %v95
  %v632 = vunpack.c.h.b16 %v95
  %v633 = vunpack.c.l.b16 %v96
  %v634 = vunpack.c.h.b16 %v96
  %v635 = vunpack.c.l.b16 %v97
  %v636 = vunpack.c.h.b16 %v97
  %v637 = vunpack.c.l.b16 %v98
  %v638 = vunpack.c.h.b16 %v98
  %v639 = vunpack.c.l.b16 %v99
  %v640 = vunpack.c.h.b16 %v99
  %v641 = vunpack.c.l.b16 %v100
  %v642 = vunpack.c.h.b16 %v100
  %v643 = vunpack.c.l.b16 %v101
  %v644 = vunpack.c.h.b16 %v101
  %v645 = vunpack.c.l.b16 %v102
  %v646 = vunpack.c.h.b16 %v102
  %v647 = vunpack.c.l.b16 %v103
  %v648 = vunpack.c.h.b16 %v103
  %v649 = vunpack.c.l.b16 %v104
  %v650 = vunpack.c.h.b16 %v104
  %v651 = vunpack.c.l.b16 %v105
  %v652 = vunpack.c.h.b16 %v105
  %v653 = vunpack.c.l.b16 %v106
  %v654 = vunpack.c.h.b16 %v106
  %v655 = vunpack.c.l.b16 %v107
  %v656 = vunpack.c.h.b16 %v107
  %v657 = vunpack.c.l.b16 %v108
  %v658 = vunpack.c.h.b16 %v108
  %v659 = vunpack.c.l.b16 %v109
  %v660 = vunpack.c.h.b16 %v109
  %v661 = vunpack.c.l.b16 %v110
  %v662 = vunpack.c.h.b16 %v110
  %v663 = vunpack.c.l.b16 %v111
  %v664 = vunpack.c.h.b16 %v111
  %v665 = vunpack.c.l.b16 %v112
  %v666 = vunpack.c.h.b16 %v112
  %v667 = vunpack.c.l.b16 %v113
  %v668 = vunpack.c.h.b16 %v113
  %v669 = vunpack.c.l.b16 %v114
  %v670 = vunpack.c.h.b16 %v114
  %v671 = vunpack.c.l.b16 %v115
  %v672 = vunpack.c.h.b16 %v115
  %v673 = vunpack.c.l.b16 %v116
  %v674 = vunpack.c.h.b16 %v116
  %v675 = vunpack.c.l.b16 %v117
  %v676 = vunpack.c.h.b16 %v117
  %v677 = vunpack.c.l.b16 %v118
  %v678 = vunpack.c.h.b16 %v118
  %v679 = vunpack.c.l.b16 %v119
  %v680 = vunpack.c.h.b16 %v119
  %v681 = vunpack.c.l.b16 %v120
  %v682 = vunpack.c.h.b16 %v120
  %v683 = vunpack.c.l.b16 %v121
  %v684 = vunpack.c.h.b16 %v121
  %v685 = vunpack.c.l.b16 %v122
  %v686 = vunpack.c.h.b16 %v122
  %v687 = vunpack.c.l.b16 %v123
  %v688 = vunpack.c.h.b16 %v123
  %v689 = vunpack.c.l.b16 %v124
  %v690 = vunpack.c.h.b16 %v124
  %v691 = vunpack.c.l.b16 %v125
  %v692 = vunpack.c.h.b16 %v125
  %v693 = vunpack.c.l.b16 %v126
  %v694 = vunpack.c.h.b16 %v126
  %v695 = vunpack.c.l.b16 %v127
  %v696 = vunpack.c.h.b16 %v127
  %v697 = vunpack.c.l.b16 %v128
  %v698 = vunpack.c.h.b16 %v128
  %v699 = vunpack.c.l.b16 %v129
  %v700 = vunpack.c.h.b16 %v129
  %v701 = vunpack.c.l.b16 %v130
  %v702 = vunpack.c.h.b16 %v130
  %v703 = vunpack.c.l.b16 %v131
  %v704 = vunpack.c.h.b16 %v131
  %v705 = vunpack.c.l.b16 %v132
  %v706 = vunpack.c.h.b16 %v132
  %v707 = vunpack.c.l.b16 %v133
  %v708 = vunpack.c.h.b16 %v133
  %v709 = vunpack.c.l.b16 %v134
  %v710 = vunpack.c.h.b16 %v134
  %v711 = vunpack.c.l.b16 %v135
  %v712 = vunpack.c.h.b16 %v135
  %v713 = vunpack.c.l.b16 %v136
  %v714 = vunpack.c.h.b16 %v136
  %v715 = vunpack.c.l.b16 %v137
  %v716 = vunpack.c.h.b16 %v137
  %v717 = vunpack.c.l.b16 %v138
  %v718 = vunpack.c.h.b16 %v138
  %v719 = vunpack.c.l.b16 %v139
  %v720 = vunpack.c.h.b16 %v139
  %v721 = vunpack.c.l.b16 %v140
  %v722 = vunpack.c.h.b16 %v140
  %v723 = vunpack.c.l.b16 %v141
  %v724 = vunpack.c.h.b16 %v141
  %v725 = vunpack.c.l.b16 %v142
  %v726 = vunpack.c.h.b16 %v142
  %v727 = vunpack.c.l.b16 %v143
  %v728 = vunpack.c.h.b16 %v143
  %v729 = vunpack.c.l.b16 %v144
  %v730 = vunpack.c.h.b16 %v144
  %v731 = vunpack.c.l.b16 %v145
  %v732 = vunpack.c.h.b16 %v145
  %v733 = vunpack.c.l.b16 %v146
  %v734 = vunpack.c.h.b16 %v146
  %v735 = vunpack.c.l.b16 %v147
  %v736 = vunpack.c.h.b16 %v147
  %v737 = vunpack.c.l.b16 %v148
  %v738 = vunpack.c.h.b16 %v148
  %v739 = vunpack.c.l.b16 %v149
  %v740 = vunpack.c.h.b16 %v149
  %v741 = vunpack.c.l.b16 %v150
  %v742 = vunpack.c.h.b16 %v150
  %v743 = vunpack.c.l.b16 %v151
  %v744 = vunpack.c.h.b16 %v151
  %v745 = vunpack.c.l.b16 %v152
  %v746 = vunpack.c.h.b16 %v152
  %v747 = vunpack.c.l.b16 %v153
  %v748 = vunpack.c.h.b16 %v153
  %v749 = vunpack.c.l.b16 %v154
  %v750 = vunpack.c.h.b16 %v154
  %v751 = vunpack.c.l.b16 %v155
  %v752 = vunpack.c.h.b16 %v155
  %v753 = vunpack.c.l.b16 %v156
  %v754 = vunpack.c.h.b16 %v156
  %v755 = vunpack.c.l.b16 %v157
  %v756 = vunpack.c.h.b16 %v157
  %v757 = vunpack.c.l.b16 %v158
  %v758 = vunpack.c.h.b16 %v158
  %v759 = vunpack.c.l.b16 %v159
  %v760 = vunpack.c.h.b16 %v159
  %v761 = vunpack.c.l.b16 %v160
  %v762 = vunpack.c.h.b16 %v160
  %v763 = vunpack.c.l.b16 %v161
  %v764 = vunpack.c.h.b16 %v161
  %v765 = vunpack.c.l.b16 %v162
  %v766 = vunpack.c.h.b16 %v162
  %v767 = vunpack.c.l.b16 %v163
  %v768 = vunpack.c.h.b16 %v163
  %v769 = vunpack.c.l.b16 %v164
  %v770 = vunpack.c.h.b16 %v164
  %v771 = vunpack.c.l.b16 %v165
  %v772 = vunpack.c.h.b16 %v165
  %v773 = vunpack.c.l.b16 %v166
  %v774 = vunpack.c.h.b16 %v166
  %v775 = vunpack.c.l.b16 %v167
  %v776 = vunpack.c.h.b16 %v167
  %v777 = vunpack.c.l.b16 %v168
  %v778 = vunpack.c.h.b16 %v168
  %v779 = vunpack.c.l.b16 %v169
  %v780 = vunpack.c.h.b16 %v169
  %v781 = vunpack.c.l.b16 %v170
  %v782 = vunpack.c.h.b16 %v170
  %v783 = vunpack.c.l.b16 %v171
  %v784 = vunpack.c.h.b16 %v171
  %v785 = vunpack.c.l.b16 %v172
  %v786 = vunpack.c.h.b16 %v172
  %v787 = vunpack.c.l.b16 %v173
  %v788 = vunpack.c.h.b16 %v173
  %v789 = vunpack.c.l.b16 %v174
  %v790 = vunpack.c.h.b16 %v174
  %v791 = vunpack.c.l.b16 %v175
  %v792 = vunpack.c.h.b16 %v175
  %v793 = vunpack.c.l.b16 %v176
  %v794 = vunpack.c.h.b16 %v176
  %v795 = vunpack.c.l.b16 %v177
  %v796 = vunpack.c.h.b16 %v177
  %v797 = vunpack.c.l.b16 %v178
  %v798 = vunpack.c.h.b16 %v178
  %v799 = vunpack.c.l.b16 %v179
  %v800 = vunpack.c.h.b16 %v179
  %v801 = vunpack.c.l.b16 %v180
  %v802 = vunpack.c.h.b16 %v180
  %v803 = vunpack.c.l.b16 %v181
  %v804 = vunpack.c.h.b16 %v181
  %v805 = vunpack.c.l.b16 %v182
  %v806 = vunpack.c.h.b16 %v182
  %v807 = vunpack.c.l.b16 %v183
  %v808 = vunpack.c.h.b16 %v183
  %v809 = vunpack.c.l.b16 %v184
  %v810 = vunpack.c.h.b16 %v184
  %v811 = vunpack.c.l.b16 %v185
  %v812 = vunpack.c.h.b16 %v185
  %v813 = vunpack.c.l.b16 %v186
  %v814 = vunpack.c.h.b16 %v186
  %v815 = vunpack.c.l.b16 %v187
  %v816 = vunpack.c.h.b16 %v187
  %v817 = vunpack.c.l.b16 %v188
  %v818 = vunpack.c.h.b16 %v188
  %v819 = vunpack.c.l.b16 %v189
  %v820 = vunpack.c.h.b16 %v189
  %v821 = vunpack.c.l.b16 %v190
  %v822 = vunpack.c.h.b16 %v190
  %v823 = vunpack.c.l.b16 %v191
  %v824 = vunpack.c.h.b16 %v191
  %v825 = vunpack.c.l.b16 %v192
  %v826 = vunpack.c.h.b16 %v192
  %v827 = vunpack.c.l.b16 %v193
  %v828 = vunpack.c.h.b16 %v193
  %v829 = vunpack.c.l.b16 %v194
  %v830 = vunpack.c.h.b16 %v194
  %v831 = vunpack.c.l.b16 %v195
  %v832 = vunpack.c.h.b16 %v195
  %v833 = vunpack.c.l.b16 %v196
  %v834 = vunpack.c.h.b16 %v196
  %v835 = vunpack.c.l.b16 %v197
  %v836 = vunpack.c.h.b16 %v197
  %v837 = vunpack.c.l.b16 %v198
  %v838 = vunpack.c.h.b16 %v198
  %v839 = vunpack.c.l.b16 %v199
  %v840 = vunpack.c.h.b16 %v199
  %v841 = vunpack.c.l.b16 %v200
  %v842 = vunpack.c.h.b16 %v200
  %v843 = vunpack.c.l.b16 %v201
  %v844 = vunpack.c.h.b16 %v201
  %v845 = vunpack.c.l.b16 %v202
  %v846 = vunpack.c.h.b16 %v202
  %v847 = vunpack.c.l.b16 %v203
  %v848 = vunpack.c.h.b16 %v203
  %v849 = vunpack.c.l.b16 %v204
  %v850 = vunpack.c.h.b16 %v204
  %v851 = vunpack.c.l.b16 %v205
  %v852 = vunpack.c.h.b16 %v205
  %v853 = vunpack.c.l.b16 %v206
  %v854 = vunpack.c.h.b16 %v206
  %v855 = vunpack.c.l.b16 %v207
  %v856 = vunpack.c.h.b16 %v207
  %v857 = vunpack.c.l.b16 %v208
  %v858 = vunpack.c.h.b16 %v208
  %v859 = vunpack.c.l.b16 %v209
  %v860 = vunpack.c.h.b16 %v209
  %v861 = vunpack.c.l.b16 %v210
  %v862 = vunpack.c.h.b16 %v210
  %v863 = vunpack.c.l.b16 %v211
  %v864 = vunpack.c.h.b16 %v211
  %v865 = vunpack.c.l.b16 %v212
  %v866 = vunpack.c.h.b16 %v212
  %v867 = vunpack.c.l.b16 %v213
  %v868 = vunpack.c.h.b16 %v213
  %v869 = vunpack.c.l.b16 %v214
  %v870 = vunpack.c.h.b16 %v214
  %v871 = vunpack.c.l.b16 %v215
  %v872 = vunpack.c.h.b16 %v215
  %v873 = vunpack.c.l.b16 %v216
  %v874 = vunpack.c.h.b16 %v216
  %v875 = vunpack.c.l.b16 %v217
  %v876 = vunpack.c.h.b16 %v217
  %v877 = vunpack.c.l.b16 %v218
  %v878 = vunpack.c.h.b16 %v218
  %v879 = vunpack.c.l.b16 %v219
  %v880 = vunpack.c.h.b16 %v219
  %v881 = vunpack.c.l.b16 %v220
  %v882 = vunpack.c.h.b16 %v220
  %v883 = vunpack.c.l.b16 %v221
  %v884 = vunpack.c.h.b16 %v221
  %v885 = vunpack.c.l.b16 %v222
  %v886 = vunpack.c.h.b16 %v222
  %v887 = vunpack.c.l.b16 %v223
  %v888 = vunpack.c.h.b16 %v223
  %v889 = vunpack.c.l.b16 %v224
  %v890 = vunpack.c.h.b16 %v224
  %v891 = vunpack.c.l.b16 %v225
  %v892 = vunpack.c.h.b16 %v225
  %v893 = vunpack.c.l.b16 %v226
  %v894 = vunpack.c.h.b16 %v226
  %v895 = vunpack.c.l.b16 %v227
  %v896 = vunpack.c.h.b16 %v227
  %v897 = vunpack.c.l.b16 %v228
  %v898 = vunpack.c.h.b16 %v228
  %v899 = vunpack.c.l.b16 %v229
  %v900 = vunpack.c.h.b16 %v229
  %v901 = vunpack.c.l.b16 %v230
  %v902 = vunpack.c.h.b16 %v230
  %v903 = vunpack.c.l.b16 %v231
  %v904 = vunpack.c.h.b16 %v231
  %v905 = vunpack.c.l.b16 %v232
  %v906 = vunpack.c.h.b16 %v232
  %v907 = vunpack.c.l.b16 %v233
  %v908 = vunpack.c.h.b16 %v233
  %v909 = vunpack.c.l.b16 %v234
  %v910 = vunpack.c.h.b16 %v234
  %v911 = vpack.c.b16 %v497, %v495
  %v912 = vpack.c.b16 %v498, %v496
  %v913 = vpack.c.b16 %v501, %v499
  %v914 = vpack.c.b16 %v502, %v500
  %v915 = vpack.c.b16 %v505, %v503
  %v916 = vpack.c.b16 %v506, %v504
  %v917 = vpack.c.b16 %v509, %v507
  %v918 = vpack.c.b16 %v510, %v508
  %v919 = vpack.c.b16 %v513, %v511
  %v920 = vpack.c.b16 %v514, %v512
  %v921 = vpack.c.b16 %v517, %v515
  %v922 = vpack.c.b16 %v518, %v516
  %v923 = vpack.c.b16 %v521, %v519
  %v924 = vpack.c.b16 %v522, %v520
  %v925 = vpack.c.b16 %v525, %v523
  %v926 = vpack.c.b16 %v526, %v524
  %v927 = vpack.c.b16 %v529, %v527
  %v928 = vpack.c.b16 %v530, %v528
  %v929 = vpack.c.b16 %v533, %v531
  %v930 = vpack.c.b16 %v534, %v532
  %v931 = vpack.c.b16 %v537, %v535
  %v932 = vpack.c.b16 %v538, %v536
  %v933 = vpack.c.b16 %v541, %v539
  %v934 = vpack.c.b16 %v542, %v540
  %v935 = vpack.c.b16 %v545, %v543
  %v936 = vpack.c.b16 %v546, %v544
  %v937 = vpack.c.b16 %v549, %v547
  %v938 = vpack.c.b16 %v550, %v548
  %v939 = vpack.c.b16 %v553, %v551
  %v940 = vpack.c.b16 %v554, %v552
  %v941 = vpack.c.b16 %v557, %v555
  %v942 = vpack.c.b16 %v558, %v556
  %v943 = vpack.c.b16 %v561, %v559
  %v944 = vpack.c.b16 %v562, %v560
  %v945 = vpack.c.b16 %v565, %v563
  %v946 = vpack.c.b16 %v566, %v564
  %v947 = vpack.c.b16 %v569, %v567
  %v948 = vpack.c.b16 %v570, %v568
  %v949 = vpack.c.b16 %v573, %v571
  %v950 = vpack.c.b16 %v574, %v572
  %v951 = vpack.c.b16 %v577, %v575
  %v952 = vpack.c.b16 %v578, %v576
  %v953 = vpack.c.b16 %v581, %v579
  %v954 = vpack.c.b16 %v582, %v580
  %v955 = vpack.c.b16 %v585, %v583
  %v956 = vpack.c.b16 %v586, %v584
  %v957 = vpack.c.b16 %v589, %v587
  %v958 = vpack.c.b16 %v590, %v588
  %v959 = vpack.c.b16 %v593, %v591
  %v960 = vpack.c.b16 %v594, %v592
  %v961 = vpack.c.b16 %v597, %v595
  %v962 = vpack.c.b16 %v598, %v596
  %v963 = vpack.c.b16 %v601, %v599
  %v964 = vpack.c.b16 %v602, %v600
  %v965 = vpack.c.b16 %v605, %v603
  %v966 = vpack.c.b16 %v606, %v604
  %v967 = vpack.c.b16 %v609, %v607
  %v968 = vpack.c.b16 %v610, %v608
  %v969 = vpack.c.b16 %v613, %v611
  %v970 = vpack.c.b16 %v614, %v612
  %v971 = vpack.c.b16 %v617, %v615
  %v972 = vpack.c.b16 %v618, %v616
  %v973 = vpack.c.b16 %v621, %v619
  %v974 = vpack.c.b16 %v622, %v620
  %v975 = vpack.c.b16 %v625, %v623
  %v976 = vpack.c.b16 %v626, %v624
  %v977 = vpack.c.b16 %v629, %v627
  %v978 = vpack.c.b16 %v630, %v628
  %v979 = vpack.c.b16 %v633, %v631
  %v980 = vpack.c.b16 %v634, %v632
  %v981 = vpack.c.b16 %v637, %v635
  %v982 = vpack.c.b16 %v638, %v636
  %v983 = vpack.c.b16 %v641, %v639
  %v984 = vpack.c.b16 %v642, %v640
  %v985 = vpack.c.b16 %v645, %v643
  %v986 = vpack.c.b16 %v646, %v644
  %v987 = vpack.c.b16 %v649, %v647
  %v988 = vpack.c.b16 %v650, %v648
  %v989 = vpack.c.b16 %v653, %v651
  %v990 = vpack.c.b16 %v654, %v652
  %v991 = vpack.c.b16 %v657, %v655
  %v992 = vpack.c.b16 %v658, %v656
  %v993 = vpack.c.b16 %v661, %v659
  %v994 = vpack.c.b16 %v662, %v660
  %v995 = vpack.c.b16 %v665, %v663
  %v996 = vpack.c.b16 %v666, %v664
  %v997 = vpack.c.b16 %v669, %v667
  %v998 = vpack.c.b16 %v670, %v668
  %v999 = vpack.c.b16 %v673, %v671
  %v1000 = vpack.c.b16 %v674, %v672
  %v1001 = vpack.c.b16 %v677, %v675
  %v1002 = vpack.c.b16 %v678, %v676
  %v1003 = vpack.c.b16 %v681, %v679
  %v1004 = vpack.c.b16 %v682, %v680
  %v1005 = vpack.c.b16 %v685, %v683
  %v1006 = vpack.c.b16 %v686, %v684
  %v1007 = vpack.c.b16 %v689, %v687
  %v1008 = vpack.c.b16 %v690, %v688
  %v1009 = vpack.c.b16 %v693, %v691
  %v1010 = vpack.c.b16 %v694, %v692
  %v1011 = vpack.c.b16 %v697, %v695
  %v1012 = vpack.c.b16 %v698, %v696
  %v1013 = vpack.c.b16 %v701, %v699
  %v1014 = vpack.c.b16 %v702, %v700
  %v1015 = vpack.c.b16 %v705, %v703
  %v1016 = vpack.c.b16 %v706, %v704
  %v1017 = vpack.c.b16 %v709, %v707
  %v1018 = vpack.c.b16 %v710, %v708
  %v1019 = vpack.c.b16 %v713, %v711
  %v1020 = vpack.c.b16 %v714, %v712
  %v1021 = vpack.c.b16 %v717, %v715
  %v1022 = vpack.c.b16 %v718, %v716
  %v1023 = vpack.c.b16 %v721, %v719
  %v1024 = vpack.c.b16 %v722, %v720
  %v1025 = vpack.c.b16 %v725, %v723
  %v1026 = vpack.c.b16 %v726, %v724
  %v1027 = vpack.c.b16 %v729, %v727
  %v1028 = vpack.c.b16 %v730, %v728
  %v1029 = vpack.c.b16 %v733, %v731
  %v1030 = vpack.c.b16 %v734, %v732
  %v1031 = vpack.c.b16 %v737, %v735
  %v1032 = vpack.c.b16 %v738, %v736
  %v1033 = vpack.c.b16 %v741, %v739
  %v1034 = vpack.c.b16 %v742, %v740
  %v1035 = vpack.c.b16 %v745, %v743
  %v1036 = vpack.c.b16 %v746, %v744
  %v1037 = vpack.c.b16 %v749, %v747
  %v1038 = vpack.c.b16 %v750, %v748
  %v1039 = vpack.c.b16 %v753, %v751
  %v1040 = vpack.c.b16 %v754, %v752
  %v1041 = vpack.c.b16 %v757, %v755
  %v1042 = vpack.c.b16 %v758, %v756
  %v1043 = vpack.c.b16 %v761, %v759
  %v1044 = vpack.c.b16 %v762, %v760
  %v1045 = vpack.c.b16 %v765, %v763
  %v1046 = vpack.c.b16 %v766, %v764
  %v1047 = vpack.c.b16 %v769, %v767
  %v1048 = vpack.c.b16 %v770, %v768
  %v1049 = vpack.c.b16 %v773, %v771
  %v1050 = vpack.c.b16 %v774, %v772
  %v1051 = vpack.c.b16 %v777, %v775
  %v1052 = vpack.c.b16 %v778, %v776
  %v1053 = vpack.c.b16 %v781, %v779
  %v1054 = vpack.c.b16 %v782, %v780
  %v1055 = vpack.c.b16 %v785, %v783
  %v1056 = vpack.c.b16 %v786, %v784
  %v1057 = vpack.c.b16 %v789, %v787
  %v1058 = vpack.c.b16 %v790, %v788
  %v1059 = vpack.c.b16 %v793, %v791
  %v1060 = vpack.c.b16 %v794, %v792
  %v1061 = vpack.c.b16 %v797, %v795
  %v1062 = vpack.c.b16 %v798, %v796
  %v1063 = vpack.c.b16 %v801, %v799
  %v1064 = vpack.c.b16 %v802, %v800
  %v1065 = vpack.c.b16 %v805, %v803
  %v1066 = vpack.c.b16 %v806, %v804
  %v1067 = vpack.c.b16 %v809, %v807
  %v1068 = vpack.c.b16 %v810, %v808
  %v1069 = vpack.c.b16 %v813, %v811
  %v1070 = vpack.c.b16 %v814, %v812
  %v1071 = vpack.c.b16 %v817, %v815
  %v1072 = vpack.c.b16 %v818, %v816
  %v1073 = vpack.c.b16 %v821, %v819
  %v1074 = vpack.c.b16 %v822, %v820
  %v1075 = vpack.c.b16 %v825, %v823
  %v1076 = vpack.c.b16 %v826, %v824
  %v1077 = vpack.c.b16 %v829, %v827
  %v1078 = vpack.c.b16 %v830, %v828
  %v1079 = vpack.c.b16 %v833, %v831
  %v1080 = vpack.c.b16 %v834, %v832
  %v1081 = vpack.c.b16 %v837, %v835
  %v1082 = vpack.c.b16 %v838, %v836
  %v1083 = vpack.c.b16 %v841, %v839
  %v1084 = vpack.c.b16 %v842, %v840
  %v1085 = vpack.c.b16 %v845, %v843
  %v1086 = vpack.c.b16 %v846, %v844
  %v1087 = vpack.c.b16 %v849, %v847
  %v1088 = vpack.c.b16 %v850, %v848
  %v1089 = vpack.c.b16 %v853, %v851
  %v1090 = vpack.c.b16 %v854, %v852
  %v1091 = vpack.c.b16 %v857, %v855
  %v1092 = vpack.c.b16 %v858, %v856
  %v1093 = vpack.c.b16 %v861, %v859
  %v1094 = vpack.c.b16 %v862, %v860
  %v1095 = vpack.c.b16 %v865, %v863
  %v1096 = vpack.c.b16 %v866, %v864
  %v1097 = vpack.c.b16 %v869, %v867
  %v1098 = vpack.c.b16 %v870, %v868
  %v1099 = vpack.c.b16 %v873, %v871
  %v1100 = vpack.c.b16 %v874, %v872
  %v1101 = vpack.c.b16 %v877, %v875
  %v1102 = vpack.c.b16 %v878, %v876
  %v1103 = vpack.c.b16 %v881, %v879
  %v1104 = vpack.c.b16 %v882, %v880
  %v1105 = vpack.c.b16 %v885, %v883
  %v1106 = vpack.c.b16 %v886, %v884
  %v1107 = vpack.c.b16 %v889, %v887
  %v1108 = vpack.c.b16 %v890, %v888
  %v1109 = vpack.c.b16 %v893, %v891
  %v1110 = vpack.c.b16 %v894, %v892
  %v1111 = vpack.c.b16 %v897, %v895
  %v1112 = vpack.c.b16 %v898, %v896
  %v1113 = vpack.c.b16 %v901, %v899
  %v1114 = vpack.c.b16 %v902, %v900
  %v1115 = vpack.c.b16 %v905, %v903
  %v1116 = vpack.c.b16 %v906, %v904
  %v1117 = vpack.c.b16 %v909, %v907
  %v1118 = vpack.c.b16 %v910, %v908
  %1327 = vmatpush.bf16.msra.mxu0 %v925
  %1328 = vmatpush.bf16.msra.mxu0 %v923
  %1329 = vmatpush.bf16.msra.mxu0 %v921
  %1330 = vmatpush.bf16.msra.mxu0 %v919
  %1331 = vmatpush.bf16.msra.mxu0 %v917
  %1332 = vmatpush.bf16.msra.mxu0 %v915
  %1333 = vmatpush.bf16.msra.mxu0 %v913
  %1334 = vmatpush.bf16.msra.mxu0 %v911
  %1335 = vmatmul.bf16.gmra.mxu0 %v261
  %v1336 = vpop.f32.mrf.mxu0
  %v1337 = vadd.f32 %v237, %v1336
  %v1338 = vpop.f32.mrf.mxu0
  %1339 = vdwg.mxu0
  %1340 = vmatpush.bf16.msra.mxu0 %v941
  %1341 = vmatpush.bf16.msra.mxu0 %v939
  %1342 = vmatpush.bf16.msra.mxu0 %v937
  %1343 = vmatpush.bf16.msra.mxu0 %v935
  %1344 = vmatpush.bf16.msra.mxu0 %v933
  %1345 = vmatpush.bf16.msra.mxu0 %v931
  %1346 = vmatpush.bf16.msra.mxu0 %v929
  %1347 = vmatpush.bf16.msra.mxu0 %v927
  %1348 = vmatmul.bf16.gmra.mxu0 %v262
  %v1349 = vpop.f32.mrf.mxu0
  %v1350 = vadd.f32 %v1337, %v1349
  %v1351 = vpop.f32.mrf.mxu0
  %1352 = vdwg.mxu0
  %1353 = vmatpush.bf16.msra.mxu0 %v957
  %1354 = vmatpush.bf16.msra.mxu0 %v955
  %1355 = vmatpush.bf16.msra.mxu0 %v953
  %1356 = vmatpush.bf16.msra.mxu0 %v951
  %1357 = vmatpush.bf16.msra.mxu0 %v949
  %1358 = vmatpush.bf16.msra.mxu0 %v947
  %1359 = vmatpush.bf16.msra.mxu0 %v945
  %1360 = vmatpush.bf16.msra.mxu0 %v943
  %1361 = vmatmul.bf16.gmra.mxu0 %v263
  %v1362 = vpop.f32.mrf.mxu0
  %v1363 = vadd.f32 %v1350, %v1362
  %v1364 = vpop.f32.mrf.mxu0
  %1365 = vdwg.mxu0
  %1366 = vmatpush.bf16.msra.mxu0 %v973
  %1367 = vmatpush.bf16.msra.mxu0 %v971
  %1368 = vmatpush.bf16.msra.mxu0 %v969
  %1369 = vmatpush.bf16.msra.mxu0 %v967
  %1370 = vmatpush.bf16.msra.mxu0 %v965
  %1371 = vmatpush.bf16.msra.mxu0 %v963
  %1372 = vmatpush.bf16.msra.mxu0 %v961
  %1373 = vmatpush.bf16.msra.mxu0 %v959
  %1374 = vmatmul.bf16.gmra.mxu0 %v264
  %v1375 = vpop.f32.mrf.mxu0
  %v1376 = vadd.f32 %v1363, %v1375
  %v1377 = vpop.f32.mrf.mxu0
  %1378 = vdwg.mxu0
  %1379 = vmatpush.bf16.msra.mxu0 %v989
  %1380 = vmatpush.bf16.msra.mxu0 %v987
  %1381 = vmatpush.bf16.msra.mxu0 %v985
  %1382 = vmatpush.bf16.msra.mxu0 %v983
  %1383 = vmatpush.bf16.msra.mxu0 %v981
  %1384 = vmatpush.bf16.msra.mxu0 %v979
  %1385 = vmatpush.bf16.msra.mxu0 %v977
  %1386 = vmatpush.bf16.msra.mxu0 %v975
  %1387 = vmatmul.bf16.gmra.mxu0 %v265
  %v1388 = vpop.f32.mrf.mxu0
  %v1389 = vadd.f32 %v1376, %v1388
  %v1390 = vpop.f32.mrf.mxu0
  %1391 = vdwg.mxu0
  %1392 = vmatpush.bf16.msra.mxu0 %v1005
  %1393 = vmatpush.bf16.msra.mxu0 %v1003
  %1394 = vmatpush.bf16.msra.mxu0 %v1001
  %1395 = vmatpush.bf16.msra.mxu0 %v999
  %1396 = vmatpush.bf16.msra.mxu0 %v997
  %1397 = vmatpush.bf16.msra.mxu0 %v995
  %1398 = vmatpush.bf16.msra.mxu0 %v993
  %1399 = vmatpush.bf16.msra.mxu0 %v991
  %1400 = vmatmul.bf16.gmra.mxu0 %v266
  %v1401 = vpop.f32.mrf.mxu0
  %v1402 = vadd.f32 %v1389, %v1401
  %v1403 = vpop.f32.mrf.mxu0
  %1404 = vdwg.mxu0
  %1405 = vmatpush.bf16.msra.mxu0 %v1021
  %1406 = vmatpush.bf16.msra.mxu0 %v1019
  %1407 = vmatpush.bf16.msra.mxu0 %v1017
  %1408 = vmatpush.bf16.msra.mxu0 %v1015
  %1409 = vmatpush.bf16.msra.mxu0 %v1013
  %1410 = vmatpush.bf16.msra.mxu0 %v1011
  %1411 = vmatpush.bf16.msra.mxu0 %v1009
  %1412 = vmatpush.bf16.msra.mxu0 %v1007
  %1413 = vmatmul.bf16.gmra.mxu0 %v267
  %v1414 = vpop.f32.mrf.mxu0
  %v1415 = vadd.f32 %v1402, %v1414
  %v1416 = vpop.f32.mrf.mxu0
  %1417 = vdwg.mxu0
  %1418 = vmatpush.bf16.msra.mxu0 %v1037
  %1419 = vmatpush.bf16.msra.mxu0 %v1035
  %1420 = vmatpush.bf16.msra.mxu0 %v1033
  %1421 = vmatpush.bf16.msra.mxu0 %v1031
  %1422 = vmatpush.bf16.msra.mxu0 %v1029
  %1423 = vmatpush.bf16.msra.mxu0 %v1027
  %1424 = vmatpush.bf16.msra.mxu0 %v1025
  %1425 = vmatpush.bf16.msra.mxu0 %v1023
  %1426 = vmatmul.bf16.gmra.mxu0 %v268
  %v1427 = vpop.f32.mrf.mxu0
  %v1428 = vadd.f32 %v1415, %v1427
  %v1429 = vpop.f32.mrf.mxu0
  %1430 = vdwg.mxu0
  %1431 = vmatpush.bf16.msra.mxu0 %v1053
  %1432 = vmatpush.bf16.msra.mxu0 %v1051
  %1433 = vmatpush.bf16.msra.mxu0 %v1049
  %1434 = vmatpush.bf16.msra.mxu0 %v1047
  %1435 = vmatpush.bf16.msra.mxu0 %v1045
  %1436 = vmatpush.bf16.msra.mxu0 %v1043
  %1437 = vmatpush.bf16.msra.mxu0 %v1041
  %1438 = vmatpush.bf16.msra.mxu0 %v1039
  %1439 = vmatmul.bf16.gmra.mxu0 %v269
  %v1440 = vpop.f32.mrf.mxu0
  %v1441 = vadd.f32 %v1428, %v1440
  %v1442 = vpop.f32.mrf.mxu0
  %1443 = vdwg.mxu0
  %1444 = vmatpush.bf16.msra.mxu0 %v1069
  %1445 = vmatpush.bf16.msra.mxu0 %v1067
  %1446 = vmatpush.bf16.msra.mxu0 %v1065
  %1447 = vmatpush.bf16.msra.mxu0 %v1063
  %1448 = vmatpush.bf16.msra.mxu0 %v1061
  %1449 = vmatpush.bf16.msra.mxu0 %v1059
  %1450 = vmatpush.bf16.msra.mxu0 %v1057
  %1451 = vmatpush.bf16.msra.mxu0 %v1055
  %1452 = vmatmul.bf16.gmra.mxu0 %v270
  %v1453 = vpop.f32.mrf.mxu0
  %v1454 = vadd.f32 %v1441, %v1453
  %v1455 = vpop.f32.mrf.mxu0
  %1456 = vdwg.mxu0
  %1457 = vmatpush.bf16.msra.mxu0 %v1085
  %1458 = vmatpush.bf16.msra.mxu0 %v1083
  %1459 = vmatpush.bf16.msra.mxu0 %v1081
  %1460 = vmatpush.bf16.msra.mxu0 %v1079
  %1461 = vmatpush.bf16.msra.mxu0 %v1077
  %1462 = vmatpush.bf16.msra.mxu0 %v1075
  %1463 = vmatpush.bf16.msra.mxu0 %v1073
  %1464 = vmatpush.bf16.msra.mxu0 %v1071
  %1465 = vmatmul.bf16.gmra.mxu0 %v271
  %v1466 = vpop.f32.mrf.mxu0
  %v1467 = vadd.f32 %v1454, %v1466
  %v1468 = vpop.f32.mrf.mxu0
  %1469 = vdwg.mxu0
  %1470 = vmatpush.bf16.msra.mxu0 %v1101
  %1471 = vmatpush.bf16.msra.mxu0 %v1099
  %1472 = vmatpush.bf16.msra.mxu0 %v1097
  %1473 = vmatpush.bf16.msra.mxu0 %v1095
  %1474 = vmatpush.bf16.msra.mxu0 %v1093
  %1475 = vmatpush.bf16.msra.mxu0 %v1091
  %1476 = vmatpush.bf16.msra.mxu0 %v1089
  %1477 = vmatpush.bf16.msra.mxu0 %v1087
  %1478 = vmatmul.bf16.gmra.mxu0 %v272
  %v1479 = vpop.f32.mrf.mxu0
  %v1480 = vadd.f32 %v1467, %v1479
  %v1481 = vpop.f32.mrf.mxu0
  %1482 = vdwg.mxu0
  %1483 = vmatpush.bf16.msra.mxu0 %v1117
  %1484 = vmatpush.bf16.msra.mxu0 %v1115
  %1485 = vmatpush.bf16.msra.mxu0 %v1113
  %1486 = vmatpush.bf16.msra.mxu0 %v1111
  %1487 = vmatpush.bf16.msra.mxu0 %v1109
  %1488 = vmatpush.bf16.msra.mxu0 %v1107
  %1489 = vmatpush.bf16.msra.mxu0 %v1105
  %1490 = vmatpush.bf16.msra.mxu0 %v1103
  %1491 = vmatmul.bf16.gmra.mxu0 %v273
  %v1492 = vpop.f32.mrf.mxu0
  %v1493 = vadd.f32 %v1480, %v1492
  %v1494 = vpop.f32.mrf.mxu0
  %1495 = vdwg.mxu0
  %1496 = vmatpush.bf16.msra.mxu0 %v926
  %1497 = vmatpush.bf16.msra.mxu0 %v924
  %1498 = vmatpush.bf16.msra.mxu0 %v922
  %1499 = vmatpush.bf16.msra.mxu0 %v920
  %1500 = vmatpush.bf16.msra.mxu0 %v918
  %1501 = vmatpush.bf16.msra.mxu0 %v916
  %1502 = vmatpush.bf16.msra.mxu0 %v914
  %1503 = vmatpush.bf16.msra.mxu0 %v912
  %1504 = vmatmul.bf16.gmra.mxu0 %v261
  %v1505 = vpop.f32.mrf.mxu0
  %v1506 = vadd.f32 %v238, %v1505
  %v1507 = vpop.f32.mrf.mxu0
  %1508 = vdwg.mxu0
  %1509 = vmatpush.bf16.msra.mxu0 %v942
  %1510 = vmatpush.bf16.msra.mxu0 %v940
  %1511 = vmatpush.bf16.msra.mxu0 %v938
  %1512 = vmatpush.bf16.msra.mxu0 %v936
  %1513 = vmatpush.bf16.msra.mxu0 %v934
  %1514 = vmatpush.bf16.msra.mxu0 %v932
  %1515 = vmatpush.bf16.msra.mxu0 %v930
  %1516 = vmatpush.bf16.msra.mxu0 %v928
  %1517 = vmatmul.bf16.gmra.mxu0 %v262
  %v1518 = vpop.f32.mrf.mxu0
  %v1519 = vadd.f32 %v1506, %v1518
  %v1520 = vpop.f32.mrf.mxu0
  %1521 = vdwg.mxu0
  %1522 = vmatpush.bf16.msra.mxu0 %v958
  %1523 = vmatpush.bf16.msra.mxu0 %v956
  %1524 = vmatpush.bf16.msra.mxu0 %v954
  %1525 = vmatpush.bf16.msra.mxu0 %v952
  %1526 = vmatpush.bf16.msra.mxu0 %v950
  %1527 = vmatpush.bf16.msra.mxu0 %v948
  %1528 = vmatpush.bf16.msra.mxu0 %v946
  %1529 = vmatpush.bf16.msra.mxu0 %v944
  %1530 = vmatmul.bf16.gmra.mxu0 %v263
  %v1531 = vpop.f32.mrf.mxu0
  %v1532 = vadd.f32 %v1519, %v1531
  %v1533 = vpop.f32.mrf.mxu0
  %1534 = vdwg.mxu0
  %1535 = vmatpush.bf16.msra.mxu0 %v974
  %1536 = vmatpush.bf16.msra.mxu0 %v972
  %1537 = vmatpush.bf16.msra.mxu0 %v970
  %1538 = vmatpush.bf16.msra.mxu0 %v968
  %1539 = vmatpush.bf16.msra.mxu0 %v966
  %1540 = vmatpush.bf16.msra.mxu0 %v964
  %1541 = vmatpush.bf16.msra.mxu0 %v962
  %1542 = vmatpush.bf16.msra.mxu0 %v960
  %1543 = vmatmul.bf16.gmra.mxu0 %v264
  %v1544 = vpop.f32.mrf.mxu0
  %v1545 = vadd.f32 %v1532, %v1544
  %v1546 = vpop.f32.mrf.mxu0
  %1547 = vdwg.mxu0
  %1548 = vmatpush.bf16.msra.mxu0 %v990
  %1549 = vmatpush.bf16.msra.mxu0 %v988
  %1550 = vmatpush.bf16.msra.mxu0 %v986
  %1551 = vmatpush.bf16.msra.mxu0 %v984
  %1552 = vmatpush.bf16.msra.mxu0 %v982
  %1553 = vmatpush.bf16.msra.mxu0 %v980
  %1554 = vmatpush.bf16.msra.mxu0 %v978
  %1555 = vmatpush.bf16.msra.mxu0 %v976
  %1556 = vmatmul.bf16.gmra.mxu0 %v265
  %v1557 = vpop.f32.mrf.mxu0
  %v1558 = vadd.f32 %v1545, %v1557
  %v1559 = vpop.f32.mrf.mxu0
  %1560 = vdwg.mxu0
  %1561 = vmatpush.bf16.msra.mxu0 %v1006
  %1562 = vmatpush.bf16.msra.mxu0 %v1004
  %1563 = vmatpush.bf16.msra.mxu0 %v1002
  %1564 = vmatpush.bf16.msra.mxu0 %v1000
  %1565 = vmatpush.bf16.msra.mxu0 %v998
  %1566 = vmatpush.bf16.msra.mxu0 %v996
  %1567 = vmatpush.bf16.msra.mxu0 %v994
  %1568 = vmatpush.bf16.msra.mxu0 %v992
  %1569 = vmatmul.bf16.gmra.mxu0 %v266
  %v1570 = vpop.f32.mrf.mxu0
  %v1571 = vadd.f32 %v1558, %v1570
  %v1572 = vpop.f32.mrf.mxu0
  %1573 = vdwg.mxu0
  %1574 = vmatpush.bf16.msra.mxu0 %v1022
  %1575 = vmatpush.bf16.msra.mxu0 %v1020
  %1576 = vmatpush.bf16.msra.mxu0 %v1018
  %1577 = vmatpush.bf16.msra.mxu0 %v1016
  %1578 = vmatpush.bf16.msra.mxu0 %v1014
  %1579 = vmatpush.bf16.msra.mxu0 %v1012
  %1580 = vmatpush.bf16.msra.mxu0 %v1010
  %1581 = vmatpush.bf16.msra.mxu0 %v1008
  %1582 = vmatmul.bf16.gmra.mxu0 %v267
  %v1583 = vpop.f32.mrf.mxu0
  %v1584 = vadd.f32 %v1571, %v1583
  %v1585 = vpop.f32.mrf.mxu0
  %1586 = vdwg.mxu0
  %1587 = vmatpush.bf16.msra.mxu0 %v1038
  %1588 = vmatpush.bf16.msra.mxu0 %v1036
  %1589 = vmatpush.bf16.msra.mxu0 %v1034
  %1590 = vmatpush.bf16.msra.mxu0 %v1032
  %1591 = vmatpush.bf16.msra.mxu0 %v1030
  %1592 = vmatpush.bf16.msra.mxu0 %v1028
  %1593 = vmatpush.bf16.msra.mxu0 %v1026
  %1594 = vmatpush.bf16.msra.mxu0 %v1024
  %1595 = vmatmul.bf16.gmra.mxu0 %v268
  %v1596 = vpop.f32.mrf.mxu0
  %v1597 = vadd.f32 %v1584, %v1596
  %v1598 = vpop.f32.mrf.mxu0
  %1599 = vdwg.mxu0
  %1600 = vmatpush.bf16.msra.mxu0 %v1054
  %1601 = vmatpush.bf16.msra.mxu0 %v1052
  %1602 = vmatpush.bf16.msra.mxu0 %v1050
  %1603 = vmatpush.bf16.msra.mxu0 %v1048
  %1604 = vmatpush.bf16.msra.mxu0 %v1046
  %1605 = vmatpush.bf16.msra.mxu0 %v1044
  %1606 = vmatpush.bf16.msra.mxu0 %v1042
  %1607 = vmatpush.bf16.msra.mxu0 %v1040
  %1608 = vmatmul.bf16.gmra.mxu0 %v269
  %v1609 = vpop.f32.mrf.mxu0
  %v1610 = vadd.f32 %v1597, %v1609
  %v1611 = vpop.f32.mrf.mxu0
  %1612 = vdwg.mxu0
  %1613 = vmatpush.bf16.msra.mxu0 %v1070
  %1614 = vmatpush.bf16.msra.mxu0 %v1068
  %1615 = vmatpush.bf16.msra.mxu0 %v1066
  %1616 = vmatpush.bf16.msra.mxu0 %v1064
  %1617 = vmatpush.bf16.msra.mxu0 %v1062
  %1618 = vmatpush.bf16.msra.mxu0 %v1060
  %1619 = vmatpush.bf16.msra.mxu0 %v1058
  %1620 = vmatpush.bf16.msra.mxu0 %v1056
  %1621 = vmatmul.bf16.gmra.mxu0 %v270
  %v1622 = vpop.f32.mrf.mxu0
  %v1623 = vadd.f32 %v1610, %v1622
  %v1624 = vpop.f32.mrf.mxu0
  %1625 = vdwg.mxu0
  %1626 = vmatpush.bf16.msra.mxu0 %v1086
  %1627 = vmatpush.bf16.msra.mxu0 %v1084
  %1628 = vmatpush.bf16.msra.mxu0 %v1082
  %1629 = vmatpush.bf16.msra.mxu0 %v1080
  %1630 = vmatpush.bf16.msra.mxu0 %v1078
  %1631 = vmatpush.bf16.msra.mxu0 %v1076
  %1632 = vmatpush.bf16.msra.mxu0 %v1074
  %1633 = vmatpush.bf16.msra.mxu0 %v1072
  %1634 = vmatmul.bf16.gmra.mxu0 %v271
  %v1635 = vpop.f32.mrf.mxu0
  %v1636 = vadd.f32 %v1623, %v1635
  %v1637 = vpop.f32.mrf.mxu0
  %1638 = vdwg.mxu0
  %1639 = vmatpush.bf16.msra.mxu0 %v1102
  %1640 = vmatpush.bf16.msra.mxu0 %v1100
  %1641 = vmatpush.bf16.msra.mxu0 %v1098
  %1642 = vmatpush.bf16.msra.mxu0 %v1096
  %1643 = vmatpush.bf16.msra.mxu0 %v1094
  %1644 = vmatpush.bf16.msra.mxu0 %v1092
  %1645 = vmatpush.bf16.msra.mxu0 %v1090
  %1646 = vmatpush.bf16.msra.mxu0 %v1088
  %1647 = vmatmul.bf16.gmra.mxu0 %v272
  %v1648 = vpop.f32.mrf.mxu0
  %v1649 = vadd.f32 %v1636, %v1648
  %v1650 = vpop.f32.mrf.mxu0
  %1651 = vdwg.mxu0
  %1652 = vmatpush.bf16.msra.mxu0 %v1118
  %1653 = vmatpush.bf16.msra.mxu0 %v1116
  %1654 = vmatpush.bf16.msra.mxu0 %v1114
  %1655 = vmatpush.bf16.msra.mxu0 %v1112
  %1656 = vmatpush.bf16.msra.mxu0 %v1110
  %1657 = vmatpush.bf16.msra.mxu0 %v1108
  %1658 = vmatpush.bf16.msra.mxu0 %v1106
  %1659 = vmatpush.bf16.msra.mxu0 %v1104
  %1660 = vmatmul.bf16.gmra.mxu0 %v273
  %v1661 = vpop.f32.mrf.mxu0
  %v1662 = vadd.f32 %v1649, %v1661
  %v1663 = vpop.f32.mrf.mxu0
  %1664 = vdwg.mxu0
  %v1665 = vmax.f32 %v1493, 0.0
  %v1666 = vmax.f32 %v1662, 0.0
  %v1667 = vpack.c.bf16 %v1665, %v1665
  %v1668 = vpack.c.bf16 %v1666, %v1666
  %v1669 = vld [vmem:[%s3] sm:$0xf]
  %v1670 = vld [vmem:[%s3 + $0x4] sm:$0xf]
  %v1671 = vld [vmem:[%s3 + $0x8] sm:$0xf]
  %v1672 = vld [vmem:[%s3 + $0xc] sm:$0xf]
  %v1673 = vld [vmem:[%s3 + $0x10] sm:$0xf]
  %v1674 = vld [vmem:[%s3 + $0x14] sm:$0xf]
  %v1675 = vld [vmem:[%s3 + $0x18] sm:$0xf]
  %v1676 = vld [vmem:[%s3 + $0x1c] sm:$0xf]
  %v1677 = vld [vmem:[%s3 + $0x20] sm:$0xf]
  %v1678 = vld [vmem:[%s3 + $0x24] sm:$0xf]
  %v1679 = vld [vmem:[%s3 + $0x28] sm:$0xf]
  %v1680 = vld [vmem:[%s3 + $0x2c] sm:$0xf]
  %v1681 = vld [vmem:[%s3 + $0x30] sm:$0xf]
  %v1682 = vld [vmem:[%s3 + $0x34] sm:$0xf]
  %v1683 = vld [vmem:[%s3 + $0x38] sm:$0xf]
  %v1684 = vld [vmem:[%s3 + $0x3c] sm:$0xf]
  %v1685 = vld [vmem:[%s3 + $0x40] sm:$0xf]
  %v1686 = vld [vmem:[%s3 + $0x44] sm:$0xf]
  %v1687 = vld [vmem:[%s3 + $0x48] sm:$0xf]
  %v1688 = vld [vmem:[%s3 + $0x4c] sm:$0xf]
  %v1689 = vld [vmem:[%s3 + $0x50] sm:$0xf]
  %v1690 = vld [vmem:[%s3 + $0x54] sm:$0xf]
  %v1691 = vld [vmem:[%s3 + $0x58] sm:$0xf]
  %v1692 = vld [vmem:[%s3 + $0x5c] sm:$0xf]
  %v1693 = vld [vmem:[%s3 + $0x60] sm:$0xf]
  %v1694 = vld [vmem:[%s3 + $0x64] sm:$0xf]
  %v1695 = vld [vmem:[%s3 + $0x68] sm:$0xf]
  %v1696 = vld [vmem:[%s3 + $0x6c] sm:$0xf]
  %v1697 = vld [vmem:[%s3 + $0x70] sm:$0xf]
  %v1698 = vld [vmem:[%s3 + $0x74] sm:$0xf]
  %v1699 = vld [vmem:[%s3 + $0x78] sm:$0xf]
  %v1700 = vld [vmem:[%s3 + $0x7c] sm:$0xf]
  %v1701 = vld [vmem:[%s4] sm:$0x1]
  %v1703 = vperm.slane %v1701, 0
  %v1737 = vunpack.c.l.b16 %v1669
  %v1738 = vunpack.c.l.b16 %v1670
  %v1739 = vunpack.c.l.b16 %v1671
  %v1740 = vunpack.c.l.b16 %v1672
  %v1741 = vunpack.c.l.b16 %v1673
  %v1742 = vunpack.c.l.b16 %v1674
  %v1743 = vunpack.c.l.b16 %v1675
  %v1744 = vunpack.c.l.b16 %v1676
  %v1745 = vunpack.c.l.b16 %v1677
  %v1746 = vunpack.c.l.b16 %v1678
  %v1747 = vunpack.c.l.b16 %v1679
  %v1748 = vunpack.c.l.b16 %v1680
  %v1749 = vunpack.c.l.b16 %v1681
  %v1750 = vunpack.c.l.b16 %v1682
  %v1751 = vunpack.c.l.b16 %v1683
  %v1752 = vunpack.c.l.b16 %v1684
  %v1753 = vunpack.c.l.b16 %v1685
  %v1754 = vunpack.c.l.b16 %v1686
  %v1755 = vunpack.c.l.b16 %v1687
  %v1756 = vunpack.c.l.b16 %v1688
  %v1757 = vunpack.c.l.b16 %v1689
  %v1758 = vunpack.c.l.b16 %v1690
  %v1759 = vunpack.c.l.b16 %v1691
  %v1760 = vunpack.c.l.b16 %v1692
  %v1761 = vunpack.c.l.b16 %v1693
  %v1762 = vunpack.c.l.b16 %v1694
  %v1763 = vunpack.c.l.b16 %v1695
  %v1764 = vunpack.c.l.b16 %v1696
  %v1765 = vunpack.c.l.b16 %v1697
  %v1766 = vunpack.c.l.b16 %v1698
  %v1767 = vunpack.c.l.b16 %v1699
  %v1768 = vunpack.c.l.b16 %v1700
  %v1769 = vpack.c.b16 %v1738, %v1737
  %v1770 = vpack.c.b16 %v1740, %v1739
  %v1771 = vpack.c.b16 %v1742, %v1741
  %v1772 = vpack.c.b16 %v1744, %v1743
  %v1773 = vpack.c.b16 %v1746, %v1745
  %v1774 = vpack.c.b16 %v1748, %v1747
  %v1775 = vpack.c.b16 %v1750, %v1749
  %v1776 = vpack.c.b16 %v1752, %v1751
  %v1777 = vpack.c.b16 %v1754, %v1753
  %v1778 = vpack.c.b16 %v1756, %v1755
  %v1779 = vpack.c.b16 %v1758, %v1757
  %v1780 = vpack.c.b16 %v1760, %v1759
  %v1781 = vpack.c.b16 %v1762, %v1761
  %v1782 = vpack.c.b16 %v1764, %v1763
  %v1783 = vpack.c.b16 %v1766, %v1765
  %v1784 = vpack.c.b16 %v1768, %v1767
  %1801 = vmatpush.bf16.msra.mxu0 %v1776
  %1802 = vmatpush.bf16.msra.mxu0 %v1775
  %1803 = vmatpush.bf16.msra.mxu0 %v1774
  %1804 = vmatpush.bf16.msra.mxu0 %v1773
  %1805 = vmatpush.bf16.msra.mxu0 %v1772
  %1806 = vmatpush.bf16.msra.mxu0 %v1771
  %1807 = vmatpush.bf16.msra.mxu0 %v1770
  %1808 = vmatpush.bf16.msra.mxu0 %v1769
  %1809 = vmatmul.bf16.gmra.mxu0 %v1667
  %v1810 = vpop.f32.mrf.mxu0
  %v1811 = vadd.f32 %v1703, %v1810
  %v1812 = vpop.f32.mrf.mxu0
  %1813 = vdwg.mxu0
  %1814 = vmatpush.bf16.msra.mxu0 %v1784
  %1815 = vmatpush.bf16.msra.mxu0 %v1783
  %1816 = vmatpush.bf16.msra.mxu0 %v1782
  %1817 = vmatpush.bf16.msra.mxu0 %v1781
  %1818 = vmatpush.bf16.msra.mxu0 %v1780
  %1819 = vmatpush.bf16.msra.mxu0 %v1779
  %1820 = vmatpush.bf16.msra.mxu0 %v1778
  %1821 = vmatpush.bf16.msra.mxu0 %v1777
  %1822 = vmatmul.bf16.gmra.mxu0 %v1668
  %v1823 = vpop.f32.mrf.mxu0
  %v1824 = vadd.f32 %v1811, %v1823
  %v1825 = vpop.f32.mrf.mxu0
  %1826 = vdwg.mxu0
  %1827 = vst [vmem:[%s5] sm:$0xff] %v1824
  // Predicated region
  $region22: #{actor_critic_forward.7} parent=0 // pred_check
    _
  $region23: #{actor_critic_forward.7} parent=0 // pred_check_branch
    %1829 = sbr.rel (0) target = $region25
  $region24: #{actor_critic_forward.7} parent=0 // pred_region
    _
  $region25: #{actor_critic_forward.7} parent=0 // pred_fallthru
    _
  // Predicated region
  $region26: #{actor_critic_forward.7} parent=0 // pred_check
    _
  $region27: #{actor_critic_forward.7} parent=0 // pred_check_branch
    %1831 = sbr.rel (0) target = $region29
  $region28: #{actor_critic_forward.7} parent=0 // pred_region
    _
  $region29: #{actor_critic_forward.7} parent=0 // pred_fallthru
    _

</llo_original>
